<compile_context>
chip_gen: v5e
topology: v5e:2x2
jax: 0.10.0
libtpu: 0.0.40
codegen_flags: <defaults>
</compile_context>

<pallas_src>
import functools
import numpy as np

import jax
import jax.numpy as jnp
from jax import lax
from jax.experimental import pallas as pl
from jax.experimental.pallas import tpu as pltpu

BN_EPS = 1e-5


# ------------------------------ Pallas kernel -------------------------------

def _module3_kernel(H, W, Cin, ni,
                    x_ref,
                    w1_ref, s1_ref, b1_ref,
                    wd1_ref, sd1_ref, bd1_ref,
                    wd2_ref, sd2_ref, bd2_ref,
                    wp2_ref, sp2_ref, bp2_ref,
                    w3a_ref, s3a_ref, b3a_ref,
                    w3b_ref, s3b_ref, b3b_ref,
                    o_ref):
    f32 = jnp.float32
    bf16 = jnp.bfloat16

    def pad1(a):  # zero halo of 1 pixel on H and W, built in VMEM
        Ca = a.shape[-1]
        zc = jnp.zeros((a.shape[0], 1, Ca), f32)
        a = jnp.concatenate([zc, a, zc], axis=1)
        zr = jnp.zeros((1, a.shape[1], Ca), f32)
        return jnp.concatenate([zr, a, zr], axis=0)

    x = x_ref[0]                                                  # (H, W, Cin)

    # ---- Convlayer: dense 3x3 conv as ONE im2col bf16 matmul (K = 9*Cin) ----
    xp = pad1(x)                                                  # (H+2, W+2, Cin)
    # dx shifts stacked on the lane (channel) axis; dy handled by free leading-axis slices.
    shift_w = jnp.concatenate(
        [xp[:, dx:dx + W, :] for dx in range(3)], axis=-1)        # (H+2, W, 3*Cin)
    col = jnp.concatenate(
        [shift_w[dy:dy + H] for dy in range(3)], axis=-1)         # (H, W, 9*Cin)
    col = col.reshape(H * W, 9 * Cin).astype(bf16)
    x0 = jnp.dot(col, w1_ref[...], preferred_element_type=f32)    # (H*W, ni)
    x0 = jnp.maximum(x0 * s1_ref[...] + b1_ref[...], 0.0)
    x0_hw = x0.reshape(H, W, ni)

    # ---- Conv1 / Conv2: two depthwise 3x3 convs sharing one padded tile ----
    x0p = pad1(x0_hw)                                             # (H+2, W+2, ni)
    wd1 = wd1_ref[...]                                            # (9, ni)
    wd2 = wd2_ref[...]
    acc1 = jnp.zeros((H, W, ni), f32)
    acc2 = jnp.zeros((H, W, ni), f32)
    for dy in range(3):
        for dx in range(3):
            tap = x0p[dy:dy + H, dx:dx + W, :]
            acc1 = acc1 + tap * wd1[dy * 3 + dx][None, None, :]
            acc2 = acc2 + tap * wd2[dy * 3 + dx][None, None, :]
    gc1 = jnp.maximum(acc1.reshape(H * W, ni) * sd1_ref[...] + bd1_ref[...], 0.0)
    gc2 = jnp.maximum(acc2.reshape(H * W, ni) * sd2_ref[...] + bd2_ref[...], 0.0)

    # ---- PWConv2 (1x1) on gc2 ----
    gc2 = jnp.dot(gc2.astype(bf16), wp2_ref[...], preferred_element_type=f32)
    gc2 = jnp.maximum(gc2 * sp2_ref[...] + bp2_ref[...], 0.0)

    # ---- PWConv3 (1x1 -> 1x1) on cat(gc1, gc2) ----
    gc = jnp.concatenate([gc1, gc2], axis=-1).astype(bf16)        # (H*W, 2*ni)
    h = jnp.dot(gc, w3a_ref[...], preferred_element_type=f32)     # (H*W, ni//2)
    h = jnp.maximum(h * s3a_ref[...] + b3a_ref[...], 0.0)
    gc3 = jnp.dot(h.astype(bf16), w3b_ref[...], preferred_element_type=f32)
    gc3 = jnp.maximum(gc3 * s3b_ref[...] + b3b_ref[...], 0.0)     # (H*W, ni)

    # ---- single lane-dense HBM store: cat(x, gc1, gc2, gc3) ----
    out = jnp.concatenate([x0, gc1, gc2, gc3], axis=-1)           # (H*W, 4*ni)
    o_ref[...] = out.reshape(1, H, W, 4 * ni)


def module3_forward(kernel_params, x, ni):
    """x: (N, H, W, Cin) NHWC.  Returns (N, H, W, 4*ni)."""
    N, H, W, Cin = x.shape
    cout = 4 * ni
    kern = functools.partial(_module3_kernel, H, W, Cin, ni)
    in_specs = [pl.BlockSpec((1, H, W, Cin), lambda n: (n, 0, 0, 0))]
    for a in kernel_params:
        in_specs.append(pl.BlockSpec(a.shape, lambda n, nd=a.ndim: (0,) * nd))
    return pl.pallas_call(
        kern,
        out_shape=jax.ShapeDtypeStruct((N, H, W, cout), jnp.float32),
        grid=(N,),
        in_specs=in_specs,
        out_specs=pl.BlockSpec((1, H, W, cout), lambda n: (n, 0, 0, 0)),
        compiler_params=pltpu.CompilerParams(dimension_semantics=("parallel",)),
    )(x, *kernel_params)


# --------------------------- parameter construction --------------------------

def _conv_bn_init(key, cin, cout, k, groups=1):
    """Raw PyTorch-style Conv2d + eval-mode BatchNorm2d parameters."""
    kw, kb, kg, kbe, km, kv = jax.random.split(key, 6)
    fan_in = (cin // groups) * k * k
    std = 1.0 / np.sqrt(fan_in)
    return dict(
        w=std * jax.random.normal(kw, (cout, cin // groups, k, k), jnp.float32),
        b=std * jax.random.normal(kb, (cout,), jnp.float32),
        gamma=1.0 + 0.1 * jax.random.normal(kg, (cout,), jnp.float32),
        beta=0.1 * jax.random.normal(kbe, (cout,), jnp.float32),
        mean=0.05 * jax.random.normal(km, (cout,), jnp.float32),
        var=1.0 + 0.2 * jax.random.uniform(kv, (cout,), jnp.float32),
    )


def make_module3_raw_params(key, channels, outchannels):
    ni = outchannels // 4
    ks = jax.random.split(key, 6)
    return dict(
        conv=_conv_bn_init(ks[0], channels, ni, 3),
        dw1=_conv_bn_init(ks[1], ni, ni, 3, groups=ni),
        dw2=_conv_bn_init(ks[2], ni, ni, 3, groups=ni),
        pw2=_conv_bn_init(ks[3], ni, ni, 1),
        pw3a=_conv_bn_init(ks[4], 2 * ni, ni // 2, 1),
        pw3b=_conv_bn_init(ks[5], ni // 2, ni, 1),
    )


def _fold_bn(p):
    s = p["gamma"] / jnp.sqrt(p["var"] + BN_EPS)
    b = p["beta"] + s * (p["b"] - p["mean"])
    return s.reshape(1, -1).astype(jnp.float32), b.reshape(1, -1).astype(jnp.float32)


def pack_kernel_params(raw):
    """Fold BN + bias, reshape weights to MXU/VPU-friendly layouts (bf16 matmul weights)."""
    bf16 = jnp.bfloat16

    def dense_w(p):   # (O, I, 3, 3) -> (9*I, O)  bf16, im2col order (dy, dx, cin)
        w = jnp.transpose(p["w"], (2, 3, 1, 0))
        return w.reshape(-1, w.shape[-1]).astype(bf16)

    def dw_w(p):      # (C, 1, 3, 3) -> (9, C)  f32 (VPU path)
        return jnp.transpose(p["w"][:, 0], (1, 2, 0)).reshape(9, -1).astype(jnp.float32)

    def pw_w(p):      # (O, I, 1, 1) -> (I, O)  bf16
        return jnp.transpose(p["w"][:, :, 0, 0], (1, 0)).astype(bf16)

    flat = []
    s, b = _fold_bn(raw["conv"]); flat += [dense_w(raw["conv"]), s, b]
    s, b = _fold_bn(raw["dw1"]);  flat += [dw_w(raw["dw1"]), s, b]
    s, b = _fold_bn(raw["dw2"]);  flat += [dw_w(raw["dw2"]), s, b]
    s, b = _fold_bn(raw["pw2"]);  flat += [pw_w(raw["pw2"]), s, b]
    s, b = _fold_bn(raw["pw3a"]); flat += [pw_w(raw["pw3a"]), s, b]
    s, b = _fold_bn(raw["pw3b"]); flat += [pw_w(raw["pw3b"]), s, b]
    return flat


# --------------------------- pure-JAX reference ------------------------------

def module3_reference(raw, x, ni):
    def cbr(x, p, groups=1):
        y = lax.conv_general_dilated(
            x, p["w"], window_strides=(1, 1), padding="SAME",
            dimension_numbers=("NHWC", "OIHW", "NHWC"),
            feature_group_count=groups)
        y = y + p["b"]
        y = p["gamma"] * (y - p["mean"]) / jnp.sqrt(p["var"] + BN_EPS) + p["beta"]
        return jnp.maximum(y, 0.0)

    x0 = cbr(x, raw["conv"])
    gc1 = cbr(x0, raw["dw1"], groups=ni)
    gc2 = cbr(x0, raw["dw2"], groups=ni)
    gc2 = cbr(gc2, raw["pw2"])
    gc = jnp.concatenate([gc1, gc2], axis=-1)
    gc3 = cbr(gc, raw["pw3a"])
    gc3 = cbr(gc3, raw["pw3b"])
    return jnp.concatenate([x0, gc1, gc2, gc3], axis=-1)


# ----------------------------------- main ------------------------------------

if __name__ == "__main__":
    key = jax.random.PRNGKey(0)
    pkey, xkey = jax.random.split(key)

    # Module_3(channels=64, outchannels=128, stream=0) -> num_inter = 32.
    channels, outchannels = 64, 128
    ni = outchannels // 4
    N, H, W = 2, 16, 16

    raw = make_module3_raw_params(pkey, channels, outchannels)
    kparams = pack_kernel_params(raw)

    # NHWC input; corresponds to a PyTorch NCHW input of shape (2, 64, 16, 16).
    x = jax.random.normal(xkey, (N, H, W, channels), jnp.float32)

    fwd = jax.jit(lambda inp: module3_forward(kparams, inp, ni))
    out = jax.block_until_ready(fwd(x))
    assert out.shape == (N, H, W, outchannels), out.shape
    assert bool(jnp.all(jnp.isfinite(out)))

    # Correctness check vs. a pure-JAX (f32, lax.conv) reference; bf16 MXU operands
    # give small rounding differences, well under this tolerance.
    ref = jax.block_until_ready(jax.jit(lambda inp: module3_reference(raw, inp, ni))(x))
    max_err = float(jnp.max(jnp.abs(out - ref)))
    assert max_err < 0.2, f"max abs err {max_err}"

    print("KERNEL_OK")
</pallas_src>

<mosaic_0001>
module attributes {stable_mosaic.version = 11 : i64} {
  func.func @_module3_kernel(%arg0: i32, %arg1: memref<1x16x16x64xf32, #tpu.memory_space<vmem>>, %arg2: memref<576x32xbf16, #tpu.memory_space<vmem>>, %arg3: memref<1x32xf32, #tpu.memory_space<vmem>>, %arg4: memref<1x32xf32, #tpu.memory_space<vmem>>, %arg5: memref<9x32xf32, #tpu.memory_space<vmem>>, %arg6: memref<1x32xf32, #tpu.memory_space<vmem>>, %arg7: memref<1x32xf32, #tpu.memory_space<vmem>>, %arg8: memref<9x32xf32, #tpu.memory_space<vmem>>, %arg9: memref<1x32xf32, #tpu.memory_space<vmem>>, %arg10: memref<1x32xf32, #tpu.memory_space<vmem>>, %arg11: memref<32x32xbf16, #tpu.memory_space<vmem>>, %arg12: memref<1x32xf32, #tpu.memory_space<vmem>>, %arg13: memref<1x32xf32, #tpu.memory_space<vmem>>, %arg14: memref<64x16xbf16, #tpu.memory_space<vmem>>, %arg15: memref<1x16xf32, #tpu.memory_space<vmem>>, %arg16: memref<1x16xf32, #tpu.memory_space<vmem>>, %arg17: memref<16x32xbf16, #tpu.memory_space<vmem>>, %arg18: memref<1x32xf32, #tpu.memory_space<vmem>>, %arg19: memref<1x32xf32, #tpu.memory_space<vmem>>, %arg20: memref<1x16x16x128xf32, #tpu.memory_space<vmem>>) attributes {dimension_semantics = [#tpu.dimension_semantics<parallel>], iteration_bounds = array<i64: 2>, scalar_prefetch = 0 : i64, scratch_operands = 0 : i64, tpu.core_type = #tpu.core_type<tc>, window_params = [{transform_indices = @transform_0, window_bounds = array<i64: 1, 16, 16, 64>}, {pipeline_mode = #tpu.pipeline_mode<synchronous>, transform_indices = @transform_1, window_bounds = array<i64: 576, 32>}, {pipeline_mode = #tpu.pipeline_mode<synchronous>, transform_indices = @transform_2, window_bounds = array<i64: 1, 32>}, {pipeline_mode = #tpu.pipeline_mode<synchronous>, transform_indices = @transform_3, window_bounds = array<i64: 1, 32>}, {pipeline_mode = #tpu.pipeline_mode<synchronous>, transform_indices = @transform_4, window_bounds = array<i64: 9, 32>}, {pipeline_mode = #tpu.pipeline_mode<synchronous>, transform_indices = @transform_5, window_bounds = array<i64: 1, 32>}, {pipeline_mode = #tpu.pipeline_mode<synchronous>, transform_indices = @transform_6, window_bounds = array<i64: 1, 32>}, {pipeline_mode = #tpu.pipeline_mode<synchronous>, transform_indices = @transform_7, window_bounds = array<i64: 9, 32>}, {pipeline_mode = #tpu.pipeline_mode<synchronous>, transform_indices = @transform_8, window_bounds = array<i64: 1, 32>}, {pipeline_mode = #tpu.pipeline_mode<synchronous>, transform_indices = @transform_9, window_bounds = array<i64: 1, 32>}, {pipeline_mode = #tpu.pipeline_mode<synchronous>, transform_indices = @transform_10, window_bounds = array<i64: 32, 32>}, {pipeline_mode = #tpu.pipeline_mode<synchronous>, transform_indices = @transform_11, window_bounds = array<i64: 1, 32>}, {pipeline_mode = #tpu.pipeline_mode<synchronous>, transform_indices = @transform_12, window_bounds = array<i64: 1, 32>}, {pipeline_mode = #tpu.pipeline_mode<synchronous>, transform_indices = @transform_13, window_bounds = array<i64: 64, 16>}, {pipeline_mode = #tpu.pipeline_mode<synchronous>, transform_indices = @transform_14, window_bounds = array<i64: 1, 16>}, {pipeline_mode = #tpu.pipeline_mode<synchronous>, transform_indices = @transform_15, window_bounds = array<i64: 1, 16>}, {pipeline_mode = #tpu.pipeline_mode<synchronous>, transform_indices = @transform_16, window_bounds = array<i64: 16, 32>}, {pipeline_mode = #tpu.pipeline_mode<synchronous>, transform_indices = @transform_17, window_bounds = array<i64: 1, 32>}, {pipeline_mode = #tpu.pipeline_mode<synchronous>, transform_indices = @transform_18, window_bounds = array<i64: 1, 32>}, {transform_indices = @transform_19, window_bounds = array<i64: 1, 16, 16, 128>}]} {
    %c0 = arith.constant 0 : index
    %c0_0 = arith.constant 0 : index
    %c0_1 = arith.constant 0 : index
    %c0_2 = arith.constant 0 : index
    %0 = vector.load %arg1[%c0, %c0_0, %c0_1, %c0_2] : memref<1x16x16x64xf32, #tpu.memory_space<vmem>>, vector<1x16x16x64xf32>
    %1 = vector.shape_cast %0 : vector<1x16x16x64xf32> to vector<16x16x64xf32>
    %cst = arith.constant 0.000000e+00 : f32
    %2 = vector.broadcast %cst : f32 to vector<16x1x64xf32>
    %3 = tpu.concatenate %2, %1, %2 in 1 : vector<16x1x64xf32>, vector<16x16x64xf32>, vector<16x1x64xf32> -> vector<16x18x64xf32>
    %cst_3 = arith.constant 0.000000e+00 : f32
    %4 = vector.broadcast %cst_3 : f32 to vector<1x18x64xf32>
    %5 = tpu.concatenate %4, %3, %4 in 0 : vector<1x18x64xf32>, vector<16x18x64xf32>, vector<1x18x64xf32> -> vector<18x18x64xf32>
    %6 = vector.extract_strided_slice %5 {offsets = [0, 0, 0], sizes = [18, 16, 64], strides = [1, 1, 1]} : vector<18x18x64xf32> to vector<18x16x64xf32>
    %7 = vector.extract_strided_slice %5 {offsets = [0, 1, 0], sizes = [18, 16, 64], strides = [1, 1, 1]} : vector<18x18x64xf32> to vector<18x16x64xf32>
    %8 = vector.extract_strided_slice %5 {offsets = [0, 2, 0], sizes = [18, 16, 64], strides = [1, 1, 1]} : vector<18x18x64xf32> to vector<18x16x64xf32>
    %9 = tpu.concatenate %6, %7, %8 in 2 : vector<18x16x64xf32>, vector<18x16x64xf32>, vector<18x16x64xf32> -> vector<18x16x192xf32>
    %10 = vector.extract_strided_slice %9 {offsets = [0, 0, 0], sizes = [16, 16, 192], strides = [1, 1, 1]} : vector<18x16x192xf32> to vector<16x16x192xf32>
    %11 = vector.extract_strided_slice %9 {offsets = [1, 0, 0], sizes = [16, 16, 192], strides = [1, 1, 1]} : vector<18x16x192xf32> to vector<16x16x192xf32>
    %12 = vector.extract_strided_slice %9 {offsets = [2, 0, 0], sizes = [16, 16, 192], strides = [1, 1, 1]} : vector<18x16x192xf32> to vector<16x16x192xf32>
    %13 = tpu.concatenate %10, %11, %12 in 2 : vector<16x16x192xf32>, vector<16x16x192xf32>, vector<16x16x192xf32> -> vector<16x16x576xf32>
    %14 = vector.shape_cast %13 : vector<16x16x576xf32> to vector<256x576xf32>
    %15 = arith.truncf %14 : vector<256x576xf32> to vector<256x576xbf16>
    %c0_4 = arith.constant 0 : index
    %c0_5 = arith.constant 0 : index
    %16 = vector.load %arg2[%c0_4, %c0_5] : memref<576x32xbf16, #tpu.memory_space<vmem>>, vector<576x32xbf16>
    %cst_6 = arith.constant dense<0.000000e+00> : vector<256x32xf32>
    %17 = tpu.matmul %15, %16, %cst_6 {dimension_numbers = #tpu.dot_dimension_numbers<[1], [0], [0], [1], [0, 0, 1, 1], [], []>} : vector<256x576xbf16>, vector<576x32xbf16>, vector<256x32xf32> -> vector<256x32xf32>
    %c0_7 = arith.constant 0 : index
    %c0_8 = arith.constant 0 : index
    %18 = vector.load %arg3[%c0_7, %c0_8] : memref<1x32xf32, #tpu.memory_space<vmem>>, vector<1x32xf32>
    %19 = vector.broadcast %18 : vector<1x32xf32> to vector<256x32xf32>
    %20 = arith.mulf %17, %19 : vector<256x32xf32>
    %c0_9 = arith.constant 0 : index
    %c0_10 = arith.constant 0 : index
    %21 = vector.load %arg4[%c0_9, %c0_10] : memref<1x32xf32, #tpu.memory_space<vmem>>, vector<1x32xf32>
    %22 = vector.broadcast %21 : vector<1x32xf32> to vector<256x32xf32>
    %23 = arith.addf %20, %22 : vector<256x32xf32>
    %cst_11 = arith.constant 0.000000e+00 : f32
    %24 = vector.broadcast %cst_11 : f32 to vector<256x32xf32>
    %25 = arith.maximumf %23, %24 : vector<256x32xf32>
    %26 = vector.shape_cast %25 : vector<256x32xf32> to vector<16x16x32xf32>
    %cst_12 = arith.constant 0.000000e+00 : f32
    %27 = vector.broadcast %cst_12 : f32 to vector<16x1x32xf32>
    %28 = tpu.concatenate %27, %26, %27 in 1 : vector<16x1x32xf32>, vector<16x16x32xf32>, vector<16x1x32xf32> -> vector<16x18x32xf32>
    %cst_13 = arith.constant 0.000000e+00 : f32
    %29 = vector.broadcast %cst_13 : f32 to vector<1x18x32xf32>
    %30 = tpu.concatenate %29, %28, %29 in 0 : vector<1x18x32xf32>, vector<16x18x32xf32>, vector<1x18x32xf32> -> vector<18x18x32xf32>
    %c0_14 = arith.constant 0 : index
    %c0_15 = arith.constant 0 : index
    %31 = vector.load %arg5[%c0_14, %c0_15] : memref<9x32xf32, #tpu.memory_space<vmem>>, vector<9x32xf32>
    %c0_16 = arith.constant 0 : index
    %c0_17 = arith.constant 0 : index
    %32 = vector.load %arg8[%c0_16, %c0_17] : memref<9x32xf32, #tpu.memory_space<vmem>>, vector<9x32xf32>
    %cst_18 = arith.constant 0.000000e+00 : f32
    %33 = vector.broadcast %cst_18 : f32 to vector<16x16x32xf32>
    %cst_19 = arith.constant 0.000000e+00 : f32
    %34 = vector.broadcast %cst_19 : f32 to vector<16x16x32xf32>
    %35 = vector.extract_strided_slice %30 {offsets = [0, 0, 0], sizes = [16, 16, 32], strides = [1, 1, 1]} : vector<18x18x32xf32> to vector<16x16x32xf32>
    %36 = vector.extract_strided_slice %31 {offsets = [0, 0], sizes = [1, 32], strides = [1, 1]} : vector<9x32xf32> to vector<1x32xf32>
    %37 = vector.shape_cast %36 : vector<1x32xf32> to vector<32xf32>
    %38 = vector.shape_cast %37 : vector<32xf32> to vector<1x1x32xf32>
    %39 = vector.broadcast %38 : vector<1x1x32xf32> to vector<16x16x32xf32>
    %40 = arith.mulf %35, %39 : vector<16x16x32xf32>
    %41 = arith.addf %33, %40 : vector<16x16x32xf32>
    %42 = vector.extract_strided_slice %32 {offsets = [0, 0], sizes = [1, 32], strides = [1, 1]} : vector<9x32xf32> to vector<1x32xf32>
    %43 = vector.shape_cast %42 : vector<1x32xf32> to vector<32xf32>
    %44 = vector.shape_cast %43 : vector<32xf32> to vector<1x1x32xf32>
    %45 = vector.broadcast %44 : vector<1x1x32xf32> to vector<16x16x32xf32>
    %46 = arith.mulf %35, %45 : vector<16x16x32xf32>
    %47 = arith.addf %34, %46 : vector<16x16x32xf32>
    %48 = vector.extract_strided_slice %30 {offsets = [0, 1, 0], sizes = [16, 16, 32], strides = [1, 1, 1]} : vector<18x18x32xf32> to vector<16x16x32xf32>
    %49 = vector.extract_strided_slice %31 {offsets = [1, 0], sizes = [1, 32], strides = [1, 1]} : vector<9x32xf32> to vector<1x32xf32>
    %50 = vector.shape_cast %49 : vector<1x32xf32> to vector<32xf32>
    %51 = vector.shape_cast %50 : vector<32xf32> to vector<1x1x32xf32>
    %52 = vector.broadcast %51 : vector<1x1x32xf32> to vector<16x16x32xf32>
    %53 = arith.mulf %48, %52 : vector<16x16x32xf32>
    %54 = arith.addf %41, %53 : vector<16x16x32xf32>
    %55 = vector.extract_strided_slice %32 {offsets = [1, 0], sizes = [1, 32], strides = [1, 1]} : vector<9x32xf32> to vector<1x32xf32>
    %56 = vector.shape_cast %55 : vector<1x32xf32> to vector<32xf32>
    %57 = vector.shape_cast %56 : vector<32xf32> to vector<1x1x32xf32>
    %58 = vector.broadcast %57 : vector<1x1x32xf32> to vector<16x16x32xf32>
    %59 = arith.mulf %48, %58 : vector<16x16x32xf32>
    %60 = arith.addf %47, %59 : vector<16x16x32xf32>
    %61 = vector.extract_strided_slice %30 {offsets = [0, 2, 0], sizes = [16, 16, 32], strides = [1, 1, 1]} : vector<18x18x32xf32> to vector<16x16x32xf32>
    %62 = vector.extract_strided_slice %31 {offsets = [2, 0], sizes = [1, 32], strides = [1, 1]} : vector<9x32xf32> to vector<1x32xf32>
    %63 = vector.shape_cast %62 : vector<1x32xf32> to vector<32xf32>
    %64 = vector.shape_cast %63 : vector<32xf32> to vector<1x1x32xf32>
    %65 = vector.broadcast %64 : vector<1x1x32xf32> to vector<16x16x32xf32>
    %66 = arith.mulf %61, %65 : vector<16x16x32xf32>
    %67 = arith.addf %54, %66 : vector<16x16x32xf32>
    %68 = vector.extract_strided_slice %32 {offsets = [2, 0], sizes = [1, 32], strides = [1, 1]} : vector<9x32xf32> to vector<1x32xf32>
    %69 = vector.shape_cast %68 : vector<1x32xf32> to vector<32xf32>
    %70 = vector.shape_cast %69 : vector<32xf32> to vector<1x1x32xf32>
    %71 = vector.broadcast %70 : vector<1x1x32xf32> to vector<16x16x32xf32>
    %72 = arith.mulf %61, %71 : vector<16x16x32xf32>
    %73 = arith.addf %60, %72 : vector<16x16x32xf32>
    %74 = vector.extract_strided_slice %30 {offsets = [1, 0, 0], sizes = [16, 16, 32], strides = [1, 1, 1]} : vector<18x18x32xf32> to vector<16x16x32xf32>
    %75 = vector.extract_strided_slice %31 {offsets = [3, 0], sizes = [1, 32], strides = [1, 1]} : vector<9x32xf32> to vector<1x32xf32>
    %76 = vector.shape_cast %75 : vector<1x32xf32> to vector<32xf32>
    %77 = vector.shape_cast %76 : vector<32xf32> to vector<1x1x32xf32>
    %78 = vector.broadcast %77 : vector<1x1x32xf32> to vector<16x16x32xf32>
    %79 = arith.mulf %74, %78 : vector<16x16x32xf32>
    %80 = arith.addf %67, %79 : vector<16x16x32xf32>
    %81 = vector.extract_strided_slice %32 {offsets = [3, 0], sizes = [1, 32], strides = [1, 1]} : vector<9x32xf32> to vector<1x32xf32>
    %82 = vector.shape_cast %81 : vector<1x32xf32> to vector<32xf32>
    %83 = vector.shape_cast %82 : vector<32xf32> to vector<1x1x32xf32>
    %84 = vector.broadcast %83 : vector<1x1x32xf32> to vector<16x16x32xf32>
    %85 = arith.mulf %74, %84 : vector<16x16x32xf32>
    %86 = arith.addf %73, %85 : vector<16x16x32xf32>
    %87 = vector.extract_strided_slice %30 {offsets = [1, 1, 0], sizes = [16, 16, 32], strides = [1, 1, 1]} : vector<18x18x32xf32> to vector<16x16x32xf32>
    %88 = vector.extract_strided_slice %31 {offsets = [4, 0], sizes = [1, 32], strides = [1, 1]} : vector<9x32xf32> to vector<1x32xf32>
    %89 = vector.shape_cast %88 : vector<1x32xf32> to vector<32xf32>
    %90 = vector.shape_cast %89 : vector<32xf32> to vector<1x1x32xf32>
    %91 = vector.broadcast %90 : vector<1x1x32xf32> to vector<16x16x32xf32>
    %92 = arith.mulf %87, %91 : vector<16x16x32xf32>
    %93 = arith.addf %80, %92 : vector<16x16x32xf32>
    %94 = vector.extract_strided_slice %32 {offsets = [4, 0], sizes = [1, 32], strides = [1, 1]} : vector<9x32xf32> to vector<1x32xf32>
    %95 = vector.shape_cast %94 : vector<1x32xf32> to vector<32xf32>
    %96 = vector.shape_cast %95 : vector<32xf32> to vector<1x1x32xf32>
    %97 = vector.broadcast %96 : vector<1x1x32xf32> to vector<16x16x32xf32>
    %98 = arith.mulf %87, %97 : vector<16x16x32xf32>
    %99 = arith.addf %86, %98 : vector<16x16x32xf32>
    %100 = vector.extract_strided_slice %30 {offsets = [1, 2, 0], sizes = [16, 16, 32], strides = [1, 1, 1]} : vector<18x18x32xf32> to vector<16x16x32xf32>
    %101 = vector.extract_strided_slice %31 {offsets = [5, 0], sizes = [1, 32], strides = [1, 1]} : vector<9x32xf32> to vector<1x32xf32>
    %102 = vector.shape_cast %101 : vector<1x32xf32> to vector<32xf32>
    %103 = vector.shape_cast %102 : vector<32xf32> to vector<1x1x32xf32>
    %104 = vector.broadcast %103 : vector<1x1x32xf32> to vector<16x16x32xf32>
    %105 = arith.mulf %100, %104 : vector<16x16x32xf32>
    %106 = arith.addf %93, %105 : vector<16x16x32xf32>
    %107 = vector.extract_strided_slice %32 {offsets = [5, 0], sizes = [1, 32], strides = [1, 1]} : vector<9x32xf32> to vector<1x32xf32>
    %108 = vector.shape_cast %107 : vector<1x32xf32> to vector<32xf32>
    %109 = vector.shape_cast %108 : vector<32xf32> to vector<1x1x32xf32>
    %110 = vector.broadcast %109 : vector<1x1x32xf32> to vector<16x16x32xf32>
    %111 = arith.mulf %100, %110 : vector<16x16x32xf32>
    %112 = arith.addf %99, %111 : vector<16x16x32xf32>
    %113 = vector.extract_strided_slice %30 {offsets = [2, 0, 0], sizes = [16, 16, 32], strides = [1, 1, 1]} : vector<18x18x32xf32> to vector<16x16x32xf32>
    %114 = vector.extract_strided_slice %31 {offsets = [6, 0], sizes = [1, 32], strides = [1, 1]} : vector<9x32xf32> to vector<1x32xf32>
    %115 = vector.shape_cast %114 : vector<1x32xf32> to vector<32xf32>
    %116 = vector.shape_cast %115 : vector<32xf32> to vector<1x1x32xf32>
    %117 = vector.broadcast %116 : vector<1x1x32xf32> to vector<16x16x32xf32>
    %118 = arith.mulf %113, %117 : vector<16x16x32xf32>
    %119 = arith.addf %106, %118 : vector<16x16x32xf32>
    %120 = vector.extract_strided_slice %32 {offsets = [6, 0], sizes = [1, 32], strides = [1, 1]} : vector<9x32xf32> to vector<1x32xf32>
    %121 = vector.shape_cast %120 : vector<1x32xf32> to vector<32xf32>
    %122 = vector.shape_cast %121 : vector<32xf32> to vector<1x1x32xf32>
    %123 = vector.broadcast %122 : vector<1x1x32xf32> to vector<16x16x32xf32>
    %124 = arith.mulf %113, %123 : vector<16x16x32xf32>
    %125 = arith.addf %112, %124 : vector<16x16x32xf32>
    %126 = vector.extract_strided_slice %30 {offsets = [2, 1, 0], sizes = [16, 16, 32], strides = [1, 1, 1]} : vector<18x18x32xf32> to vector<16x16x32xf32>
    %127 = vector.extract_strided_slice %31 {offsets = [7, 0], sizes = [1, 32], strides = [1, 1]} : vector<9x32xf32> to vector<1x32xf32>
    %128 = vector.shape_cast %127 : vector<1x32xf32> to vector<32xf32>
    %129 = vector.shape_cast %128 : vector<32xf32> to vector<1x1x32xf32>
    %130 = vector.broadcast %129 : vector<1x1x32xf32> to vector<16x16x32xf32>
    %131 = arith.mulf %126, %130 : vector<16x16x32xf32>
    %132 = arith.addf %119, %131 : vector<16x16x32xf32>
    %133 = vector.extract_strided_slice %32 {offsets = [7, 0], sizes = [1, 32], strides = [1, 1]} : vector<9x32xf32> to vector<1x32xf32>
    %134 = vector.shape_cast %133 : vector<1x32xf32> to vector<32xf32>
    %135 = vector.shape_cast %134 : vector<32xf32> to vector<1x1x32xf32>
    %136 = vector.broadcast %135 : vector<1x1x32xf32> to vector<16x16x32xf32>
    %137 = arith.mulf %126, %136 : vector<16x16x32xf32>
    %138 = arith.addf %125, %137 : vector<16x16x32xf32>
    %139 = vector.extract_strided_slice %30 {offsets = [2, 2, 0], sizes = [16, 16, 32], strides = [1, 1, 1]} : vector<18x18x32xf32> to vector<16x16x32xf32>
    %140 = vector.extract_strided_slice %31 {offsets = [8, 0], sizes = [1, 32], strides = [1, 1]} : vector<9x32xf32> to vector<1x32xf32>
    %141 = vector.shape_cast %140 : vector<1x32xf32> to vector<32xf32>
    %142 = vector.shape_cast %141 : vector<32xf32> to vector<1x1x32xf32>
    %143 = vector.broadcast %142 : vector<1x1x32xf32> to vector<16x16x32xf32>
    %144 = arith.mulf %139, %143 : vector<16x16x32xf32>
    %145 = arith.addf %132, %144 : vector<16x16x32xf32>
    %146 = vector.extract_strided_slice %32 {offsets = [8, 0], sizes = [1, 32], strides = [1, 1]} : vector<9x32xf32> to vector<1x32xf32>
    %147 = vector.shape_cast %146 : vector<1x32xf32> to vector<32xf32>
    %148 = vector.shape_cast %147 : vector<32xf32> to vector<1x1x32xf32>
    %149 = vector.broadcast %148 : vector<1x1x32xf32> to vector<16x16x32xf32>
    %150 = arith.mulf %139, %149 : vector<16x16x32xf32>
    %151 = arith.addf %138, %150 : vector<16x16x32xf32>
    %152 = vector.shape_cast %145 : vector<16x16x32xf32> to vector<256x32xf32>
    %c0_20 = arith.constant 0 : index
    %c0_21 = arith.constant 0 : index
    %153 = vector.load %arg6[%c0_20, %c0_21] : memref<1x32xf32, #tpu.memory_space<vmem>>, vector<1x32xf32>
    %154 = vector.broadcast %153 : vector<1x32xf32> to vector<256x32xf32>
    %155 = arith.mulf %152, %154 : vector<256x32xf32>
    %c0_22 = arith.constant 0 : index
    %c0_23 = arith.constant 0 : index
    %156 = vector.load %arg7[%c0_22, %c0_23] : memref<1x32xf32, #tpu.memory_space<vmem>>, vector<1x32xf32>
    %157 = vector.broadcast %156 : vector<1x32xf32> to vector<256x32xf32>
    %158 = arith.addf %155, %157 : vector<256x32xf32>
    %cst_24 = arith.constant 0.000000e+00 : f32
    %159 = vector.broadcast %cst_24 : f32 to vector<256x32xf32>
    %160 = arith.maximumf %158, %159 : vector<256x32xf32>
    %161 = vector.shape_cast %151 : vector<16x16x32xf32> to vector<256x32xf32>
    %c0_25 = arith.constant 0 : index
    %c0_26 = arith.constant 0 : index
    %162 = vector.load %arg9[%c0_25, %c0_26] : memref<1x32xf32, #tpu.memory_space<vmem>>, vector<1x32xf32>
    %163 = vector.broadcast %162 : vector<1x32xf32> to vector<256x32xf32>
    %164 = arith.mulf %161, %163 : vector<256x32xf32>
    %c0_27 = arith.constant 0 : index
    %c0_28 = arith.constant 0 : index
    %165 = vector.load %arg10[%c0_27, %c0_28] : memref<1x32xf32, #tpu.memory_space<vmem>>, vector<1x32xf32>
    %166 = vector.broadcast %165 : vector<1x32xf32> to vector<256x32xf32>
    %167 = arith.addf %164, %166 : vector<256x32xf32>
    %cst_29 = arith.constant 0.000000e+00 : f32
    %168 = vector.broadcast %cst_29 : f32 to vector<256x32xf32>
    %169 = arith.maximumf %167, %168 : vector<256x32xf32>
    %170 = arith.truncf %169 : vector<256x32xf32> to vector<256x32xbf16>
    %c0_30 = arith.constant 0 : index
    %c0_31 = arith.constant 0 : index
    %171 = vector.load %arg11[%c0_30, %c0_31] : memref<32x32xbf16, #tpu.memory_space<vmem>>, vector<32x32xbf16>
    %cst_32 = arith.constant dense<0.000000e+00> : vector<256x32xf32>
    %172 = tpu.matmul %170, %171, %cst_32 {dimension_numbers = #tpu.dot_dimension_numbers<[1], [0], [0], [1], [0, 0, 1, 1], [], []>} : vector<256x32xbf16>, vector<32x32xbf16>, vector<256x32xf32> -> vector<256x32xf32>
    %c0_33 = arith.constant 0 : index
    %c0_34 = arith.constant 0 : index
    %173 = vector.load %arg12[%c0_33, %c0_34] : memref<1x32xf32, #tpu.memory_space<vmem>>, vector<1x32xf32>
    %174 = vector.broadcast %173 : vector<1x32xf32> to vector<256x32xf32>
    %175 = arith.mulf %172, %174 : vector<256x32xf32>
    %c0_35 = arith.constant 0 : index
    %c0_36 = arith.constant 0 : index
    %176 = vector.load %arg13[%c0_35, %c0_36] : memref<1x32xf32, #tpu.memory_space<vmem>>, vector<1x32xf32>
    %177 = vector.broadcast %176 : vector<1x32xf32> to vector<256x32xf32>
    %178 = arith.addf %175, %177 : vector<256x32xf32>
    %cst_37 = arith.constant 0.000000e+00 : f32
    %179 = vector.broadcast %cst_37 : f32 to vector<256x32xf32>
    %180 = arith.maximumf %178, %179 : vector<256x32xf32>
    %181 = tpu.concatenate %160, %180 in 1 : vector<256x32xf32>, vector<256x32xf32> -> vector<256x64xf32>
    %182 = arith.truncf %181 : vector<256x64xf32> to vector<256x64xbf16>
    %c0_38 = arith.constant 0 : index
    %c0_39 = arith.constant 0 : index
    %183 = vector.load %arg14[%c0_38, %c0_39] : memref<64x16xbf16, #tpu.memory_space<vmem>>, vector<64x16xbf16>
    %cst_40 = arith.constant dense<0.000000e+00> : vector<256x16xf32>
    %184 = tpu.matmul %182, %183, %cst_40 {dimension_numbers = #tpu.dot_dimension_numbers<[1], [0], [0], [1], [0, 0, 1, 1], [], []>} : vector<256x64xbf16>, vector<64x16xbf16>, vector<256x16xf32> -> vector<256x16xf32>
    %c0_41 = arith.constant 0 : index
    %c0_42 = arith.constant 0 : index
    %185 = vector.load %arg15[%c0_41, %c0_42] : memref<1x16xf32, #tpu.memory_space<vmem>>, vector<1x16xf32>
    %186 = vector.broadcast %185 : vector<1x16xf32> to vector<256x16xf32>
    %187 = arith.mulf %184, %186 : vector<256x16xf32>
    %c0_43 = arith.constant 0 : index
    %c0_44 = arith.constant 0 : index
    %188 = vector.load %arg16[%c0_43, %c0_44] : memref<1x16xf32, #tpu.memory_space<vmem>>, vector<1x16xf32>
    %189 = vector.broadcast %188 : vector<1x16xf32> to vector<256x16xf32>
    %190 = arith.addf %187, %189 : vector<256x16xf32>
    %cst_45 = arith.constant 0.000000e+00 : f32
    %191 = vector.broadcast %cst_45 : f32 to vector<256x16xf32>
    %192 = arith.maximumf %190, %191 : vector<256x16xf32>
    %193 = arith.truncf %192 : vector<256x16xf32> to vector<256x16xbf16>
    %c0_46 = arith.constant 0 : index
    %c0_47 = arith.constant 0 : index
    %194 = vector.load %arg17[%c0_46, %c0_47] : memref<16x32xbf16, #tpu.memory_space<vmem>>, vector<16x32xbf16>
    %cst_48 = arith.constant dense<0.000000e+00> : vector<256x32xf32>
    %195 = tpu.matmul %193, %194, %cst_48 {dimension_numbers = #tpu.dot_dimension_numbers<[1], [0], [0], [1], [0, 0, 1, 1], [], []>} : vector<256x16xbf16>, vector<16x32xbf16>, vector<256x32xf32> -> vector<256x32xf32>
    %c0_49 = arith.constant 0 : index
    %c0_50 = arith.constant 0 : index
    %196 = vector.load %arg18[%c0_49, %c0_50] : memref<1x32xf32, #tpu.memory_space<vmem>>, vector<1x32xf32>
    %197 = vector.broadcast %196 : vector<1x32xf32> to vector<256x32xf32>
    %198 = arith.mulf %195, %197 : vector<256x32xf32>
    %c0_51 = arith.constant 0 : index
    %c0_52 = arith.constant 0 : index
    %199 = vector.load %arg19[%c0_51, %c0_52] : memref<1x32xf32, #tpu.memory_space<vmem>>, vector<1x32xf32>
    %200 = vector.broadcast %199 : vector<1x32xf32> to vector<256x32xf32>
    %201 = arith.addf %198, %200 : vector<256x32xf32>
    %cst_53 = arith.constant 0.000000e+00 : f32
    %202 = vector.broadcast %cst_53 : f32 to vector<256x32xf32>
    %203 = arith.maximumf %201, %202 : vector<256x32xf32>
    %204 = tpu.concatenate %25, %160, %180, %203 in 1 : vector<256x32xf32>, vector<256x32xf32>, vector<256x32xf32>, vector<256x32xf32> -> vector<256x128xf32>
    %205 = vector.shape_cast %204 : vector<256x128xf32> to vector<1x16x16x128xf32>
    %c0_54 = arith.constant 0 : index
    %c0_55 = arith.constant 0 : index
    %c0_56 = arith.constant 0 : index
    %c0_57 = arith.constant 0 : index
    %206 = vector.load %arg20[%c0_54, %c0_55, %c0_56, %c0_57] : memref<1x16x16x128xf32, #tpu.memory_space<vmem>>, vector<1x16x16x128xf32>
    tpu.vector_store %arg20[%c0_54, %c0_55, %c0_56, %c0_57], %205 {strides = array<i32>} : memref<1x16x16x128xf32, #tpu.memory_space<vmem>>, vector<1x16x16x128xf32>,
    return
  }
  func.func @transform_0(%arg0: i32) -> (i32, i32, i32, i32) {
    %c0_i32 = arith.constant 0 : i32
    %c0_i32_0 = arith.constant 0 : i32
    %c0_i32_1 = arith.constant 0 : i32
    %c0_i32_2 = arith.constant 0 : i32
    return %arg0, %c0_i32, %c0_i32_0, %c0_i32_1 : i32, i32, i32, i32
  }
  func.func @transform_1(%arg0: i32) -> (i32, i32) {
    %c0_i32 = arith.constant 0 : i32
    %c0_i32_0 = arith.constant 0 : i32
    %c0_i32_1 = arith.constant 0 : i32
    return %c0_i32, %c0_i32_0 : i32, i32
  }
  func.func @transform_2(%arg0: i32) -> (i32, i32) {
    %c0_i32 = arith.constant 0 : i32
    %c0_i32_0 = arith.constant 0 : i32
    %c0_i32_1 = arith.constant 0 : i32
    return %c0_i32, %c0_i32_0 : i32, i32
  }
  func.func @transform_3(%arg0: i32) -> (i32, i32) {
    %c0_i32 = arith.constant 0 : i32
    %c0_i32_0 = arith.constant 0 : i32
    %c0_i32_1 = arith.constant 0 : i32
    return %c0_i32, %c0_i32_0 : i32, i32
  }
  func.func @transform_4(%arg0: i32) -> (i32, i32) {
    %c0_i32 = arith.constant 0 : i32
    %c0_i32_0 = arith.constant 0 : i32
    %c0_i32_1 = arith.constant 0 : i32
    return %c0_i32, %c0_i32_0 : i32, i32
  }
  func.func @transform_5(%arg0: i32) -> (i32, i32) {
    %c0_i32 = arith.constant 0 : i32
    %c0_i32_0 = arith.constant 0 : i32
    %c0_i32_1 = arith.constant 0 : i32
    return %c0_i32, %c0_i32_0 : i32, i32
  }
  func.func @transform_6(%arg0: i32) -> (i32, i32) {
    %c0_i32 = arith.constant 0 : i32
    %c0_i32_0 = arith.constant 0 : i32
    %c0_i32_1 = arith.constant 0 : i32
    return %c0_i32, %c0_i32_0 : i32, i32
  }
  func.func @transform_7(%arg0: i32) -> (i32, i32) {
    %c0_i32 = arith.constant 0 : i32
    %c0_i32_0 = arith.constant 0 : i32
    %c0_i32_1 = arith.constant 0 : i32
    return %c0_i32, %c0_i32_0 : i32, i32
  }
  func.func @transform_8(%arg0: i32) -> (i32, i32) {
    %c0_i32 = arith.constant 0 : i32
    %c0_i32_0 = arith.constant 0 : i32
    %c0_i32_1 = arith.constant 0 : i32
    return %c0_i32, %c0_i32_0 : i32, i32
  }
  func.func @transform_9(%arg0: i32) -> (i32, i32) {
    %c0_i32 = arith.constant 0 : i32
    %c0_i32_0 = arith.constant 0 : i32
    %c0_i32_1 = arith.constant 0 : i32
    return %c0_i32, %c0_i32_0 : i32, i32
  }
  func.func @transform_10(%arg0: i32) -> (i32, i32) {
    %c0_i32 = arith.constant 0 : i32
    %c0_i32_0 = arith.constant 0 : i32
    %c0_i32_1 = arith.constant 0 : i32
    return %c0_i32, %c0_i32_0 : i32, i32
  }
  func.func @transform_11(%arg0: i32) -> (i32, i32) {
    %c0_i32 = arith.constant 0 : i32
    %c0_i32_0 = arith.constant 0 : i32
    %c0_i32_1 = arith.constant 0 : i32
    return %c0_i32, %c0_i32_0 : i32, i32
  }
  func.func @transform_12(%arg0: i32) -> (i32, i32) {
    %c0_i32 = arith.constant 0 : i32
    %c0_i32_0 = arith.constant 0 : i32
    %c0_i32_1 = arith.constant 0 : i32
    return %c0_i32, %c0_i32_0 : i32, i32
  }
  func.func @transform_13(%arg0: i32) -> (i32, i32) {
    %c0_i32 = arith.constant 0 : i32
    %c0_i32_0 = arith.constant 0 : i32
    %c0_i32_1 = arith.constant 0 : i32
    return %c0_i32, %c0_i32_0 : i32, i32
  }
  func.func @transform_14(%arg0: i32) -> (i32, i32) {
    %c0_i32 = arith.constant 0 : i32
    %c0_i32_0 = arith.constant 0 : i32
    %c0_i32_1 = arith.constant 0 : i32
    return %c0_i32, %c0_i32_0 : i32, i32
  }
  func.func @transform_15(%arg0: i32) -> (i32, i32) {
    %c0_i32 = arith.constant 0 : i32
    %c0_i32_0 = arith.constant 0 : i32
    %c0_i32_1 = arith.constant 0 : i32
    return %c0_i32, %c0_i32_0 : i32, i32
  }
  func.func @transform_16(%arg0: i32) -> (i32, i32) {
    %c0_i32 = arith.constant 0 : i32
    %c0_i32_0 = arith.constant 0 : i32
    %c0_i32_1 = arith.constant 0 : i32
    return %c0_i32, %c0_i32_0 : i32, i32
  }
  func.func @transform_17(%arg0: i32) -> (i32, i32) {
    %c0_i32 = arith.constant 0 : i32
    %c0_i32_0 = arith.constant 0 : i32
    %c0_i32_1 = arith.constant 0 : i32
    return %c0_i32, %c0_i32_0 : i32, i32
  }
  func.func @transform_18(%arg0: i32) -> (i32, i32) {
    %c0_i32 = arith.constant 0 : i32
    %c0_i32_0 = arith.constant 0 : i32
    %c0_i32_1 = arith.constant 0 : i32
    return %c0_i32, %c0_i32_0 : i32, i32
  }
  func.func @transform_19(%arg0: i32) -> (i32, i32, i32, i32) {
    %c0_i32 = arith.constant 0 : i32
    %c0_i32_0 = arith.constant 0 : i32
    %c0_i32_1 = arith.constant 0 : i32
    %c0_i32_2 = arith.constant 0 : i32
    return %arg0, %c0_i32, %c0_i32_0, %c0_i32_1 : i32, i32, i32, i32
  }
}

</mosaic_0001>

<llo_original>
// kernel: _lambda_.1
$region0: #{_lambda_.1}
  #allocation0 [shape = 'u32[]', space=smem, size = 0x4, offset = 0x4, fixed_abs, tag = 'smem constant byte address 0x4 - core index']
  #allocation1 [shape = 'u32[72,128]{1,0:T(1,128)}', space=vmem, size = 0x9000, scoped, tag = 'internal scratch']
  %s0 = inlined_call_operand.hbm [shape: f32[2,16,16,64], index: 0, kind: input, shape index: {}]
  %s1 = inlined_call_operand.hbm [shape: bf16[576,32], index: 1, kind: input, shape index: {}]
  %s2 = inlined_call_operand.hbm [shape: f32[1,32], index: 2, kind: input, shape index: {}]
  %s3 = inlined_call_operand.hbm [shape: f32[1,32], index: 3, kind: input, shape index: {}]
  %s4 = inlined_call_operand.hbm [shape: f32[9,32], index: 4, kind: input, shape index: {}]
  %s5 = inlined_call_operand.hbm [shape: f32[1,32], index: 5, kind: input, shape index: {}]
  %s6 = inlined_call_operand.hbm [shape: f32[1,32], index: 6, kind: input, shape index: {}]
  %s7 = inlined_call_operand.hbm [shape: f32[9,32], index: 7, kind: input, shape index: {}]
  %s8 = inlined_call_operand.hbm [shape: f32[1,32], index: 8, kind: input, shape index: {}]
  %s9 = inlined_call_operand.vmem [shape: f32[1,32], index: 9, kind: input, shape index: {}]
  %s10 = inlined_call_operand.hbm [shape: bf16[32,32], index: 10, kind: input, shape index: {}]
  %s11 = inlined_call_operand.vmem [shape: f32[1,32], index: 11, kind: input, shape index: {}]
  %s12 = inlined_call_operand.vmem [shape: f32[1,32], index: 12, kind: input, shape index: {}]
  %s13 = inlined_call_operand.hbm [shape: bf16[64,16], index: 13, kind: input, shape index: {}]
  %s14 = inlined_call_operand.vmem [shape: f32[1,16], index: 14, kind: input, shape index: {}]
  %s15 = inlined_call_operand.vmem [shape: f32[1,16], index: 15, kind: input, shape index: {}]
  %s16 = inlined_call_operand.vmem [shape: bf16[16,32], index: 16, kind: input, shape index: {}]
  %s17 = inlined_call_operand.vmem [shape: f32[1,32], index: 17, kind: input, shape index: {}]
  %s18 = inlined_call_operand.vmem [shape: f32[1,32], index: 18, kind: input, shape index: {}]
  %s19 = inlined_call_operand.hbm [shape: f32[2,16,16,128], index: 19, kind: output, shape index: {}]
  %s20 = sld [smem:[#allocation0]]
  $region153: #{_lambda_.1} parent=0
    _
  %s22 = ssub.s32 1, %s20
  %s23 = scalar_select 0, %s22, %s20
  $region1: #{_lambda_.1} parent=0
    #allocation2 [shape = 'u8[262144]{0}', space=vmem, size = 0x40000, scoped, tag = 'input window, operand 0']
    #allocation3 [shape = 's32[2]{0}', space=sflag, size = 0x8, scoped, tag = 'scoped memory for _lambda_.1']
    #allocation4 [shape = 's32[2]{0}', space=sflag, size = 0x8, scoped, tag = 'scoped memory for _lambda_.1']
    #allocation5 [shape = 'u8[147456]{0}', space=vmem, size = 0x24000, scoped, tag = 'input window, operand 1, single buffered']
    #allocation6 [shape = 's32[1]{0}', space=sflag, size = 0x4, scoped, tag = 'scoped memory for _lambda_.1']
    #allocation7 [shape = 'u8[512]{0}', space=vmem, size = 0x400, scoped, tag = 'input window, operand 2, single buffered']
    #allocation8 [shape = 'u8[512]{0}', space=vmem, size = 0x400, scoped, tag = 'input window, operand 3, single buffered']
    #allocation9 [shape = 's32[1]{0}', space=sflag, size = 0x4, scoped, tag = 'scoped memory for _lambda_.1']
    #allocation10 [shape = 'u8[8192]{0}', space=vmem, size = 0x2000, scoped, tag = 'input window, operand 4, single buffered']
    #allocation11 [shape = 'u8[512]{0}', space=vmem, size = 0x400, scoped, tag = 'input window, operand 5, single buffered']
    #allocation12 [shape = 's32[1]{0}', space=sflag, size = 0x4, scoped, tag = 'scoped memory for _lambda_.1']
    #allocation13 [shape = 'u8[512]{0}', space=vmem, size = 0x400, scoped, tag = 'input window, operand 6, single buffered']
    #allocation14 [shape = 'u8[8192]{0}', space=vmem, size = 0x2000, scoped, tag = 'input window, operand 7, single buffered']
    #allocation15 [shape = 's32[1]{0}', space=sflag, size = 0x4, scoped, tag = 'scoped memory for _lambda_.1']
    #allocation16 [shape = 'u8[512]{0}', space=vmem, size = 0x400, scoped, tag = 'input window, operand 8, single buffered']
    #allocation17 [shape = 'u8[8192]{0}', space=vmem, size = 0x2000, scoped, tag = 'input window, operand 10, single buffered']
    #allocation18 [shape = 's32[1]{0}', space=sflag, size = 0x4, scoped, tag = 'scoped memory for _lambda_.1']
    #allocation19 [shape = 'u8[16384]{0}', space=vmem, size = 0x4000, scoped, tag = 'input window, operand 13, single buffered']
    #allocation20 [shape = 'u8[262144]{0}', space=vmem, size = 0x40000, scoped, tag = 'output window, operand 0']
    %24 = vsyncpa [#allocation3], 0
    %s25 = scalar_lea.sflag [#allocation3], 1
    %26 = vsyncpa %s25, 0
    %27 = vsyncpa [#allocation6], 0
    %28 = vsyncpa [#allocation9], 0
    %29 = vsyncpa [#allocation12], 0
    %30 = vsyncpa [#allocation15], 0
    %31 = vsyncpa [#allocation18], 0
    %32 = vsyncpa [#allocation4], 0
    %s33 = scalar_lea.sflag [#allocation4], 1
    %34 = vsyncpa %s33, 0
    loop: start=0, step=1, limit=4
    $region2: #{_lambda_.1} parent=1 // loop_pre_header
      _
    $region3: #{_lambda_.1} parent=1 // loop_header
      %s36 = sphi 0, %s40
      %p37 = scmp.ge.s32.totalorder %s36, 4
      %s46 = sphi 0, %s48
      %s49 = sphi 0, %s46
      %s50 = sphi 0, %s49
      %s66 = sphi 0, %s50
      %s70 = sphi 0, %s70
      %s72 = sphi 0, %s70
      %s73 = sphi 0, %s72
      %s87 = sphi 0, %s73
      %s91 = sphi 0, %s91
      %s93 = sphi 0, %s91
      %s94 = sphi 0, %s93
      %s108 = sphi 0, %s94
      %s112 = sphi 0, %s112
      %s114 = sphi 0, %s112
      %s115 = sphi 0, %s114
      %s129 = sphi 0, %s115
      %s133 = sphi 0, %s133
      %s135 = sphi 0, %s133
      %s136 = sphi 0, %s135
      %s150 = sphi 0, %s136
      %s154 = sphi 0, %s154
      %s156 = sphi 0, %s154
      %s157 = sphi 0, %s156
      %s171 = sphi 0, %s157
      %s175 = sphi 0, %s175
      %s177 = sphi 0, %s175
      %s178 = sphi 0, %s177
      %s192 = sphi 0, %s178
      %s196 = sphi 0, %s196
      %s198 = sphi 0, %s196
      %s199 = sphi 0, %s198
      %s213 = sphi 0, %s199
      %s217 = sphi 0, %s217
      %s219 = sphi 0, %s217
      %s220 = sphi 0, %s219
      %s234 = sphi 0, %s220
      %s238 = sphi 0, %s238
      %s240 = sphi 0, %s238
      %s241 = sphi 0, %s240
      %s255 = sphi 0, %s241
      %s259 = sphi 0, %s259
      %s261 = sphi 0, %s259
      %s262 = sphi 0, %s261
      %s276 = sphi 0, %s262
      %s280 = sphi 0, %s280
      %s282 = sphi 0, %s280
      %s283 = sphi 0, %s282
      %s297 = sphi 0, %s283
      %s301 = sphi 0, %s301
      %s303 = sphi 0, %s301
      %s304 = sphi 0, %s303
      %s318 = sphi 0, %s304
      %s322 = sphi 0, %s322
      %s324 = sphi 0, %s322
      %s325 = sphi 0, %s324
      %s339 = sphi 0, %s325
      %s343 = sphi 0, %s343
      %s345 = sphi 0, %s343
      %s346 = sphi 0, %s345
      %s360 = sphi 0, %s346
      %s364 = sphi 0, %s364
      %s366 = sphi 0, %s364
      %s367 = sphi 0, %s366
      %s381 = sphi 0, %s367
      %s385 = sphi 0, %s385
      %s387 = sphi 0, %s385
      %s388 = sphi 0, %s387
      %s402 = sphi 0, %s388
      %s406 = sphi 0, %s406
      %s408 = sphi 0, %s406
      %s409 = sphi 0, %s408
      %s423 = sphi 0, %s409
      %s427 = sphi 0, %s427
      %s429 = sphi 0, %s427
      %s430 = sphi 0, %s429
      %s444 = sphi 0, %s430
      %s450 = sphi 0, %s452
      %s453 = sphi 0, %s450
      %s454 = sphi 0, %s453
      %s470 = sphi 0, %s454
    $region4: #{_lambda_.1} parent=1 // loop_header_branch
      %39 = sbr.rel (%p37) target = $region8
    $region5: #{_lambda_.1} parent=1 // loop_body
      %s41 = ssub.s32 %s36, 1
      %s42 = ssub.s32 %s36, 2
      %s43 = sadd.s32 %s36, 1
      %s44 = ssub.s32 %s36, %s43
      %p45 = scmp.eq.s32.totalorder %s44, 0
      %s47 = sadd.s32 %s46, 1
      %s48 = scalar_select %p45, %s46, %s47
      %p51 = pneg %p45
      %p52 = scmp.eq.s32.totalorder %s36, 1
      %p53 = por %p51, %p52
      %p54 = scmp.ne.s32.totalorder %s46, %s49
      %p55 = scmp.eq.s32.totalorder %s36, 0
      %p56 = por %p54, %p55
      %p57 = scmp.ne.s32.totalorder %s46, %s49
      %p58 = scmp.eq.s32.totalorder %s41, 1
      %p59 = por %p57, %p58
      %p60 = scmp.ne.s32.totalorder %s49, %s50
      %p61 = scmp.eq.s32.totalorder %s41, 0
      %p62 = por %p60, %p61
      %p63 = scmp.ne.s32.totalorder %s49, %s50
      %p64 = scmp.eq.s32.totalorder %s42, 1
      %p65 = por %p63, %p64
      %p67 = scmp.ne.s32.totalorder %s50, %s66
      %p68 = scmp.eq.s32.totalorder %s42, 0
      %p69 = por %p67, %p68
      %s71 = sadd.s32 %s70, 1
      %p74 = scmp.eq.s32.totalorder %s36, 1
      %p75 = scmp.ne.s32.totalorder %s70, %s72
      %p76 = scmp.eq.s32.totalorder %s36, 0
      %p77 = por %p75, %p76
      %p78 = scmp.ne.s32.totalorder %s70, %s72
      %p79 = scmp.eq.s32.totalorder %s41, 1
      %p80 = por %p78, %p79
      %p81 = scmp.ne.s32.totalorder %s72, %s73
      %p82 = scmp.eq.s32.totalorder %s41, 0
      %p83 = por %p81, %p82
      %p84 = scmp.ne.s32.totalorder %s72, %s73
      %p85 = scmp.eq.s32.totalorder %s42, 1
      %p86 = por %p84, %p85
      %p88 = scmp.ne.s32.totalorder %s73, %s87
      %p89 = scmp.eq.s32.totalorder %s42, 0
      %p90 = por %p88, %p89
      %s92 = sadd.s32 %s91, 1
      %p95 = scmp.eq.s32.totalorder %s36, 1
      %p96 = scmp.ne.s32.totalorder %s91, %s93
      %p97 = scmp.eq.s32.totalorder %s36, 0
      %p98 = por %p96, %p97
      %p99 = scmp.ne.s32.totalorder %s91, %s93
      %p100 = scmp.eq.s32.totalorder %s41, 1
      %p101 = por %p99, %p100
      %p102 = scmp.ne.s32.totalorder %s93, %s94
      %p103 = scmp.eq.s32.totalorder %s41, 0
      %p104 = por %p102, %p103
      %p105 = scmp.ne.s32.totalorder %s93, %s94
      %p106 = scmp.eq.s32.totalorder %s42, 1
      %p107 = por %p105, %p106
      %p109 = scmp.ne.s32.totalorder %s94, %s108
      %p110 = scmp.eq.s32.totalorder %s42, 0
      %p111 = por %p109, %p110
      %s113 = sadd.s32 %s112, 1
      %p116 = scmp.eq.s32.totalorder %s36, 1
      %p117 = scmp.ne.s32.totalorder %s112, %s114
      %p118 = scmp.eq.s32.totalorder %s36, 0
      %p119 = por %p117, %p118
      %p120 = scmp.ne.s32.totalorder %s112, %s114
      %p121 = scmp.eq.s32.totalorder %s41, 1
      %p122 = por %p120, %p121
      %p123 = scmp.ne.s32.totalorder %s114, %s115
      %p124 = scmp.eq.s32.totalorder %s41, 0
      %p125 = por %p123, %p124
      %p126 = scmp.ne.s32.totalorder %s114, %s115
      %p127 = scmp.eq.s32.totalorder %s42, 1
      %p128 = por %p126, %p127
      %p130 = scmp.ne.s32.totalorder %s115, %s129
      %p131 = scmp.eq.s32.totalorder %s42, 0
      %p132 = por %p130, %p131
      %s134 = sadd.s32 %s133, 1
      %p137 = scmp.eq.s32.totalorder %s36, 1
      %p138 = scmp.ne.s32.totalorder %s133, %s135
      %p139 = scmp.eq.s32.totalorder %s36, 0
      %p140 = por %p138, %p139
      %p141 = scmp.ne.s32.totalorder %s133, %s135
      %p142 = scmp.eq.s32.totalorder %s41, 1
      %p143 = por %p141, %p142
      %p144 = scmp.ne.s32.totalorder %s135, %s136
      %p145 = scmp.eq.s32.totalorder %s41, 0
      %p146 = por %p144, %p145
      %p147 = scmp.ne.s32.totalorder %s135, %s136
      %p148 = scmp.eq.s32.totalorder %s42, 1
      %p149 = por %p147, %p148
      %p151 = scmp.ne.s32.totalorder %s136, %s150
      %p152 = scmp.eq.s32.totalorder %s42, 0
      %p153 = por %p151, %p152
      %s155 = sadd.s32 %s154, 1
      %p158 = scmp.eq.s32.totalorder %s36, 1
      %p159 = scmp.ne.s32.totalorder %s154, %s156
      %p160 = scmp.eq.s32.totalorder %s36, 0
      %p161 = por %p159, %p160
      %p162 = scmp.ne.s32.totalorder %s154, %s156
      %p163 = scmp.eq.s32.totalorder %s41, 1
      %p164 = por %p162, %p163
      %p165 = scmp.ne.s32.totalorder %s156, %s157
      %p166 = scmp.eq.s32.totalorder %s41, 0
      %p167 = por %p165, %p166
      %p168 = scmp.ne.s32.totalorder %s156, %s157
      %p169 = scmp.eq.s32.totalorder %s42, 1
      %p170 = por %p168, %p169
      %p172 = scmp.ne.s32.totalorder %s157, %s171
      %p173 = scmp.eq.s32.totalorder %s42, 0
      %p174 = por %p172, %p173
      %s176 = sadd.s32 %s175, 1
      %p179 = scmp.eq.s32.totalorder %s36, 1
      %p180 = scmp.ne.s32.totalorder %s175, %s177
      %p181 = scmp.eq.s32.totalorder %s36, 0
      %p182 = por %p180, %p181
      %p183 = scmp.ne.s32.totalorder %s175, %s177
      %p184 = scmp.eq.s32.totalorder %s41, 1
      %p185 = por %p183, %p184
      %p186 = scmp.ne.s32.totalorder %s177, %s178
      %p187 = scmp.eq.s32.totalorder %s41, 0
      %p188 = por %p186, %p187
      %p189 = scmp.ne.s32.totalorder %s177, %s178
      %p190 = scmp.eq.s32.totalorder %s42, 1
      %p191 = por %p189, %p190
      %p193 = scmp.ne.s32.totalorder %s178, %s192
      %p194 = scmp.eq.s32.totalorder %s42, 0
      %p195 = por %p193, %p194
      %s197 = sadd.s32 %s196, 1
      %p200 = scmp.eq.s32.totalorder %s36, 1
      %p201 = scmp.ne.s32.totalorder %s196, %s198
      %p202 = scmp.eq.s32.totalorder %s36, 0
      %p203 = por %p201, %p202
      %p204 = scmp.ne.s32.totalorder %s196, %s198
      %p205 = scmp.eq.s32.totalorder %s41, 1
      %p206 = por %p204, %p205
      %p207 = scmp.ne.s32.totalorder %s198, %s199
      %p208 = scmp.eq.s32.totalorder %s41, 0
      %p209 = por %p207, %p208
      %p210 = scmp.ne.s32.totalorder %s198, %s199
      %p211 = scmp.eq.s32.totalorder %s42, 1
      %p212 = por %p210, %p211
      %p214 = scmp.ne.s32.totalorder %s199, %s213
      %p215 = scmp.eq.s32.totalorder %s42, 0
      %p216 = por %p214, %p215
      %s218 = sadd.s32 %s217, 1
      %p221 = scmp.eq.s32.totalorder %s36, 1
      %p222 = scmp.ne.s32.totalorder %s217, %s219
      %p223 = scmp.eq.s32.totalorder %s36, 0
      %p224 = por %p222, %p223
      %p225 = scmp.ne.s32.totalorder %s217, %s219
      %p226 = scmp.eq.s32.totalorder %s41, 1
      %p227 = por %p225, %p226
      %p228 = scmp.ne.s32.totalorder %s219, %s220
      %p229 = scmp.eq.s32.totalorder %s41, 0
      %p230 = por %p228, %p229
      %p231 = scmp.ne.s32.totalorder %s219, %s220
      %p232 = scmp.eq.s32.totalorder %s42, 1
      %p233 = por %p231, %p232
      %p235 = scmp.ne.s32.totalorder %s220, %s234
      %p236 = scmp.eq.s32.totalorder %s42, 0
      %p237 = por %p235, %p236
      %s239 = sadd.s32 %s238, 1
      %p242 = scmp.eq.s32.totalorder %s36, 1
      %p243 = scmp.ne.s32.totalorder %s238, %s240
      %p244 = scmp.eq.s32.totalorder %s36, 0
      %p245 = por %p243, %p244
      %p246 = scmp.ne.s32.totalorder %s238, %s240
      %p247 = scmp.eq.s32.totalorder %s41, 1
      %p248 = por %p246, %p247
      %p249 = scmp.ne.s32.totalorder %s240, %s241
      %p250 = scmp.eq.s32.totalorder %s41, 0
      %p251 = por %p249, %p250
      %p252 = scmp.ne.s32.totalorder %s240, %s241
      %p253 = scmp.eq.s32.totalorder %s42, 1
      %p254 = por %p252, %p253
      %p256 = scmp.ne.s32.totalorder %s241, %s255
      %p257 = scmp.eq.s32.totalorder %s42, 0
      %p258 = por %p256, %p257
      %s260 = sadd.s32 %s259, 1
      %p263 = scmp.eq.s32.totalorder %s36, 1
      %p264 = scmp.ne.s32.totalorder %s259, %s261
      %p265 = scmp.eq.s32.totalorder %s36, 0
      %p266 = por %p264, %p265
      %p267 = scmp.ne.s32.totalorder %s259, %s261
      %p268 = scmp.eq.s32.totalorder %s41, 1
      %p269 = por %p267, %p268
      %p270 = scmp.ne.s32.totalorder %s261, %s262
      %p271 = scmp.eq.s32.totalorder %s41, 0
      %p272 = por %p270, %p271
      %p273 = scmp.ne.s32.totalorder %s261, %s262
      %p274 = scmp.eq.s32.totalorder %s42, 1
      %p275 = por %p273, %p274
      %p277 = scmp.ne.s32.totalorder %s262, %s276
      %p278 = scmp.eq.s32.totalorder %s42, 0
      %p279 = por %p277, %p278
      %s281 = sadd.s32 %s280, 1
      %p284 = scmp.eq.s32.totalorder %s36, 1
      %p285 = scmp.ne.s32.totalorder %s280, %s282
      %p286 = scmp.eq.s32.totalorder %s36, 0
      %p287 = por %p285, %p286
      %p288 = scmp.ne.s32.totalorder %s280, %s282
      %p289 = scmp.eq.s32.totalorder %s41, 1
      %p290 = por %p288, %p289
      %p291 = scmp.ne.s32.totalorder %s282, %s283
      %p292 = scmp.eq.s32.totalorder %s41, 0
      %p293 = por %p291, %p292
      %p294 = scmp.ne.s32.totalorder %s282, %s283
      %p295 = scmp.eq.s32.totalorder %s42, 1
      %p296 = por %p294, %p295
      %p298 = scmp.ne.s32.totalorder %s283, %s297
      %p299 = scmp.eq.s32.totalorder %s42, 0
      %p300 = por %p298, %p299
      %s302 = sadd.s32 %s301, 1
      %p305 = scmp.eq.s32.totalorder %s36, 1
      %p306 = scmp.ne.s32.totalorder %s301, %s303
      %p307 = scmp.eq.s32.totalorder %s36, 0
      %p308 = por %p306, %p307
      %p309 = scmp.ne.s32.totalorder %s301, %s303
      %p310 = scmp.eq.s32.totalorder %s41, 1
      %p311 = por %p309, %p310
      %p312 = scmp.ne.s32.totalorder %s303, %s304
      %p313 = scmp.eq.s32.totalorder %s41, 0
      %p314 = por %p312, %p313
      %p315 = scmp.ne.s32.totalorder %s303, %s304
      %p316 = scmp.eq.s32.totalorder %s42, 1
      %p317 = por %p315, %p316
      %p319 = scmp.ne.s32.totalorder %s304, %s318
      %p320 = scmp.eq.s32.totalorder %s42, 0
      %p321 = por %p319, %p320
      %s323 = sadd.s32 %s322, 1
      %p326 = scmp.eq.s32.totalorder %s36, 1
      %p327 = scmp.ne.s32.totalorder %s322, %s324
      %p328 = scmp.eq.s32.totalorder %s36, 0
      %p329 = por %p327, %p328
      %p330 = scmp.ne.s32.totalorder %s322, %s324
      %p331 = scmp.eq.s32.totalorder %s41, 1
      %p332 = por %p330, %p331
      %p333 = scmp.ne.s32.totalorder %s324, %s325
      %p334 = scmp.eq.s32.totalorder %s41, 0
      %p335 = por %p333, %p334
      %p336 = scmp.ne.s32.totalorder %s324, %s325
      %p337 = scmp.eq.s32.totalorder %s42, 1
      %p338 = por %p336, %p337
      %p340 = scmp.ne.s32.totalorder %s325, %s339
      %p341 = scmp.eq.s32.totalorder %s42, 0
      %p342 = por %p340, %p341
      %s344 = sadd.s32 %s343, 1
      %p347 = scmp.eq.s32.totalorder %s36, 1
      %p348 = scmp.ne.s32.totalorder %s343, %s345
      %p349 = scmp.eq.s32.totalorder %s36, 0
      %p350 = por %p348, %p349
      %p351 = scmp.ne.s32.totalorder %s343, %s345
      %p352 = scmp.eq.s32.totalorder %s41, 1
      %p353 = por %p351, %p352
      %p354 = scmp.ne.s32.totalorder %s345, %s346
      %p355 = scmp.eq.s32.totalorder %s41, 0
      %p356 = por %p354, %p355
      %p357 = scmp.ne.s32.totalorder %s345, %s346
      %p358 = scmp.eq.s32.totalorder %s42, 1
      %p359 = por %p357, %p358
      %p361 = scmp.ne.s32.totalorder %s346, %s360
      %p362 = scmp.eq.s32.totalorder %s42, 0
      %p363 = por %p361, %p362
      %s365 = sadd.s32 %s364, 1
      %p368 = scmp.eq.s32.totalorder %s36, 1
      %p369 = scmp.ne.s32.totalorder %s364, %s366
      %p370 = scmp.eq.s32.totalorder %s36, 0
      %p371 = por %p369, %p370
      %p372 = scmp.ne.s32.totalorder %s364, %s366
      %p373 = scmp.eq.s32.totalorder %s41, 1
      %p374 = por %p372, %p373
      %p375 = scmp.ne.s32.totalorder %s366, %s367
      %p376 = scmp.eq.s32.totalorder %s41, 0
      %p377 = por %p375, %p376
      %p378 = scmp.ne.s32.totalorder %s366, %s367
      %p379 = scmp.eq.s32.totalorder %s42, 1
      %p380 = por %p378, %p379
      %p382 = scmp.ne.s32.totalorder %s367, %s381
      %p383 = scmp.eq.s32.totalorder %s42, 0
      %p384 = por %p382, %p383
      %s386 = sadd.s32 %s385, 1
      %p389 = scmp.eq.s32.totalorder %s36, 1
      %p390 = scmp.ne.s32.totalorder %s385, %s387
      %p391 = scmp.eq.s32.totalorder %s36, 0
      %p392 = por %p390, %p391
      %p393 = scmp.ne.s32.totalorder %s385, %s387
      %p394 = scmp.eq.s32.totalorder %s41, 1
      %p395 = por %p393, %p394
      %p396 = scmp.ne.s32.totalorder %s387, %s388
      %p397 = scmp.eq.s32.totalorder %s41, 0
      %p398 = por %p396, %p397
      %p399 = scmp.ne.s32.totalorder %s387, %s388
      %p400 = scmp.eq.s32.totalorder %s42, 1
      %p401 = por %p399, %p400
      %p403 = scmp.ne.s32.totalorder %s388, %s402
      %p404 = scmp.eq.s32.totalorder %s42, 0
      %p405 = por %p403, %p404
      %s407 = sadd.s32 %s406, 1
      %p410 = scmp.eq.s32.totalorder %s36, 1
      %p411 = scmp.ne.s32.totalorder %s406, %s408
      %p412 = scmp.eq.s32.totalorder %s36, 0
      %p413 = por %p411, %p412
      %p414 = scmp.ne.s32.totalorder %s406, %s408
      %p415 = scmp.eq.s32.totalorder %s41, 1
      %p416 = por %p414, %p415
      %p417 = scmp.ne.s32.totalorder %s408, %s409
      %p418 = scmp.eq.s32.totalorder %s41, 0
      %p419 = por %p417, %p418
      %p420 = scmp.ne.s32.totalorder %s408, %s409
      %p421 = scmp.eq.s32.totalorder %s42, 1
      %p422 = por %p420, %p421
      %p424 = scmp.ne.s32.totalorder %s409, %s423
      %p425 = scmp.eq.s32.totalorder %s42, 0
      %p426 = por %p424, %p425
      %s428 = sadd.s32 %s427, 1
      %p431 = scmp.eq.s32.totalorder %s36, 1
      %p432 = scmp.ne.s32.totalorder %s427, %s429
      %p433 = scmp.eq.s32.totalorder %s36, 0
      %p434 = por %p432, %p433
      %p435 = scmp.ne.s32.totalorder %s427, %s429
      %p436 = scmp.eq.s32.totalorder %s41, 1
      %p437 = por %p435, %p436
      %p438 = scmp.ne.s32.totalorder %s429, %s430
      %p439 = scmp.eq.s32.totalorder %s41, 0
      %p440 = por %p438, %p439
      %p441 = scmp.ne.s32.totalorder %s429, %s430
      %p442 = scmp.eq.s32.totalorder %s42, 1
      %p443 = por %p441, %p442
      %p445 = scmp.ne.s32.totalorder %s430, %s444
      %p446 = scmp.eq.s32.totalorder %s42, 0
      %p447 = por %p445, %p446
      %s448 = ssub.s32 %s36, %s43
      %p449 = scmp.eq.s32.totalorder %s448, 0
      %s451 = sadd.s32 %s450, 1
      %s452 = scalar_select %p449, %s450, %s451
      %p455 = pneg %p449
      %p456 = scmp.eq.s32.totalorder %s36, 1
      %p457 = por %p455, %p456
      %p458 = scmp.ne.s32.totalorder %s450, %s453
      %p459 = scmp.eq.s32.totalorder %s36, 0
      %p460 = por %p458, %p459
      %p461 = scmp.ne.s32.totalorder %s450, %s453
      %p462 = scmp.eq.s32.totalorder %s41, 1
      %p463 = por %p461, %p462
      %p464 = scmp.ne.s32.totalorder %s453, %s454
      %p465 = scmp.eq.s32.totalorder %s41, 0
      %p466 = por %p464, %p465
      %p467 = scmp.ne.s32.totalorder %s453, %s454
      %p468 = scmp.eq.s32.totalorder %s42, 1
      %p469 = por %p467, %p468
      %p471 = scmp.ne.s32.totalorder %s454, %s470
      %p472 = scmp.eq.s32.totalorder %s42, 0
      %p473 = por %p471, %p472
      %p474 = scmp.le.s32.totalorder 1, %s36
      %p475 = scmp.lt.s32.totalorder %s36, 3
      %p476 = pnand %p474, %p475
      %p477 = pneg %p476
      // Predicated region
      $region9: #{_lambda_.1} parent=5 // pred_check
        _
      $region10: #{_lambda_.1} parent=5 // pred_check_branch
        %479 = sbr.rel (%p476) target = $region12
      $region11: #{_lambda_.1} parent=5 // pred_region
        %s480 = ssub.s32 %s36, 1
        // Predicated region
        $region13: #{_lambda_.1} parent=11 // pred_check
          %p481 = pneg %p83
        $region14: #{_lambda_.1} parent=11 // pred_check_branch
          %483 = sbr.rel (%p481) target = $region16
        $region15: #{_lambda_.1} parent=11 // pred_region
          %485 = vsyncadd [#allocation6], 0
          %s486 = sshll.u32 %s1, 4
          %s487 = int_to_ptr.hbm [resolvable:$true] %s486
          %s488 = sshll.u32 [#allocation5], 4
          %s489 = int_to_ptr.vmem [resolvable:$true] %s488
          %494 = dma.hbm_to_vmem [thread:$0]  %s487, 4608, %s489, [#allocation6], 64, 64, 4
        $region16: #{_lambda_.1} parent=11 // pred_fallthru
          _
        // Predicated region
        $region17: #{_lambda_.1} parent=11 // pred_check
          %p495 = pneg %p104
        $region18: #{_lambda_.1} parent=11 // pred_check_branch
          %497 = sbr.rel (%p495) target = $region20
        $region19: #{_lambda_.1} parent=11 // pred_region
          %499 = vsyncadd [#allocation6], 0
          %s501 = sshll.u32 %s2, 4
          %s502 = int_to_ptr.hbm [resolvable:$true] %s501
          %s503 = sshll.u32 [#allocation7], 4
          %s504 = int_to_ptr.vmem [resolvable:$true] %s503
          %506 = dma.hbm_to_vmem [thread:$0]  %s502, 16, %s504, [#allocation6]
        $region20: #{_lambda_.1} parent=11 // pred_fallthru
          _
        // Predicated region
        $region21: #{_lambda_.1} parent=11 // pred_check
          %p507 = pneg %p125
        $region22: #{_lambda_.1} parent=11 // pred_check_branch
          %509 = sbr.rel (%p507) target = $region24
        $region23: #{_lambda_.1} parent=11 // pred_region
          %511 = vsyncadd [#allocation9], 0
          %s513 = sshll.u32 %s3, 4
          %s514 = int_to_ptr.hbm [resolvable:$true] %s513
          %s515 = sshll.u32 [#allocation8], 4
          %s516 = int_to_ptr.vmem [resolvable:$true] %s515
          %518 = dma.hbm_to_vmem [thread:$0]  %s514, 16, %s516, [#allocation9]
        $region24: #{_lambda_.1} parent=11 // pred_fallthru
          _
        // Predicated region
        $region25: #{_lambda_.1} parent=11 // pred_check
          %p519 = pneg %p146
        $region26: #{_lambda_.1} parent=11 // pred_check_branch
          %521 = sbr.rel (%p519) target = $region28
        $region27: #{_lambda_.1} parent=11 // pred_region
          %523 = vsyncadd [#allocation9], 0
          %s524 = sshll.u32 %s4, 4
          %s525 = int_to_ptr.hbm [resolvable:$true] %s524
          %s526 = sshll.u32 [#allocation10], 4
          %s527 = int_to_ptr.vmem [resolvable:$true] %s526
          %532 = dma.hbm_to_vmem [thread:$0]  %s525, 256, %s527, [#allocation9], 128, 128, 8
        $region28: #{_lambda_.1} parent=11 // pred_fallthru
          _
        // Predicated region
        $region29: #{_lambda_.1} parent=11 // pred_check
          %p533 = pneg %p167
        $region30: #{_lambda_.1} parent=11 // pred_check_branch
          %535 = sbr.rel (%p533) target = $region32
        $region31: #{_lambda_.1} parent=11 // pred_region
          %537 = vsyncadd [#allocation12], 0
          %s539 = sshll.u32 %s5, 4
          %s540 = int_to_ptr.hbm [resolvable:$true] %s539
          %s541 = sshll.u32 [#allocation11], 4
          %s542 = int_to_ptr.vmem [resolvable:$true] %s541
          %544 = dma.hbm_to_vmem [thread:$0]  %s540, 16, %s542, [#allocation12]
        $region32: #{_lambda_.1} parent=11 // pred_fallthru
          _
        // Predicated region
        $region33: #{_lambda_.1} parent=11 // pred_check
          %p545 = pneg %p188
        $region34: #{_lambda_.1} parent=11 // pred_check_branch
          %547 = sbr.rel (%p545) target = $region36
        $region35: #{_lambda_.1} parent=11 // pred_region
          %549 = vsyncadd [#allocation12], 0
          %s551 = sshll.u32 %s6, 4
          %s552 = int_to_ptr.hbm [resolvable:$true] %s551
          %s553 = sshll.u32 [#allocation13], 4
          %s554 = int_to_ptr.vmem [resolvable:$true] %s553
          %556 = dma.hbm_to_vmem [thread:$0]  %s552, 16, %s554, [#allocation12]
        $region36: #{_lambda_.1} parent=11 // pred_fallthru
          _
        // Predicated region
        $region37: #{_lambda_.1} parent=11 // pred_check
          %p557 = pneg %p209
        $region38: #{_lambda_.1} parent=11 // pred_check_branch
          %559 = sbr.rel (%p557) target = $region40
        $region39: #{_lambda_.1} parent=11 // pred_region
          %561 = vsyncadd [#allocation15], 0
          %s562 = sshll.u32 %s7, 4
          %s563 = int_to_ptr.hbm [resolvable:$true] %s562
          %s564 = sshll.u32 [#allocation14], 4
          %s565 = int_to_ptr.vmem [resolvable:$true] %s564
          %570 = dma.hbm_to_vmem [thread:$0]  %s563, 256, %s565, [#allocation15], 128, 128, 8
        $region40: #{_lambda_.1} parent=11 // pred_fallthru
          _
        // Predicated region
        $region41: #{_lambda_.1} parent=11 // pred_check
          %p571 = pneg %p230
        $region42: #{_lambda_.1} parent=11 // pred_check_branch
          %573 = sbr.rel (%p571) target = $region44
        $region43: #{_lambda_.1} parent=11 // pred_region
          %575 = vsyncadd [#allocation15], 0
          %s577 = sshll.u32 %s8, 4
          %s578 = int_to_ptr.hbm [resolvable:$true] %s577
          %s579 = sshll.u32 [#allocation16], 4
          %s580 = int_to_ptr.vmem [resolvable:$true] %s579
          %582 = dma.hbm_to_vmem [thread:$0]  %s578, 16, %s580, [#allocation15]
        $region44: #{_lambda_.1} parent=11 // pred_fallthru
          _
        // Predicated region
        $region45: #{_lambda_.1} parent=11 // pred_check
          %p583 = pneg %p251
        $region46: #{_lambda_.1} parent=11 // pred_check_branch
          %585 = sbr.rel (%p583) target = $region48
        $region47: #{_lambda_.1} parent=11 // pred_region
          _
        $region48: #{_lambda_.1} parent=11 // pred_fallthru
          _
        // Predicated region
        $region49: #{_lambda_.1} parent=11 // pred_check
          %p586 = pneg %p272
        $region50: #{_lambda_.1} parent=11 // pred_check_branch
          %588 = sbr.rel (%p586) target = $region52
        $region51: #{_lambda_.1} parent=11 // pred_region
          %590 = vsyncadd [#allocation18], 0
          %s591 = sshll.u32 %s10, 4
          %s592 = int_to_ptr.hbm [resolvable:$true] %s591
          %s593 = sshll.u32 [#allocation17], 4
          %s594 = int_to_ptr.vmem [resolvable:$true] %s593
          %599 = dma.hbm_to_vmem [thread:$0]  %s592, 256, %s594, [#allocation18], 64, 64, 4
        $region52: #{_lambda_.1} parent=11 // pred_fallthru
          _
        // Predicated region
        $region53: #{_lambda_.1} parent=11 // pred_check
          %p600 = pneg %p293
        $region54: #{_lambda_.1} parent=11 // pred_check_branch
          %602 = sbr.rel (%p600) target = $region56
        $region55: #{_lambda_.1} parent=11 // pred_region
          _
        $region56: #{_lambda_.1} parent=11 // pred_fallthru
          _
        // Predicated region
        $region57: #{_lambda_.1} parent=11 // pred_check
          %p603 = pneg %p314
        $region58: #{_lambda_.1} parent=11 // pred_check_branch
          %605 = sbr.rel (%p603) target = $region60
        $region59: #{_lambda_.1} parent=11 // pred_region
          _
        $region60: #{_lambda_.1} parent=11 // pred_fallthru
          _
        // Predicated region
        $region61: #{_lambda_.1} parent=11 // pred_check
          %p606 = pneg %p335
        $region62: #{_lambda_.1} parent=11 // pred_check_branch
          %608 = sbr.rel (%p606) target = $region64
        $region63: #{_lambda_.1} parent=11 // pred_region
          %610 = vsyncadd [#allocation18], 0
          %s611 = sshll.u32 %s13, 4
          %s612 = int_to_ptr.hbm [resolvable:$true] %s611
          %s613 = sshll.u32 [#allocation19], 4
          %s614 = int_to_ptr.vmem [resolvable:$true] %s613
          %619 = dma.hbm_to_vmem [thread:$0]  %s612, 512, %s614, [#allocation18], 64, 64, 4
        $region64: #{_lambda_.1} parent=11 // pred_fallthru
          _
        // Predicated region
        $region65: #{_lambda_.1} parent=11 // pred_check
          %p620 = pneg %p356
        $region66: #{_lambda_.1} parent=11 // pred_check_branch
          %622 = sbr.rel (%p620) target = $region68
        $region67: #{_lambda_.1} parent=11 // pred_region
          _
        $region68: #{_lambda_.1} parent=11 // pred_fallthru
          _
        // Predicated region
        $region69: #{_lambda_.1} parent=11 // pred_check
          %p623 = pneg %p377
        $region70: #{_lambda_.1} parent=11 // pred_check_branch
          %625 = sbr.rel (%p623) target = $region72
        $region71: #{_lambda_.1} parent=11 // pred_region
          _
        $region72: #{_lambda_.1} parent=11 // pred_fallthru
          _
        // Predicated region
        $region73: #{_lambda_.1} parent=11 // pred_check
          %p626 = pneg %p398
        $region74: #{_lambda_.1} parent=11 // pred_check_branch
          %628 = sbr.rel (%p626) target = $region76
        $region75: #{_lambda_.1} parent=11 // pred_region
          _
        $region76: #{_lambda_.1} parent=11 // pred_fallthru
          _
        // Predicated region
        $region77: #{_lambda_.1} parent=11 // pred_check
          %p629 = pneg %p419
        $region78: #{_lambda_.1} parent=11 // pred_check_branch
          %631 = sbr.rel (%p629) target = $region80
        $region79: #{_lambda_.1} parent=11 // pred_region
          _
        $region80: #{_lambda_.1} parent=11 // pred_fallthru
          _
        // Predicated region
        $region81: #{_lambda_.1} parent=11 // pred_check
          %p632 = pneg %p440
        $region82: #{_lambda_.1} parent=11 // pred_check_branch
          %634 = sbr.rel (%p632) target = $region84
        $region83: #{_lambda_.1} parent=11 // pred_region
          _
        $region84: #{_lambda_.1} parent=11 // pred_fallthru
          _
      $region12: #{_lambda_.1} parent=5 // pred_fallthru
        _
      %p635 = scmp.lt.s32.totalorder %s36, 2
      // Predicated region
      $region85: #{_lambda_.1} parent=5 // pred_check
        %p636 = pneg %p635
      $region86: #{_lambda_.1} parent=5 // pred_check_branch
        %638 = sbr.rel (%p636) target = $region88
      $region87: #{_lambda_.1} parent=5 // pred_region
        // Predicated region
        $region89: #{_lambda_.1} parent=87 // pred_check
          %p639 = pneg %p56
        $region90: #{_lambda_.1} parent=87 // pred_check_branch
          %641 = sbr.rel (%p639) target = $region92
        $region91: #{_lambda_.1} parent=87 // pred_region
          %s642 = sand.u32 %s46, 1
          %s643 = scalar_lea.sflag [#allocation3], %s642
          %s644 = sand.u32 %s46, 1
          %s645 = smul.addr %s644, 256
          %s646 = scalar_lea.vmem [#allocation2], %s645
          %648 = vsyncadd %s643, 0
          %s649 = smul.addr %s36, 32
          %s650 = smul.addr %s649, 8
          %s651 = scalar_lea.hbm %s0, %s650
          %s652 = sshll.u32 %s651, 4
          %s653 = int_to_ptr.hbm [resolvable:$true] %s652
          %s654 = sshll.u32 %s646, 4
          %s655 = int_to_ptr.vmem [resolvable:$true] %s654
          %660 = dma.hbm_to_vmem [thread:$0]  %s653, 4096, %s655, %s643, 128, 128, 8
        $region92: #{_lambda_.1} parent=87 // pred_fallthru
          _
      $region88: #{_lambda_.1} parent=5 // pred_fallthru
        _
      %p661 = scmp.le.s32.totalorder 1, %s36
      %p662 = scmp.lt.s32.totalorder %s36, 3
      %p663 = pnand %p661, %p662
      %p664 = pneg %p663
      // Predicated region
      $region93: #{_lambda_.1} parent=5 // pred_check
        _
      $region94: #{_lambda_.1} parent=5 // pred_check_branch
        %666 = sbr.rel (%p663) target = $region96
      $region95: #{_lambda_.1} parent=5 // pred_region
        %s667 = ssub.s32 %s36, 1
        %s668 = sand.u32 %s49, 1
        %s669 = scalar_lea.sflag [#allocation3], %s668
        %s670 = sand.u32 %s49, 1
        %s671 = smul.addr %s670, 256
        %s672 = scalar_lea.vmem [#allocation2], %s671
        // Predicated region
        $region97: #{_lambda_.1} parent=95 // pred_check
          %p673 = pneg %p62
        $region98: #{_lambda_.1} parent=95 // pred_check_branch
          %675 = sbr.rel (%p673) target = $region100
        $region99: #{_lambda_.1} parent=95 // pred_region
          %677 = dma.done %s669, 4096
        $region100: #{_lambda_.1} parent=95 // pred_fallthru
          _
        // Predicated region
        $region101: #{_lambda_.1} parent=95 // pred_check
          %p678 = pneg %p83
        $region102: #{_lambda_.1} parent=95 // pred_check_branch
          %680 = sbr.rel (%p678) target = $region104
        $region103: #{_lambda_.1} parent=95 // pred_region
          %682 = dma.done [#allocation6], 4608
        $region104: #{_lambda_.1} parent=95 // pred_fallthru
          _
        // Predicated region
        $region105: #{_lambda_.1} parent=95 // pred_check
          %p683 = pneg %p104
        $region106: #{_lambda_.1} parent=95 // pred_check_branch
          %685 = sbr.rel (%p683) target = $region108
        $region107: #{_lambda_.1} parent=95 // pred_region
          %687 = dma.done [#allocation6], 16
        $region108: #{_lambda_.1} parent=95 // pred_fallthru
          _
        // Predicated region
        $region109: #{_lambda_.1} parent=95 // pred_check
          %p688 = pneg %p125
        $region110: #{_lambda_.1} parent=95 // pred_check_branch
          %690 = sbr.rel (%p688) target = $region112
        $region111: #{_lambda_.1} parent=95 // pred_region
          %692 = dma.done [#allocation9], 16
        $region112: #{_lambda_.1} parent=95 // pred_fallthru
          _
        // Predicated region
        $region113: #{_lambda_.1} parent=95 // pred_check
          %p693 = pneg %p146
        $region114: #{_lambda_.1} parent=95 // pred_check_branch
          %695 = sbr.rel (%p693) target = $region116
        $region115: #{_lambda_.1} parent=95 // pred_region
          %697 = dma.done [#allocation9], 256
        $region116: #{_lambda_.1} parent=95 // pred_fallthru
          _
        // Predicated region
        $region117: #{_lambda_.1} parent=95 // pred_check
          %p698 = pneg %p167
        $region118: #{_lambda_.1} parent=95 // pred_check_branch
          %700 = sbr.rel (%p698) target = $region120
        $region119: #{_lambda_.1} parent=95 // pred_region
          %702 = dma.done [#allocation12], 16
        $region120: #{_lambda_.1} parent=95 // pred_fallthru
          _
        // Predicated region
        $region121: #{_lambda_.1} parent=95 // pred_check
          %p703 = pneg %p188
        $region122: #{_lambda_.1} parent=95 // pred_check_branch
          %705 = sbr.rel (%p703) target = $region124
        $region123: #{_lambda_.1} parent=95 // pred_region
          %707 = dma.done [#allocation12], 16
        $region124: #{_lambda_.1} parent=95 // pred_fallthru
          _
        // Predicated region
        $region125: #{_lambda_.1} parent=95 // pred_check
          %p708 = pneg %p209
        $region126: #{_lambda_.1} parent=95 // pred_check_branch
          %710 = sbr.rel (%p708) target = $region128
        $region127: #{_lambda_.1} parent=95 // pred_region
          %712 = dma.done [#allocation15], 256
        $region128: #{_lambda_.1} parent=95 // pred_fallthru
          _
        // Predicated region
        $region129: #{_lambda_.1} parent=95 // pred_check
          %p713 = pneg %p230
        $region130: #{_lambda_.1} parent=95 // pred_check_branch
          %715 = sbr.rel (%p713) target = $region132
        $region131: #{_lambda_.1} parent=95 // pred_region
          %717 = dma.done [#allocation15], 16
        $region132: #{_lambda_.1} parent=95 // pred_fallthru
          _
        // Predicated region
        $region133: #{_lambda_.1} parent=95 // pred_check
          %p718 = pneg %p272
        $region134: #{_lambda_.1} parent=95 // pred_check_branch
          %720 = sbr.rel (%p718) target = $region136
        $region135: #{_lambda_.1} parent=95 // pred_region
          %722 = dma.done [#allocation18], 256
        $region136: #{_lambda_.1} parent=95 // pred_fallthru
          _
        // Predicated region
        $region137: #{_lambda_.1} parent=95 // pred_check
          %p723 = pneg %p335
        $region138: #{_lambda_.1} parent=95 // pred_check_branch
          %725 = sbr.rel (%p723) target = $region140
        $region139: #{_lambda_.1} parent=95 // pred_region
          %727 = dma.done [#allocation18], 512
        $region140: #{_lambda_.1} parent=95 // pred_fallthru
          _
        %s728 = sand.u32 %s49, 1
        %s729 = scalar_lea.sflag [#allocation3], %s728
        %s730 = sand.u32 %s49, 1
        %s731 = smul.addr %s730, 256
        %s732 = scalar_lea.vmem [#allocation2], %s731
        %p733 = pneg %p62
        %p734 = pneg %p59
        %p735 = pneg %p83
        %p736 = pneg %p80
        %p737 = pneg %p104
        %p738 = pneg %p101
        %p739 = pneg %p125
        %p740 = pneg %p122
        %p741 = pneg %p146
        %p742 = pneg %p143
        %p743 = pneg %p167
        %p744 = pneg %p164
        %p745 = pneg %p188
        %p746 = pneg %p185
        %p747 = pneg %p209
        %p748 = pneg %p206
        %p749 = pneg %p230
        %p750 = pneg %p227
        %p751 = pneg %p251
        %p752 = pneg %p248
        %p753 = pneg %p272
        %p754 = pneg %p269
        %p755 = pneg %p293
        %p756 = pneg %p290
        %p757 = pneg %p314
        %p758 = pneg %p311
        %p759 = pneg %p335
        %p760 = pneg %p332
        %p761 = pneg %p356
        %p762 = pneg %p353
        %p763 = pneg %p377
        %p764 = pneg %p374
        %p765 = pneg %p398
        %p766 = pneg %p395
        %p767 = pneg %p419
        %p768 = pneg %p416
        %p769 = pneg %p440
        %p770 = pneg %p437
        %p771 = pneg %p466
        %p772 = pneg %p463
        %s773 = sand.u32 %s453, 1
        %s774 = scalar_lea.sflag [#allocation4], %s773
        %s775 = sand.u32 %s453, 1
        %s776 = smul.addr %s775, 256
        %s777 = scalar_lea.vmem [#allocation20], %s776
        %v779 = vld [vmem:[%s672] sm:$0xff]
        %v780 = vld [vmem:[%s672 + $0x8] sm:$0xff]
        %v781 = vld [vmem:[%s672 + $0x10] sm:$0xff]
        %v782 = vld [vmem:[%s672 + $0x18] sm:$0xff]
        %v783 = vld [vmem:[%s672 + $0x20] sm:$0xff]
        %v784 = vld [vmem:[%s672 + $0x28] sm:$0xff]
        %v785 = vld [vmem:[%s672 + $0x30] sm:$0xff]
        %v786 = vld [vmem:[%s672 + $0x38] sm:$0xff]
        %v787 = vld [vmem:[%s672 + $0x40] sm:$0xff]
        %v788 = vld [vmem:[%s672 + $0x48] sm:$0xff]
        %v789 = vld [vmem:[%s672 + $0x50] sm:$0xff]
        %v790 = vld [vmem:[%s672 + $0x58] sm:$0xff]
        %v791 = vld [vmem:[%s672 + $0x60] sm:$0xff]
        %v792 = vld [vmem:[%s672 + $0x68] sm:$0xff]
        %v793 = vld [vmem:[%s672 + $0x70] sm:$0xff]
        %v794 = vld [vmem:[%s672 + $0x78] sm:$0xff]
        %v795 = vld [vmem:[%s672 + $0x80] sm:$0xff]
        %v796 = vld [vmem:[%s672 + $0x88] sm:$0xff]
        %v797 = vld [vmem:[%s672 + $0x90] sm:$0xff]
        %v798 = vld [vmem:[%s672 + $0x98] sm:$0xff]
        %v799 = vld [vmem:[%s672 + $0xa0] sm:$0xff]
        %v800 = vld [vmem:[%s672 + $0xa8] sm:$0xff]
        %v801 = vld [vmem:[%s672 + $0xb0] sm:$0xff]
        %v802 = vld [vmem:[%s672 + $0xb8] sm:$0xff]
        %v803 = vld [vmem:[%s672 + $0xc0] sm:$0xff]
        %v804 = vld [vmem:[%s672 + $0xc8] sm:$0xff]
        %v805 = vld [vmem:[%s672 + $0xd0] sm:$0xff]
        %v806 = vld [vmem:[%s672 + $0xd8] sm:$0xff]
        %v807 = vld [vmem:[%s672 + $0xe0] sm:$0xff]
        %v808 = vld [vmem:[%s672 + $0xe8] sm:$0xff]
        %v809 = vld [vmem:[%s672 + $0xf0] sm:$0xff]
        %v810 = vld [vmem:[%s672 + $0xf8] sm:$0xff]
        %vm843 = vcmask 1040384
        %v844 = vrot.slane %v779, 7
        %v845 = vrot.slane %v780, 7
        %v846 = vsel %vm843, %v844, %v845
        %v847 = vrot.slane %v781, 7
        %v848 = vrot.slane %v782, 7
        %v849 = vsel %vm843, %v847, %v848
        %v850 = vrot.slane %v783, 7
        %v851 = vrot.slane %v784, 7
        %v852 = vsel %vm843, %v850, %v851
        %v853 = vrot.slane %v785, 7
        %v854 = vrot.slane %v786, 7
        %v855 = vsel %vm843, %v853, %v854
        %v856 = vrot.slane %v787, 7
        %v857 = vrot.slane %v788, 7
        %v858 = vsel %vm843, %v856, %v857
        %v859 = vrot.slane %v789, 7
        %v860 = vrot.slane %v790, 7
        %v861 = vsel %vm843, %v859, %v860
        %v862 = vrot.slane %v791, 7
        %v863 = vrot.slane %v792, 7
        %v864 = vsel %vm843, %v862, %v863
        %v865 = vrot.slane %v793, 7
        %v866 = vrot.slane %v794, 7
        %v867 = vsel %vm843, %v865, %v866
        %v868 = vrot.slane %v795, 7
        %v869 = vrot.slane %v796, 7
        %v870 = vsel %vm843, %v868, %v869
        %v871 = vrot.slane %v797, 7
        %v872 = vrot.slane %v798, 7
        %v873 = vsel %vm843, %v871, %v872
        %v874 = vrot.slane %v799, 7
        %v875 = vrot.slane %v800, 7
        %v876 = vsel %vm843, %v874, %v875
        %v877 = vrot.slane %v801, 7
        %v878 = vrot.slane %v802, 7
        %v879 = vsel %vm843, %v877, %v878
        %v880 = vrot.slane %v803, 7
        %v881 = vrot.slane %v804, 7
        %v882 = vsel %vm843, %v880, %v881
        %v883 = vrot.slane %v805, 7
        %v884 = vrot.slane %v806, 7
        %v885 = vsel %vm843, %v883, %v884
        %v886 = vrot.slane %v807, 7
        %v887 = vrot.slane %v808, 7
        %v888 = vsel %vm843, %v886, %v887
        %v889 = vrot.slane %v809, 7
        %v890 = vrot.slane %v810, 7
        %v891 = vsel %vm843, %v889, %v890
        %v940 = vsel %vm843, 0.0, %v844
        %v941 = vsel %vm843, 0.0, %v847
        %v942 = vsel %vm843, 0.0, %v850
        %v943 = vsel %vm843, 0.0, %v853
        %v944 = vsel %vm843, 0.0, %v856
        %v945 = vsel %vm843, 0.0, %v859
        %v946 = vsel %vm843, 0.0, %v862
        %v947 = vsel %vm843, 0.0, %v865
        %v948 = vsel %vm843, 0.0, %v868
        %v949 = vsel %vm843, 0.0, %v871
        %v950 = vsel %vm843, 0.0, %v874
        %v951 = vsel %vm843, 0.0, %v877
        %v952 = vsel %vm843, 0.0, %v880
        %v953 = vsel %vm843, 0.0, %v883
        %v954 = vsel %vm843, 0.0, %v886
        %v955 = vsel %vm843, 0.0, %v889
        %v956 = vsel %vm843, %v845, 0.0
        %v957 = vsel %vm843, %v848, 0.0
        %v958 = vsel %vm843, %v851, 0.0
        %v959 = vsel %vm843, %v854, 0.0
        %v960 = vsel %vm843, %v857, 0.0
        %v961 = vsel %vm843, %v860, 0.0
        %v962 = vsel %vm843, %v863, 0.0
        %v963 = vsel %vm843, %v866, 0.0
        %v964 = vsel %vm843, %v869, 0.0
        %v965 = vsel %vm843, %v872, 0.0
        %v966 = vsel %vm843, %v875, 0.0
        %v967 = vsel %vm843, %v878, 0.0
        %v968 = vsel %vm843, %v881, 0.0
        %v969 = vsel %vm843, %v884, 0.0
        %v970 = vsel %vm843, %v887, 0.0
        %v971 = vsel %vm843, %v890, 0.0
        %vm1005 = vcmask 1046528
        %v1006 = vrot.slane 0.0, 1
        %v1007 = vsel %vm1005, %v1006, %v1006
        %v1008 = vrot.slane %v940, 1
        %v1009 = vrot.slane %v846, 1
        %v1010 = vsel %vm1005, %v1008, %v1009
        %v1011 = vrot.slane %v956, 1
        %v1012 = vsel %vm1005, %v1009, %v1011
        %v1013 = vrot.slane %v941, 1
        %v1014 = vrot.slane %v849, 1
        %v1015 = vsel %vm1005, %v1013, %v1014
        %v1016 = vrot.slane %v957, 1
        %v1017 = vsel %vm1005, %v1014, %v1016
        %v1018 = vrot.slane %v942, 1
        %v1019 = vrot.slane %v852, 1
        %v1020 = vsel %vm1005, %v1018, %v1019
        %v1021 = vrot.slane %v958, 1
        %v1022 = vsel %vm1005, %v1019, %v1021
        %v1023 = vrot.slane %v943, 1
        %v1024 = vrot.slane %v855, 1
        %v1025 = vsel %vm1005, %v1023, %v1024
        %v1026 = vrot.slane %v959, 1
        %v1027 = vsel %vm1005, %v1024, %v1026
        %v1028 = vrot.slane %v944, 1
        %v1029 = vrot.slane %v858, 1
        %v1030 = vsel %vm1005, %v1028, %v1029
        %v1031 = vrot.slane %v960, 1
        %v1032 = vsel %vm1005, %v1029, %v1031
        %v1033 = vrot.slane %v945, 1
        %v1034 = vrot.slane %v861, 1
        %v1035 = vsel %vm1005, %v1033, %v1034
        %v1036 = vrot.slane %v961, 1
        %v1037 = vsel %vm1005, %v1034, %v1036
        %v1038 = vrot.slane %v946, 1
        %v1039 = vrot.slane %v864, 1
        %v1040 = vsel %vm1005, %v1038, %v1039
        %v1041 = vrot.slane %v962, 1
        %v1042 = vsel %vm1005, %v1039, %v1041
        %v1043 = vrot.slane %v947, 1
        %v1044 = vrot.slane %v867, 1
        %v1045 = vsel %vm1005, %v1043, %v1044
        %v1046 = vrot.slane %v963, 1
        %v1047 = vsel %vm1005, %v1044, %v1046
        %v1048 = vrot.slane %v948, 1
        %v1049 = vrot.slane %v870, 1
        %v1050 = vsel %vm1005, %v1048, %v1049
        %v1051 = vrot.slane %v964, 1
        %v1052 = vsel %vm1005, %v1049, %v1051
        %v1053 = vrot.slane %v949, 1
        %v1054 = vrot.slane %v873, 1
        %v1055 = vsel %vm1005, %v1053, %v1054
        %v1056 = vrot.slane %v965, 1
        %v1057 = vsel %vm1005, %v1054, %v1056
        %v1058 = vrot.slane %v950, 1
        %v1059 = vrot.slane %v876, 1
        %v1060 = vsel %vm1005, %v1058, %v1059
        %v1061 = vrot.slane %v966, 1
        %v1062 = vsel %vm1005, %v1059, %v1061
        %v1063 = vrot.slane %v951, 1
        %v1064 = vrot.slane %v879, 1
        %v1065 = vsel %vm1005, %v1063, %v1064
        %v1066 = vrot.slane %v967, 1
        %v1067 = vsel %vm1005, %v1064, %v1066
        %v1068 = vrot.slane %v952, 1
        %v1069 = vrot.slane %v882, 1
        %v1070 = vsel %vm1005, %v1068, %v1069
        %v1071 = vrot.slane %v968, 1
        %v1072 = vsel %vm1005, %v1069, %v1071
        %v1073 = vrot.slane %v953, 1
        %v1074 = vrot.slane %v885, 1
        %v1075 = vsel %vm1005, %v1073, %v1074
        %v1076 = vrot.slane %v969, 1
        %v1077 = vsel %vm1005, %v1074, %v1076
        %v1078 = vrot.slane %v954, 1
        %v1079 = vrot.slane %v888, 1
        %v1080 = vsel %vm1005, %v1078, %v1079
        %v1081 = vrot.slane %v970, 1
        %v1082 = vsel %vm1005, %v1079, %v1081
        %v1083 = vrot.slane %v955, 1
        %v1084 = vrot.slane %v891, 1
        %v1085 = vsel %vm1005, %v1083, %v1084
        %v1086 = vrot.slane %v971, 1
        %v1087 = vsel %vm1005, %v1084, %v1086
        %1088 = vrot.lane.b32.xlu0 %v1007, 64
        %v1089 = vpop.permute.xlu0 %1088
        %1090 = vrot.lane.b32.xlu0 %v1010, 64
        %v1091 = vpop.permute.xlu0 %1090
        %1092 = vrot.lane.b32.xlu0 %v1012, 64
        %v1093 = vpop.permute.xlu0 %1092
        %1094 = vrot.lane.b32.xlu0 %v1015, 64
        %v1095 = vpop.permute.xlu0 %1094
        %1096 = vrot.lane.b32.xlu0 %v1017, 64
        %v1097 = vpop.permute.xlu0 %1096
        %1098 = vrot.lane.b32.xlu0 %v1020, 64
        %v1099 = vpop.permute.xlu0 %1098
        %1100 = vrot.lane.b32.xlu0 %v1022, 64
        %v1101 = vpop.permute.xlu0 %1100
        %1102 = vrot.lane.b32.xlu0 %v1025, 64
        %v1103 = vpop.permute.xlu0 %1102
        %1104 = vrot.lane.b32.xlu0 %v1027, 64
        %v1105 = vpop.permute.xlu0 %1104
        %1106 = vrot.lane.b32.xlu0 %v1030, 64
        %v1107 = vpop.permute.xlu0 %1106
        %1108 = vrot.lane.b32.xlu0 %v1032, 64
        %v1109 = vpop.permute.xlu0 %1108
        %1110 = vrot.lane.b32.xlu0 %v1035, 64
        %v1111 = vpop.permute.xlu0 %1110
        %1112 = vrot.lane.b32.xlu0 %v1037, 64
        %v1113 = vpop.permute.xlu0 %1112
        %1114 = vrot.lane.b32.xlu0 %v1040, 64
        %v1115 = vpop.permute.xlu0 %1114
        %1116 = vrot.lane.b32.xlu0 %v1042, 64
        %v1117 = vpop.permute.xlu0 %1116
        %1118 = vrot.lane.b32.xlu0 %v1045, 64
        %v1119 = vpop.permute.xlu0 %1118
        %1120 = vrot.lane.b32.xlu0 %v1047, 64
        %v1121 = vpop.permute.xlu0 %1120
        %1122 = vrot.lane.b32.xlu0 %v1050, 64
        %v1123 = vpop.permute.xlu0 %1122
        %1124 = vrot.lane.b32.xlu0 %v1052, 64
        %v1125 = vpop.permute.xlu0 %1124
        %1126 = vrot.lane.b32.xlu0 %v1055, 64
        %v1127 = vpop.permute.xlu0 %1126
        %1128 = vrot.lane.b32.xlu0 %v1057, 64
        %v1129 = vpop.permute.xlu0 %1128
        %1130 = vrot.lane.b32.xlu0 %v1060, 64
        %v1131 = vpop.permute.xlu0 %1130
        %1132 = vrot.lane.b32.xlu0 %v1062, 64
        %v1133 = vpop.permute.xlu0 %1132
        %1134 = vrot.lane.b32.xlu0 %v1065, 64
        %v1135 = vpop.permute.xlu0 %1134
        %1136 = vrot.lane.b32.xlu0 %v1067, 64
        %v1137 = vpop.permute.xlu0 %1136
        %1138 = vrot.lane.b32.xlu0 %v1070, 64
        %v1139 = vpop.permute.xlu0 %1138
        %1140 = vrot.lane.b32.xlu0 %v1072, 64
        %v1141 = vpop.permute.xlu0 %1140
        %1142 = vrot.lane.b32.xlu0 %v1075, 64
        %v1143 = vpop.permute.xlu0 %1142
        %1144 = vrot.lane.b32.xlu0 %v1077, 64
        %v1145 = vpop.permute.xlu0 %1144
        %1146 = vrot.lane.b32.xlu0 %v1080, 64
        %v1147 = vpop.permute.xlu0 %1146
        %1148 = vrot.lane.b32.xlu0 %v1082, 64
        %v1149 = vpop.permute.xlu0 %1148
        %1150 = vrot.lane.b32.xlu0 %v1085, 64
        %v1151 = vpop.permute.xlu0 %1150
        %1152 = vrot.lane.b32.xlu0 %v1087, 64
        %v1153 = vpop.permute.xlu0 %1152
        %vm1187 = vcmask 1045504
        %v1188 = vrot.slane 0.0, 2
        %v1189 = vsel %vm1187, %v1188, %v1188
        %v1190 = vrot.slane %v940, 2
        %v1191 = vrot.slane %v846, 2
        %v1192 = vsel %vm1187, %v1190, %v1191
        %v1193 = vrot.slane %v956, 2
        %v1194 = vsel %vm1187, %v1191, %v1193
        %v1195 = vrot.slane %v941, 2
        %v1196 = vrot.slane %v849, 2
        %v1197 = vsel %vm1187, %v1195, %v1196
        %v1198 = vrot.slane %v957, 2
        %v1199 = vsel %vm1187, %v1196, %v1198
        %v1200 = vrot.slane %v942, 2
        %v1201 = vrot.slane %v852, 2
        %v1202 = vsel %vm1187, %v1200, %v1201
        %v1203 = vrot.slane %v958, 2
        %v1204 = vsel %vm1187, %v1201, %v1203
        %v1205 = vrot.slane %v943, 2
        %v1206 = vrot.slane %v855, 2
        %v1207 = vsel %vm1187, %v1205, %v1206
        %v1208 = vrot.slane %v959, 2
        %v1209 = vsel %vm1187, %v1206, %v1208
        %v1210 = vrot.slane %v944, 2
        %v1211 = vrot.slane %v858, 2
        %v1212 = vsel %vm1187, %v1210, %v1211
        %v1213 = vrot.slane %v960, 2
        %v1214 = vsel %vm1187, %v1211, %v1213
        %v1215 = vrot.slane %v945, 2
        %v1216 = vrot.slane %v861, 2
        %v1217 = vsel %vm1187, %v1215, %v1216
        %v1218 = vrot.slane %v961, 2
        %v1219 = vsel %vm1187, %v1216, %v1218
        %v1220 = vrot.slane %v946, 2
        %v1221 = vrot.slane %v864, 2
        %v1222 = vsel %vm1187, %v1220, %v1221
        %v1223 = vrot.slane %v962, 2
        %v1224 = vsel %vm1187, %v1221, %v1223
        %v1225 = vrot.slane %v947, 2
        %v1226 = vrot.slane %v867, 2
        %v1227 = vsel %vm1187, %v1225, %v1226
        %v1228 = vrot.slane %v963, 2
        %v1229 = vsel %vm1187, %v1226, %v1228
        %v1230 = vrot.slane %v948, 2
        %v1231 = vrot.slane %v870, 2
        %v1232 = vsel %vm1187, %v1230, %v1231
        %v1233 = vrot.slane %v964, 2
        %v1234 = vsel %vm1187, %v1231, %v1233
        %v1235 = vrot.slane %v949, 2
        %v1236 = vrot.slane %v873, 2
        %v1237 = vsel %vm1187, %v1235, %v1236
        %v1238 = vrot.slane %v965, 2
        %v1239 = vsel %vm1187, %v1236, %v1238
        %v1240 = vrot.slane %v950, 2
        %v1241 = vrot.slane %v876, 2
        %v1242 = vsel %vm1187, %v1240, %v1241
        %v1243 = vrot.slane %v966, 2
        %v1244 = vsel %vm1187, %v1241, %v1243
        %v1245 = vrot.slane %v951, 2
        %v1246 = vrot.slane %v879, 2
        %v1247 = vsel %vm1187, %v1245, %v1246
        %v1248 = vrot.slane %v967, 2
        %v1249 = vsel %vm1187, %v1246, %v1248
        %v1250 = vrot.slane %v952, 2
        %v1251 = vrot.slane %v882, 2
        %v1252 = vsel %vm1187, %v1250, %v1251
        %v1253 = vrot.slane %v968, 2
        %v1254 = vsel %vm1187, %v1251, %v1253
        %v1255 = vrot.slane %v953, 2
        %v1256 = vrot.slane %v885, 2
        %v1257 = vsel %vm1187, %v1255, %v1256
        %v1258 = vrot.slane %v969, 2
        %v1259 = vsel %vm1187, %v1256, %v1258
        %v1260 = vrot.slane %v954, 2
        %v1261 = vrot.slane %v888, 2
        %v1262 = vsel %vm1187, %v1260, %v1261
        %v1263 = vrot.slane %v970, 2
        %v1264 = vsel %vm1187, %v1261, %v1263
        %v1265 = vrot.slane %v955, 2
        %v1266 = vrot.slane %v891, 2
        %v1267 = vsel %vm1187, %v1265, %v1266
        %v1268 = vrot.slane %v971, 2
        %v1269 = vsel %vm1187, %v1266, %v1268
        %vm1303 = vcmask 523264
        %v1304 = vsel %vm1303, 0.0, %v1089
        %v1305 = vsel %vm1303, %v940, %v1091
        %v1306 = vsel %vm1303, %v846, %v1093
        %v1307 = vsel %vm1303, %v941, %v1095
        %v1308 = vsel %vm1303, %v849, %v1097
        %v1309 = vsel %vm1303, %v942, %v1099
        %v1310 = vsel %vm1303, %v852, %v1101
        %v1311 = vsel %vm1303, %v943, %v1103
        %v1312 = vsel %vm1303, %v855, %v1105
        %v1313 = vsel %vm1303, %v944, %v1107
        %v1314 = vsel %vm1303, %v858, %v1109
        %v1315 = vsel %vm1303, %v945, %v1111
        %v1316 = vsel %vm1303, %v861, %v1113
        %v1317 = vsel %vm1303, %v946, %v1115
        %v1318 = vsel %vm1303, %v864, %v1117
        %v1319 = vsel %vm1303, %v947, %v1119
        %v1320 = vsel %vm1303, %v867, %v1121
        %v1321 = vsel %vm1303, %v948, %v1123
        %v1322 = vsel %vm1303, %v870, %v1125
        %v1323 = vsel %vm1303, %v949, %v1127
        %v1324 = vsel %vm1303, %v873, %v1129
        %v1325 = vsel %vm1303, %v950, %v1131
        %v1326 = vsel %vm1303, %v876, %v1133
        %v1327 = vsel %vm1303, %v951, %v1135
        %v1328 = vsel %vm1303, %v879, %v1137
        %v1329 = vsel %vm1303, %v952, %v1139
        %v1330 = vsel %vm1303, %v882, %v1141
        %v1331 = vsel %vm1303, %v953, %v1143
        %v1332 = vsel %vm1303, %v885, %v1145
        %v1333 = vsel %vm1303, %v954, %v1147
        %v1334 = vsel %vm1303, %v888, %v1149
        %v1335 = vsel %vm1303, %v955, %v1151
        %v1336 = vsel %vm1303, %v891, %v1153
        %1369 = vrot.lane.b32.xlu0 %v1305, 64
        %v1370 = vpop.permute.xlu0 %1369
        %1371 = vrot.lane.b32.xlu0 %v1192, 64
        %v1372 = vpop.permute.xlu0 %1371
        %1373 = vrot.lane.b32.xlu0 %v1306, 64
        %v1374 = vpop.permute.xlu0 %1373
        %1375 = vrot.lane.b32.xlu0 %v1194, 64
        %v1376 = vpop.permute.xlu0 %1375
        %1377 = vrot.lane.b32.xlu0 %v1307, 64
        %v1378 = vpop.permute.xlu0 %1377
        %1379 = vrot.lane.b32.xlu0 %v1197, 64
        %v1380 = vpop.permute.xlu0 %1379
        %1381 = vrot.lane.b32.xlu0 %v1308, 64
        %v1382 = vpop.permute.xlu0 %1381
        %1383 = vrot.lane.b32.xlu0 %v1199, 64
        %v1384 = vpop.permute.xlu0 %1383
        %1385 = vrot.lane.b32.xlu0 %v1309, 64
        %v1386 = vpop.permute.xlu0 %1385
        %1387 = vrot.lane.b32.xlu0 %v1202, 64
        %v1388 = vpop.permute.xlu0 %1387
        %1389 = vrot.lane.b32.xlu0 %v1310, 64
        %v1390 = vpop.permute.xlu0 %1389
        %1391 = vrot.lane.b32.xlu0 %v1204, 64
        %v1392 = vpop.permute.xlu0 %1391
        %1393 = vrot.lane.b32.xlu0 %v1311, 64
        %v1394 = vpop.permute.xlu0 %1393
        %1395 = vrot.lane.b32.xlu0 %v1207, 64
        %v1396 = vpop.permute.xlu0 %1395
        %1397 = vrot.lane.b32.xlu0 %v1312, 64
        %v1398 = vpop.permute.xlu0 %1397
        %1399 = vrot.lane.b32.xlu0 %v1209, 64
        %v1400 = vpop.permute.xlu0 %1399
        %1401 = vrot.lane.b32.xlu0 %v1313, 64
        %v1402 = vpop.permute.xlu0 %1401
        %1403 = vrot.lane.b32.xlu0 %v1212, 64
        %v1404 = vpop.permute.xlu0 %1403
        %1405 = vrot.lane.b32.xlu0 %v1314, 64
        %v1406 = vpop.permute.xlu0 %1405
        %1407 = vrot.lane.b32.xlu0 %v1214, 64
        %v1408 = vpop.permute.xlu0 %1407
        %1409 = vrot.lane.b32.xlu0 %v1315, 64
        %v1410 = vpop.permute.xlu0 %1409
        %1411 = vrot.lane.b32.xlu0 %v1217, 64
        %v1412 = vpop.permute.xlu0 %1411
        %1413 = vrot.lane.b32.xlu0 %v1316, 64
        %v1414 = vpop.permute.xlu0 %1413
        %1415 = vrot.lane.b32.xlu0 %v1219, 64
        %v1416 = vpop.permute.xlu0 %1415
        %1417 = vrot.lane.b32.xlu0 %v1317, 64
        %v1418 = vpop.permute.xlu0 %1417
        %1419 = vrot.lane.b32.xlu0 %v1222, 64
        %v1420 = vpop.permute.xlu0 %1419
        %1421 = vrot.lane.b32.xlu0 %v1318, 64
        %v1422 = vpop.permute.xlu0 %1421
        %1423 = vrot.lane.b32.xlu0 %v1224, 64
        %v1424 = vpop.permute.xlu0 %1423
        %1425 = vrot.lane.b32.xlu0 %v1319, 64
        %v1426 = vpop.permute.xlu0 %1425
        %1427 = vrot.lane.b32.xlu0 %v1227, 64
        %v1428 = vpop.permute.xlu0 %1427
        %1429 = vrot.lane.b32.xlu0 %v1320, 64
        %v1430 = vpop.permute.xlu0 %1429
        %1431 = vrot.lane.b32.xlu0 %v1229, 64
        %v1432 = vpop.permute.xlu0 %1431
        %1433 = vrot.lane.b32.xlu0 %v1321, 64
        %v1434 = vpop.permute.xlu0 %1433
        %1435 = vrot.lane.b32.xlu0 %v1232, 64
        %v1436 = vpop.permute.xlu0 %1435
        %1437 = vrot.lane.b32.xlu0 %v1322, 64
        %v1438 = vpop.permute.xlu0 %1437
        %1439 = vrot.lane.b32.xlu0 %v1234, 64
        %v1440 = vpop.permute.xlu0 %1439
        %1441 = vrot.lane.b32.xlu0 %v1323, 64
        %v1442 = vpop.permute.xlu0 %1441
        %1443 = vrot.lane.b32.xlu0 %v1237, 64
        %v1444 = vpop.permute.xlu0 %1443
        %1445 = vrot.lane.b32.xlu0 %v1324, 64
        %v1446 = vpop.permute.xlu0 %1445
        %1447 = vrot.lane.b32.xlu0 %v1239, 64
        %v1448 = vpop.permute.xlu0 %1447
        %1449 = vrot.lane.b32.xlu0 %v1325, 64
        %v1450 = vpop.permute.xlu0 %1449
        %1451 = vrot.lane.b32.xlu0 %v1242, 64
        %v1452 = vpop.permute.xlu0 %1451
        %1453 = vrot.lane.b32.xlu0 %v1326, 64
        %v1454 = vpop.permute.xlu0 %1453
        %1455 = vrot.lane.b32.xlu0 %v1244, 64
        %v1456 = vpop.permute.xlu0 %1455
        %1457 = vrot.lane.b32.xlu0 %v1327, 64
        %v1458 = vpop.permute.xlu0 %1457
        %1459 = vrot.lane.b32.xlu0 %v1247, 64
        %v1460 = vpop.permute.xlu0 %1459
        %1461 = vrot.lane.b32.xlu0 %v1328, 64
        %v1462 = vpop.permute.xlu0 %1461
        %1463 = vrot.lane.b32.xlu0 %v1249, 64
        %v1464 = vpop.permute.xlu0 %1463
        %1465 = vrot.lane.b32.xlu0 %v1329, 64
        %v1466 = vpop.permute.xlu0 %1465
        %1467 = vrot.lane.b32.xlu0 %v1252, 64
        %v1468 = vpop.permute.xlu0 %1467
        %1469 = vrot.lane.b32.xlu0 %v1330, 64
        %v1470 = vpop.permute.xlu0 %1469
        %1471 = vrot.lane.b32.xlu0 %v1254, 64
        %v1472 = vpop.permute.xlu0 %1471
        %1473 = vrot.lane.b32.xlu0 %v1331, 64
        %v1474 = vpop.permute.xlu0 %1473
        %1475 = vrot.lane.b32.xlu0 %v1257, 64
        %v1476 = vpop.permute.xlu0 %1475
        %1477 = vrot.lane.b32.xlu0 %v1332, 64
        %v1478 = vpop.permute.xlu0 %1477
        %1479 = vrot.lane.b32.xlu0 %v1259, 64
        %v1480 = vpop.permute.xlu0 %1479
        %1481 = vrot.lane.b32.xlu0 %v1333, 64
        %v1482 = vpop.permute.xlu0 %1481
        %1483 = vrot.lane.b32.xlu0 %v1262, 64
        %v1484 = vpop.permute.xlu0 %1483
        %1485 = vrot.lane.b32.xlu0 %v1334, 64
        %v1486 = vpop.permute.xlu0 %1485
        %1487 = vrot.lane.b32.xlu0 %v1264, 64
        %v1488 = vpop.permute.xlu0 %1487
        %1489 = vrot.lane.b32.xlu0 %v1335, 64
        %v1490 = vpop.permute.xlu0 %1489
        %1491 = vrot.lane.b32.xlu0 %v1267, 64
        %v1492 = vpop.permute.xlu0 %1491
        %1493 = vrot.lane.b32.xlu0 %v1336, 64
        %v1494 = vpop.permute.xlu0 %1493
        %1495 = vrot.lane.b32.xlu0 %v1269, 64
        %v1496 = vpop.permute.xlu0 %1495
        %v1497 = vsel %vm1303, %v1370, %v1372
        %v1498 = vsel %vm1303, %v1374, %v1376
        %v1499 = vsel %vm1303, %v1378, %v1380
        %v1500 = vsel %vm1303, %v1382, %v1384
        %v1501 = vsel %vm1303, %v1386, %v1388
        %v1502 = vsel %vm1303, %v1390, %v1392
        %v1503 = vsel %vm1303, %v1394, %v1396
        %v1504 = vsel %vm1303, %v1398, %v1400
        %v1505 = vsel %vm1303, %v1402, %v1404
        %v1506 = vsel %vm1303, %v1406, %v1408
        %v1507 = vsel %vm1303, %v1410, %v1412
        %v1508 = vsel %vm1303, %v1414, %v1416
        %v1509 = vsel %vm1303, %v1418, %v1420
        %v1510 = vsel %vm1303, %v1422, %v1424
        %v1511 = vsel %vm1303, %v1426, %v1428
        %v1512 = vsel %vm1303, %v1430, %v1432
        %v1513 = vsel %vm1303, %v1434, %v1436
        %v1514 = vsel %vm1303, %v1438, %v1440
        %v1515 = vsel %vm1303, %v1442, %v1444
        %v1516 = vsel %vm1303, %v1446, %v1448
        %v1517 = vsel %vm1303, %v1450, %v1452
        %v1518 = vsel %vm1303, %v1454, %v1456
        %v1519 = vsel %vm1303, %v1458, %v1460
        %v1520 = vsel %vm1303, %v1462, %v1464
        %v1521 = vsel %vm1303, %v1466, %v1468
        %v1522 = vsel %vm1303, %v1470, %v1472
        %v1523 = vsel %vm1303, %v1474, %v1476
        %v1524 = vsel %vm1303, %v1478, %v1480
        %v1525 = vsel %vm1303, %v1482, %v1484
        %v1526 = vsel %vm1303, %v1486, %v1488
        %v1527 = vsel %vm1303, %v1490, %v1492
        %v1528 = vsel %vm1303, %v1494, %v1496
        %v1593 = vsel %vm1303, %v1189, %v1370
        %v1594 = vsel %vm1303, %v1189, %v1374
        %v1595 = vsel %vm1303, %v1192, %v1378
        %v1596 = vsel %vm1303, %v1194, %v1382
        %v1597 = vsel %vm1303, %v1197, %v1386
        %v1598 = vsel %vm1303, %v1199, %v1390
        %v1599 = vsel %vm1303, %v1202, %v1394
        %v1600 = vsel %vm1303, %v1204, %v1398
        %v1601 = vsel %vm1303, %v1207, %v1402
        %v1602 = vsel %vm1303, %v1209, %v1406
        %v1603 = vsel %vm1303, %v1212, %v1410
        %v1604 = vsel %vm1303, %v1214, %v1414
        %v1605 = vsel %vm1303, %v1217, %v1418
        %v1606 = vsel %vm1303, %v1219, %v1422
        %v1607 = vsel %vm1303, %v1222, %v1426
        %v1608 = vsel %vm1303, %v1224, %v1430
        %v1609 = vsel %vm1303, %v1227, %v1434
        %v1610 = vsel %vm1303, %v1229, %v1438
        %v1611 = vsel %vm1303, %v1232, %v1442
        %v1612 = vsel %vm1303, %v1234, %v1446
        %v1613 = vsel %vm1303, %v1237, %v1450
        %v1614 = vsel %vm1303, %v1239, %v1454
        %v1615 = vsel %vm1303, %v1242, %v1458
        %v1616 = vsel %vm1303, %v1244, %v1462
        %v1617 = vsel %vm1303, %v1247, %v1466
        %v1618 = vsel %vm1303, %v1249, %v1470
        %v1619 = vsel %vm1303, %v1252, %v1474
        %v1620 = vsel %vm1303, %v1254, %v1478
        %v1621 = vsel %vm1303, %v1257, %v1482
        %v1622 = vsel %vm1303, %v1259, %v1486
        %v1623 = vsel %vm1303, %v1262, %v1490
        %v1624 = vsel %vm1303, %v1264, %v1494
        %v1625 = vpack.c.bf16 %v1304, %v1304
        %v1626 = vpack.c.bf16 %v1594, %v1593
        %v1627 = vpack.c.bf16 %v1498, %v1497
        %v1628 = vpack.c.bf16 %v1308, %v1307
        %v1629 = vpack.c.bf16 %v1199, %v1197
        %v1630 = vpack.c.bf16 %v1306, %v1305
        %v1631 = vpack.c.bf16 %v1596, %v1595
        %v1632 = vpack.c.bf16 %v1500, %v1499
        %v1633 = vpack.c.bf16 %v1310, %v1309
        %v1634 = vpack.c.bf16 %v1204, %v1202
        %v1635 = vpack.c.bf16 %v1598, %v1597
        %v1636 = vpack.c.bf16 %v1502, %v1501
        %v1637 = vpack.c.bf16 %v1312, %v1311
        %v1638 = vpack.c.bf16 %v1209, %v1207
        %v1639 = vpack.c.bf16 %v1600, %v1599
        %v1640 = vpack.c.bf16 %v1504, %v1503
        %v1641 = vpack.c.bf16 %v1314, %v1313
        %v1642 = vpack.c.bf16 %v1214, %v1212
        %v1643 = vpack.c.bf16 %v1602, %v1601
        %v1644 = vpack.c.bf16 %v1506, %v1505
        %v1645 = vpack.c.bf16 %v1316, %v1315
        %v1646 = vpack.c.bf16 %v1219, %v1217
        %v1647 = vpack.c.bf16 %v1604, %v1603
        %v1648 = vpack.c.bf16 %v1508, %v1507
        %v1649 = vpack.c.bf16 %v1318, %v1317
        %v1650 = vpack.c.bf16 %v1224, %v1222
        %v1651 = vpack.c.bf16 %v1606, %v1605
        %v1652 = vpack.c.bf16 %v1510, %v1509
        %v1653 = vpack.c.bf16 %v1320, %v1319
        %v1654 = vpack.c.bf16 %v1229, %v1227
        %v1655 = vpack.c.bf16 %v1608, %v1607
        %v1656 = vpack.c.bf16 %v1512, %v1511
        %v1657 = vpack.c.bf16 %v1322, %v1321
        %v1658 = vpack.c.bf16 %v1234, %v1232
        %v1659 = vpack.c.bf16 %v1610, %v1609
        %v1660 = vpack.c.bf16 %v1514, %v1513
        %v1661 = vpack.c.bf16 %v1324, %v1323
        %v1662 = vpack.c.bf16 %v1239, %v1237
        %v1663 = vpack.c.bf16 %v1612, %v1611
        %v1664 = vpack.c.bf16 %v1516, %v1515
        %v1665 = vpack.c.bf16 %v1326, %v1325
        %v1666 = vpack.c.bf16 %v1244, %v1242
        %v1667 = vpack.c.bf16 %v1614, %v1613
        %v1668 = vpack.c.bf16 %v1518, %v1517
        %v1669 = vpack.c.bf16 %v1328, %v1327
        %v1670 = vpack.c.bf16 %v1249, %v1247
        %v1671 = vpack.c.bf16 %v1616, %v1615
        %v1672 = vpack.c.bf16 %v1520, %v1519
        %v1673 = vpack.c.bf16 %v1330, %v1329
        %v1674 = vpack.c.bf16 %v1254, %v1252
        %v1675 = vpack.c.bf16 %v1618, %v1617
        %v1676 = vpack.c.bf16 %v1522, %v1521
        %v1677 = vpack.c.bf16 %v1332, %v1331
        %v1678 = vpack.c.bf16 %v1259, %v1257
        %v1679 = vpack.c.bf16 %v1620, %v1619
        %v1680 = vpack.c.bf16 %v1524, %v1523
        %v1681 = vpack.c.bf16 %v1334, %v1333
        %v1682 = vpack.c.bf16 %v1264, %v1262
        %v1683 = vpack.c.bf16 %v1622, %v1621
        %v1684 = vpack.c.bf16 %v1526, %v1525
        %v1685 = vpack.c.bf16 %v1336, %v1335
        %v1686 = vpack.c.bf16 %v1269, %v1267
        %v1687 = vpack.c.bf16 %v1624, %v1623
        %v1688 = vpack.c.bf16 %v1528, %v1527
        %v1689 = vpack.c.bf16 %v1189, %v1189
        %v1690 = vld [vmem:[#allocation5] sm:$0xf]
        %v1691 = vld [vmem:[#allocation5 + $0x4] sm:$0xf]
        %v1692 = vld [vmem:[#allocation5 + $0x8] sm:$0xf]
        %v1693 = vld [vmem:[#allocation5 + $0xc] sm:$0xf]
        %v1694 = vld [vmem:[#allocation5 + $0x10] sm:$0xf]
        %v1695 = vld [vmem:[#allocation5 + $0x14] sm:$0xf]
        %v1696 = vld [vmem:[#allocation5 + $0x18] sm:$0xf]
        %v1697 = vld [vmem:[#allocation5 + $0x1c] sm:$0xf]
        %v1698 = vld [vmem:[#allocation5 + $0x20] sm:$0xf]
        %v1699 = vld [vmem:[#allocation5 + $0x24] sm:$0xf]
        %v1700 = vld [vmem:[#allocation5 + $0x28] sm:$0xf]
        %v1701 = vld [vmem:[#allocation5 + $0x2c] sm:$0xf]
        %v1702 = vld [vmem:[#allocation5 + $0x30] sm:$0xf]
        %v1703 = vld [vmem:[#allocation5 + $0x34] sm:$0xf]
        %v1704 = vld [vmem:[#allocation5 + $0x38] sm:$0xf]
        %v1705 = vld [vmem:[#allocation5 + $0x3c] sm:$0xf]
        %v1706 = vld [vmem:[#allocation5 + $0x40] sm:$0xf]
        %v1707 = vld [vmem:[#allocation5 + $0x44] sm:$0xf]
        %v1708 = vld [vmem:[#allocation5 + $0x48] sm:$0xf]
        %v1709 = vld [vmem:[#allocation5 + $0x4c] sm:$0xf]
        %v1710 = vld [vmem:[#allocation5 + $0x50] sm:$0xf]
        %v1711 = vld [vmem:[#allocation5 + $0x54] sm:$0xf]
        %v1712 = vld [vmem:[#allocation5 + $0x58] sm:$0xf]
        %v1713 = vld [vmem:[#allocation5 + $0x5c] sm:$0xf]
        %v1714 = vld [vmem:[#allocation5 + $0x60] sm:$0xf]
        %v1715 = vld [vmem:[#allocation5 + $0x64] sm:$0xf]
        %v1716 = vld [vmem:[#allocation5 + $0x68] sm:$0xf]
        %v1717 = vld [vmem:[#allocation5 + $0x6c] sm:$0xf]
        %v1718 = vld [vmem:[#allocation5 + $0x70] sm:$0xf]
        %v1719 = vld [vmem:[#allocation5 + $0x74] sm:$0xf]
        %v1720 = vld [vmem:[#allocation5 + $0x78] sm:$0xf]
        %v1721 = vld [vmem:[#allocation5 + $0x7c] sm:$0xf]
        %v1722 = vld [vmem:[#allocation5 + $0x80] sm:$0xf]
        %v1723 = vld [vmem:[#allocation5 + $0x84] sm:$0xf]
        %v1724 = vld [vmem:[#allocation5 + $0x88] sm:$0xf]
        %v1725 = vld [vmem:[#allocation5 + $0x8c] sm:$0xf]
        %v1726 = vld [vmem:[#allocation5 + $0x90] sm:$0xf]
        %v1727 = vld [vmem:[#allocation5 + $0x94] sm:$0xf]
        %v1728 = vld [vmem:[#allocation5 + $0x98] sm:$0xf]
        %v1729 = vld [vmem:[#allocation5 + $0x9c] sm:$0xf]
        %v1730 = vld [vmem:[#allocation5 + $0xa0] sm:$0xf]
        %v1731 = vld [vmem:[#allocation5 + $0xa4] sm:$0xf]
        %v1732 = vld [vmem:[#allocation5 + $0xa8] sm:$0xf]
        %v1733 = vld [vmem:[#allocation5 + $0xac] sm:$0xf]
        %v1734 = vld [vmem:[#allocation5 + $0xb0] sm:$0xf]
        %v1735 = vld [vmem:[#allocation5 + $0xb4] sm:$0xf]
        %v1736 = vld [vmem:[#allocation5 + $0xb8] sm:$0xf]
        %v1737 = vld [vmem:[#allocation5 + $0xbc] sm:$0xf]
        %v1738 = vld [vmem:[#allocation5 + $0xc0] sm:$0xf]
        %v1739 = vld [vmem:[#allocation5 + $0xc4] sm:$0xf]
        %v1740 = vld [vmem:[#allocation5 + $0xc8] sm:$0xf]
        %v1741 = vld [vmem:[#allocation5 + $0xcc] sm:$0xf]
        %v1742 = vld [vmem:[#allocation5 + $0xd0] sm:$0xf]
        %v1743 = vld [vmem:[#allocation5 + $0xd4] sm:$0xf]
        %v1744 = vld [vmem:[#allocation5 + $0xd8] sm:$0xf]
        %v1745 = vld [vmem:[#allocation5 + $0xdc] sm:$0xf]
        %v1746 = vld [vmem:[#allocation5 + $0xe0] sm:$0xf]
        %v1747 = vld [vmem:[#allocation5 + $0xe4] sm:$0xf]
        %v1748 = vld [vmem:[#allocation5 + $0xe8] sm:$0xf]
        %v1749 = vld [vmem:[#allocation5 + $0xec] sm:$0xf]
        %v1750 = vld [vmem:[#allocation5 + $0xf0] sm:$0xf]
        %v1751 = vld [vmem:[#allocation5 + $0xf4] sm:$0xf]
        %v1752 = vld [vmem:[#allocation5 + $0xf8] sm:$0xf]
        %v1753 = vld [vmem:[#allocation5 + $0xfc] sm:$0xf]
        %v1754 = vld [vmem:[#allocation5 + $0x100] sm:$0xf]
        %v1755 = vld [vmem:[#allocation5 + $0x104] sm:$0xf]
        %v1756 = vld [vmem:[#allocation5 + $0x108] sm:$0xf]
        %v1757 = vld [vmem:[#allocation5 + $0x10c] sm:$0xf]
        %v1758 = vld [vmem:[#allocation5 + $0x110] sm:$0xf]
        %v1759 = vld [vmem:[#allocation5 + $0x114] sm:$0xf]
        %v1760 = vld [vmem:[#allocation5 + $0x118] sm:$0xf]
        %v1761 = vld [vmem:[#allocation5 + $0x11c] sm:$0xf]
        %v1834 = vunpack.c.l.b16 %v1690
        %v1835 = vunpack.c.l.b16 %v1691
        %v1836 = vunpack.c.l.b16 %v1692
        %v1837 = vunpack.c.l.b16 %v1693
        %v1838 = vunpack.c.l.b16 %v1694
        %v1839 = vunpack.c.l.b16 %v1695
        %v1840 = vunpack.c.l.b16 %v1696
        %v1841 = vunpack.c.l.b16 %v1697
        %v1842 = vunpack.c.l.b16 %v1698
        %v1843 = vunpack.c.l.b16 %v1699
        %v1844 = vunpack.c.l.b16 %v1700
        %v1845 = vunpack.c.l.b16 %v1701
        %v1846 = vunpack.c.l.b16 %v1702
        %v1847 = vunpack.c.l.b16 %v1703
        %v1848 = vunpack.c.l.b16 %v1704
        %v1849 = vunpack.c.l.b16 %v1705
        %v1850 = vunpack.c.l.b16 %v1706
        %v1851 = vunpack.c.l.b16 %v1707
        %v1852 = vunpack.c.l.b16 %v1708
        %v1853 = vunpack.c.l.b16 %v1709
        %v1854 = vunpack.c.l.b16 %v1710
        %v1855 = vunpack.c.l.b16 %v1711
        %v1856 = vunpack.c.l.b16 %v1712
        %v1857 = vunpack.c.l.b16 %v1713
        %v1858 = vunpack.c.l.b16 %v1714
        %v1859 = vunpack.c.l.b16 %v1715
        %v1860 = vunpack.c.l.b16 %v1716
        %v1861 = vunpack.c.l.b16 %v1717
        %v1862 = vunpack.c.l.b16 %v1718
        %v1863 = vunpack.c.l.b16 %v1719
        %v1864 = vunpack.c.l.b16 %v1720
        %v1865 = vunpack.c.l.b16 %v1721
        %v1866 = vunpack.c.l.b16 %v1722
        %v1867 = vunpack.c.l.b16 %v1723
        %v1868 = vunpack.c.l.b16 %v1724
        %v1869 = vunpack.c.l.b16 %v1725
        %v1870 = vunpack.c.l.b16 %v1726
        %v1871 = vunpack.c.l.b16 %v1727
        %v1872 = vunpack.c.l.b16 %v1728
        %v1873 = vunpack.c.l.b16 %v1729
        %v1874 = vunpack.c.l.b16 %v1730
        %v1875 = vunpack.c.l.b16 %v1731
        %v1876 = vunpack.c.l.b16 %v1732
        %v1877 = vunpack.c.l.b16 %v1733
        %v1878 = vunpack.c.l.b16 %v1734
        %v1879 = vunpack.c.l.b16 %v1735
        %v1880 = vunpack.c.l.b16 %v1736
        %v1881 = vunpack.c.l.b16 %v1737
        %v1882 = vunpack.c.l.b16 %v1738
        %v1883 = vunpack.c.l.b16 %v1739
        %v1884 = vunpack.c.l.b16 %v1740
        %v1885 = vunpack.c.l.b16 %v1741
        %v1886 = vunpack.c.l.b16 %v1742
        %v1887 = vunpack.c.l.b16 %v1743
        %v1888 = vunpack.c.l.b16 %v1744
        %v1889 = vunpack.c.l.b16 %v1745
        %v1890 = vunpack.c.l.b16 %v1746
        %v1891 = vunpack.c.l.b16 %v1747
        %v1892 = vunpack.c.l.b16 %v1748
        %v1893 = vunpack.c.l.b16 %v1749
        %v1894 = vunpack.c.l.b16 %v1750
        %v1895 = vunpack.c.l.b16 %v1751
        %v1896 = vunpack.c.l.b16 %v1752
        %v1897 = vunpack.c.l.b16 %v1753
        %v1898 = vunpack.c.l.b16 %v1754
        %v1899 = vunpack.c.l.b16 %v1755
        %v1900 = vunpack.c.l.b16 %v1756
        %v1901 = vunpack.c.l.b16 %v1757
        %v1902 = vunpack.c.l.b16 %v1758
        %v1903 = vunpack.c.l.b16 %v1759
        %v1904 = vunpack.c.l.b16 %v1760
        %v1905 = vunpack.c.l.b16 %v1761
        %v1906 = vpack.c.b16 %v1835, %v1834
        %v1907 = vpack.c.b16 %v1837, %v1836
        %v1908 = vpack.c.b16 %v1839, %v1838
        %v1909 = vpack.c.b16 %v1841, %v1840
        %v1910 = vpack.c.b16 %v1843, %v1842
        %v1911 = vpack.c.b16 %v1845, %v1844
        %v1912 = vpack.c.b16 %v1847, %v1846
        %v1913 = vpack.c.b16 %v1849, %v1848
        %v1914 = vpack.c.b16 %v1851, %v1850
        %v1915 = vpack.c.b16 %v1853, %v1852
        %v1916 = vpack.c.b16 %v1855, %v1854
        %v1917 = vpack.c.b16 %v1857, %v1856
        %v1918 = vpack.c.b16 %v1859, %v1858
        %v1919 = vpack.c.b16 %v1861, %v1860
        %v1920 = vpack.c.b16 %v1863, %v1862
        %v1921 = vpack.c.b16 %v1865, %v1864
        %v1922 = vpack.c.b16 %v1867, %v1866
        %v1923 = vpack.c.b16 %v1869, %v1868
        %v1924 = vpack.c.b16 %v1871, %v1870
        %v1925 = vpack.c.b16 %v1873, %v1872
        %v1926 = vpack.c.b16 %v1875, %v1874
        %v1927 = vpack.c.b16 %v1877, %v1876
        %v1928 = vpack.c.b16 %v1879, %v1878
        %v1929 = vpack.c.b16 %v1881, %v1880
        %v1930 = vpack.c.b16 %v1883, %v1882
        %v1931 = vpack.c.b16 %v1885, %v1884
        %v1932 = vpack.c.b16 %v1887, %v1886
        %v1933 = vpack.c.b16 %v1889, %v1888
        %v1934 = vpack.c.b16 %v1891, %v1890
        %v1935 = vpack.c.b16 %v1893, %v1892
        %v1936 = vpack.c.b16 %v1895, %v1894
        %v1937 = vpack.c.b16 %v1897, %v1896
        %v1938 = vpack.c.b16 %v1899, %v1898
        %v1939 = vpack.c.b16 %v1901, %v1900
        %v1940 = vpack.c.b16 %v1903, %v1902
        %v1941 = vpack.c.b16 %v1905, %v1904
        %v1979 = vsel %vm1303, %v1629, 0
        %v1982 = vsel %vm1303, %v1634, 0
        %v1985 = vsel %vm1303, %v1638, 0
        %v1988 = vsel %vm1303, %v1642, 0
        %v1991 = vsel %vm1303, %v1646, 0
        %v1994 = vsel %vm1303, %v1650, 0
        %v1997 = vsel %vm1303, %v1654, 0
        %v2000 = vsel %vm1303, %v1658, 0
        %v2003 = vsel %vm1303, %v1662, 0
        %v2006 = vsel %vm1303, %v1666, 0
        %v2009 = vsel %vm1303, %v1670, 0
        %v2012 = vsel %vm1303, %v1674, 0
        %v2015 = vsel %vm1303, %v1678, 0
        %v2018 = vsel %vm1303, %v1682, 0
        %v2021 = vsel %vm1303, %v1686, 0
        %v2024 = vsel %vm1303, %v1689, 0
        %2026 = vmatpush.bf16.msra.mxu0 %v1913
        %2027 = vmatpush.bf16.msra.mxu0 %v1912
        %2028 = vmatpush.bf16.msra.mxu0 %v1911
        %2029 = vmatpush.bf16.msra.mxu0 %v1910
        %2030 = vmatpush.bf16.msra.mxu0 %v1909
        %2031 = vmatpush.bf16.msra.mxu0 %v1908
        %2032 = vmatpush.bf16.msra.mxu0 %v1907
        %2033 = vmatpush.bf16.msra.mxu0 %v1906
        %2034 = vmatmul.bf16.gmra.mxu0 %v1625
        %v2035 = vpop.f32.mrf.mxu0
        %v2036 = vadd.f32 0.0, %v2035
        %v2037 = vpop.f32.mrf.mxu0
        %v2038 = vadd.f32 0.0, %v2037
        %2039 = vmatmul.bf16.gmra.mxu0 %v1630
        %v2040 = vpop.f32.mrf.mxu0
        %v2041 = vadd.f32 0.0, %v2040
        %v2042 = vpop.f32.mrf.mxu0
        %v2043 = vadd.f32 0.0, %v2042
        %2044 = vmatmul.bf16.gmra.mxu0 %v1628
        %v2045 = vpop.f32.mrf.mxu0
        %v2046 = vadd.f32 0.0, %v2045
        %v2047 = vpop.f32.mrf.mxu0
        %v2048 = vadd.f32 0.0, %v2047
        %2049 = vmatmul.bf16.gmra.mxu0 %v1633
        %v2050 = vpop.f32.mrf.mxu0
        %v2051 = vadd.f32 0.0, %v2050
        %v2052 = vpop.f32.mrf.mxu0
        %v2053 = vadd.f32 0.0, %v2052
        %2054 = vmatmul.bf16.gmra.mxu0 %v1637
        %v2055 = vpop.f32.mrf.mxu0
        %v2056 = vadd.f32 0.0, %v2055
        %v2057 = vpop.f32.mrf.mxu0
        %v2058 = vadd.f32 0.0, %v2057
        %2059 = vmatmul.bf16.gmra.mxu0 %v1641
        %v2060 = vpop.f32.mrf.mxu0
        %v2061 = vadd.f32 0.0, %v2060
        %v2062 = vpop.f32.mrf.mxu0
        %v2063 = vadd.f32 0.0, %v2062
        %2064 = vmatmul.bf16.gmra.mxu0 %v1645
        %v2065 = vpop.f32.mrf.mxu0
        %v2066 = vadd.f32 0.0, %v2065
        %v2067 = vpop.f32.mrf.mxu0
        %v2068 = vadd.f32 0.0, %v2067
        %2069 = vmatmul.bf16.gmra.mxu0 %v1649
        %v2070 = vpop.f32.mrf.mxu0
        %v2071 = vadd.f32 0.0, %v2070
        %v2072 = vpop.f32.mrf.mxu0
        %v2073 = vadd.f32 0.0, %v2072
        %2074 = vmatmul.bf16.gmra.mxu0 %v1653
        %v2075 = vpop.f32.mrf.mxu0
        %v2076 = vadd.f32 0.0, %v2075
        %v2077 = vpop.f32.mrf.mxu0
        %v2078 = vadd.f32 0.0, %v2077
        %2079 = vmatmul.bf16.gmra.mxu0 %v1657
        %v2080 = vpop.f32.mrf.mxu0
        %v2081 = vadd.f32 0.0, %v2080
        %v2082 = vpop.f32.mrf.mxu0
        %v2083 = vadd.f32 0.0, %v2082
        %2084 = vmatmul.bf16.gmra.mxu0 %v1661
        %v2085 = vpop.f32.mrf.mxu0
        %v2086 = vadd.f32 0.0, %v2085
        %v2087 = vpop.f32.mrf.mxu0
        %v2088 = vadd.f32 0.0, %v2087
        %2089 = vmatmul.bf16.gmra.mxu0 %v1665
        %v2090 = vpop.f32.mrf.mxu0
        %v2091 = vadd.f32 0.0, %v2090
        %v2092 = vpop.f32.mrf.mxu0
        %v2093 = vadd.f32 0.0, %v2092
        %2094 = vmatmul.bf16.gmra.mxu0 %v1669
        %v2095 = vpop.f32.mrf.mxu0
        %v2096 = vadd.f32 0.0, %v2095
        %v2097 = vpop.f32.mrf.mxu0
        %v2098 = vadd.f32 0.0, %v2097
        %2099 = vmatmul.bf16.gmra.mxu0 %v1673
        %v2100 = vpop.f32.mrf.mxu0
        %v2101 = vadd.f32 0.0, %v2100
        %v2102 = vpop.f32.mrf.mxu0
        %v2103 = vadd.f32 0.0, %v2102
        %2104 = vmatmul.bf16.gmra.mxu0 %v1677
        %v2105 = vpop.f32.mrf.mxu0
        %v2106 = vadd.f32 0.0, %v2105
        %v2107 = vpop.f32.mrf.mxu0
        %v2108 = vadd.f32 0.0, %v2107
        %2109 = vmatmul.bf16.gmra.mxu0 %v1681
        %v2110 = vpop.f32.mrf.mxu0
        %v2111 = vadd.f32 0.0, %v2110
        %v2112 = vpop.f32.mrf.mxu0
        %v2113 = vadd.f32 0.0, %v2112
        %2114 = vdwg.mxu0
        %2115 = vmatpush.bf16.msra.mxu0 %v1921
        %2116 = vmatpush.bf16.msra.mxu0 %v1920
        %2117 = vmatpush.bf16.msra.mxu0 %v1919
        %2118 = vmatpush.bf16.msra.mxu0 %v1918
        %2119 = vmatpush.bf16.msra.mxu0 %v1917
        %2120 = vmatpush.bf16.msra.mxu0 %v1916
        %2121 = vmatpush.bf16.msra.mxu0 %v1915
        %2122 = vmatpush.bf16.msra.mxu0 %v1914
        %2123 = vmatmul.bf16.gmra.mxu0 %v1626
        %v2124 = vpop.f32.mrf.mxu0
        %v2125 = vadd.f32 %v2036, %v2124
        %v2126 = vpop.f32.mrf.mxu0
        %v2127 = vadd.f32 %v2038, %v2126
        %2128 = vmatmul.bf16.gmra.mxu0 %v1631
        %v2129 = vpop.f32.mrf.mxu0
        %v2130 = vadd.f32 %v2041, %v2129
        %v2131 = vpop.f32.mrf.mxu0
        %v2132 = vadd.f32 %v2043, %v2131
        %2133 = vmatmul.bf16.gmra.mxu0 %v1635
        %v2134 = vpop.f32.mrf.mxu0
        %v2135 = vadd.f32 %v2046, %v2134
        %v2136 = vpop.f32.mrf.mxu0
        %v2137 = vadd.f32 %v2048, %v2136
        %2138 = vmatmul.bf16.gmra.mxu0 %v1639
        %v2139 = vpop.f32.mrf.mxu0
        %v2140 = vadd.f32 %v2051, %v2139
        %v2141 = vpop.f32.mrf.mxu0
        %v2142 = vadd.f32 %v2053, %v2141
        %2143 = vmatmul.bf16.gmra.mxu0 %v1643
        %v2144 = vpop.f32.mrf.mxu0
        %v2145 = vadd.f32 %v2056, %v2144
        %v2146 = vpop.f32.mrf.mxu0
        %v2147 = vadd.f32 %v2058, %v2146
        %2148 = vmatmul.bf16.gmra.mxu0 %v1647
        %v2149 = vpop.f32.mrf.mxu0
        %v2150 = vadd.f32 %v2061, %v2149
        %v2151 = vpop.f32.mrf.mxu0
        %v2152 = vadd.f32 %v2063, %v2151
        %2153 = vmatmul.bf16.gmra.mxu0 %v1651
        %v2154 = vpop.f32.mrf.mxu0
        %v2155 = vadd.f32 %v2066, %v2154
        %v2156 = vpop.f32.mrf.mxu0
        %v2157 = vadd.f32 %v2068, %v2156
        %2158 = vmatmul.bf16.gmra.mxu0 %v1655
        %v2159 = vpop.f32.mrf.mxu0
        %v2160 = vadd.f32 %v2071, %v2159
        %v2161 = vpop.f32.mrf.mxu0
        %v2162 = vadd.f32 %v2073, %v2161
        %2163 = vmatmul.bf16.gmra.mxu0 %v1659
        %v2164 = vpop.f32.mrf.mxu0
        %v2165 = vadd.f32 %v2076, %v2164
        %v2166 = vpop.f32.mrf.mxu0
        %v2167 = vadd.f32 %v2078, %v2166
        %2168 = vmatmul.bf16.gmra.mxu0 %v1663
        %v2169 = vpop.f32.mrf.mxu0
        %v2170 = vadd.f32 %v2081, %v2169
        %v2171 = vpop.f32.mrf.mxu0
        %v2172 = vadd.f32 %v2083, %v2171
        %2173 = vmatmul.bf16.gmra.mxu0 %v1667
        %v2174 = vpop.f32.mrf.mxu0
        %v2175 = vadd.f32 %v2086, %v2174
        %v2176 = vpop.f32.mrf.mxu0
        %v2177 = vadd.f32 %v2088, %v2176
        %2178 = vmatmul.bf16.gmra.mxu0 %v1671
        %v2179 = vpop.f32.mrf.mxu0
        %v2180 = vadd.f32 %v2091, %v2179
        %v2181 = vpop.f32.mrf.mxu0
        %v2182 = vadd.f32 %v2093, %v2181
        %2183 = vmatmul.bf16.gmra.mxu0 %v1675
        %v2184 = vpop.f32.mrf.mxu0
        %v2185 = vadd.f32 %v2096, %v2184
        %v2186 = vpop.f32.mrf.mxu0
        %v2187 = vadd.f32 %v2098, %v2186
        %2188 = vmatmul.bf16.gmra.mxu0 %v1679
        %v2189 = vpop.f32.mrf.mxu0
        %v2190 = vadd.f32 %v2101, %v2189
        %v2191 = vpop.f32.mrf.mxu0
        %v2192 = vadd.f32 %v2103, %v2191
        %2193 = vmatmul.bf16.gmra.mxu0 %v1683
        %v2194 = vpop.f32.mrf.mxu0
        %v2195 = vadd.f32 %v2106, %v2194
        %v2196 = vpop.f32.mrf.mxu0
        %v2197 = vadd.f32 %v2108, %v2196
        %2198 = vmatmul.bf16.gmra.mxu0 %v1687
        %v2199 = vpop.f32.mrf.mxu0
        %v2200 = vadd.f32 %v2111, %v2199
        %v2201 = vpop.f32.mrf.mxu0
        %v2202 = vadd.f32 %v2113, %v2201
        %2203 = vdwg.mxu0
        %2204 = vmatpush.bf16.msra.mxu0 %v1929
        %2205 = vmatpush.bf16.msra.mxu0 %v1928
        %2206 = vmatpush.bf16.msra.mxu0 %v1927
        %2207 = vmatpush.bf16.msra.mxu0 %v1926
        %2208 = vmatpush.bf16.msra.mxu0 %v1925
        %2209 = vmatpush.bf16.msra.mxu0 %v1924
        %2210 = vmatpush.bf16.msra.mxu0 %v1923
        %2211 = vmatpush.bf16.msra.mxu0 %v1922
        %2212 = vmatmul.bf16.gmra.mxu0 %v1627
        %v2213 = vpop.f32.mrf.mxu0
        %v2214 = vadd.f32 %v2125, %v2213
        %v2215 = vpop.f32.mrf.mxu0
        %v2216 = vadd.f32 %v2127, %v2215
        %2217 = vmatmul.bf16.gmra.mxu0 %v1632
        %v2218 = vpop.f32.mrf.mxu0
        %v2219 = vadd.f32 %v2130, %v2218
        %v2220 = vpop.f32.mrf.mxu0
        %v2221 = vadd.f32 %v2132, %v2220
        %2222 = vmatmul.bf16.gmra.mxu0 %v1636
        %v2223 = vpop.f32.mrf.mxu0
        %v2224 = vadd.f32 %v2135, %v2223
        %v2225 = vpop.f32.mrf.mxu0
        %v2226 = vadd.f32 %v2137, %v2225
        %2227 = vmatmul.bf16.gmra.mxu0 %v1640
        %v2228 = vpop.f32.mrf.mxu0
        %v2229 = vadd.f32 %v2140, %v2228
        %v2230 = vpop.f32.mrf.mxu0
        %v2231 = vadd.f32 %v2142, %v2230
        %2232 = vmatmul.bf16.gmra.mxu0 %v1644
        %v2233 = vpop.f32.mrf.mxu0
        %v2234 = vadd.f32 %v2145, %v2233
        %v2235 = vpop.f32.mrf.mxu0
        %v2236 = vadd.f32 %v2147, %v2235
        %2237 = vmatmul.bf16.gmra.mxu0 %v1648
        %v2238 = vpop.f32.mrf.mxu0
        %v2239 = vadd.f32 %v2150, %v2238
        %v2240 = vpop.f32.mrf.mxu0
        %v2241 = vadd.f32 %v2152, %v2240
        %2242 = vmatmul.bf16.gmra.mxu0 %v1652
        %v2243 = vpop.f32.mrf.mxu0
        %v2244 = vadd.f32 %v2155, %v2243
        %v2245 = vpop.f32.mrf.mxu0
        %v2246 = vadd.f32 %v2157, %v2245
        %2247 = vmatmul.bf16.gmra.mxu0 %v1656
        %v2248 = vpop.f32.mrf.mxu0
        %v2249 = vadd.f32 %v2160, %v2248
        %v2250 = vpop.f32.mrf.mxu0
        %v2251 = vadd.f32 %v2162, %v2250
        %2252 = vmatmul.bf16.gmra.mxu0 %v1660
        %v2253 = vpop.f32.mrf.mxu0
        %v2254 = vadd.f32 %v2165, %v2253
        %v2255 = vpop.f32.mrf.mxu0
        %v2256 = vadd.f32 %v2167, %v2255
        %2257 = vmatmul.bf16.gmra.mxu0 %v1664
        %v2258 = vpop.f32.mrf.mxu0
        %v2259 = vadd.f32 %v2170, %v2258
        %v2260 = vpop.f32.mrf.mxu0
        %v2261 = vadd.f32 %v2172, %v2260
        %2262 = vmatmul.bf16.gmra.mxu0 %v1668
        %v2263 = vpop.f32.mrf.mxu0
        %v2264 = vadd.f32 %v2175, %v2263
        %v2265 = vpop.f32.mrf.mxu0
        %v2266 = vadd.f32 %v2177, %v2265
        %2267 = vmatmul.bf16.gmra.mxu0 %v1672
        %v2268 = vpop.f32.mrf.mxu0
        %v2269 = vadd.f32 %v2180, %v2268
        %v2270 = vpop.f32.mrf.mxu0
        %v2271 = vadd.f32 %v2182, %v2270
        %2272 = vmatmul.bf16.gmra.mxu0 %v1676
        %v2273 = vpop.f32.mrf.mxu0
        %v2274 = vadd.f32 %v2185, %v2273
        %v2275 = vpop.f32.mrf.mxu0
        %v2276 = vadd.f32 %v2187, %v2275
        %2277 = vmatmul.bf16.gmra.mxu0 %v1680
        %v2278 = vpop.f32.mrf.mxu0
        %v2279 = vadd.f32 %v2190, %v2278
        %v2280 = vpop.f32.mrf.mxu0
        %v2281 = vadd.f32 %v2192, %v2280
        %2282 = vmatmul.bf16.gmra.mxu0 %v1684
        %v2283 = vpop.f32.mrf.mxu0
        %v2284 = vadd.f32 %v2195, %v2283
        %v2285 = vpop.f32.mrf.mxu0
        %v2286 = vadd.f32 %v2197, %v2285
        %2287 = vmatmul.bf16.gmra.mxu0 %v1688
        %v2288 = vpop.f32.mrf.mxu0
        %v2289 = vadd.f32 %v2200, %v2288
        %v2290 = vpop.f32.mrf.mxu0
        %v2291 = vadd.f32 %v2202, %v2290
        %2292 = vdwg.mxu0
        %2293 = vmatpush.bf16.msra.mxu0 %v1937
        %2294 = vmatpush.bf16.msra.mxu0 %v1936
        %2295 = vmatpush.bf16.msra.mxu0 %v1935
        %2296 = vmatpush.bf16.msra.mxu0 %v1934
        %2297 = vmatpush.bf16.msra.mxu0 %v1933
        %2298 = vmatpush.bf16.msra.mxu0 %v1932
        %2299 = vmatpush.bf16.msra.mxu0 %v1931
        %2300 = vmatpush.bf16.msra.mxu0 %v1930
        %2301 = vmatmul.bf16.gmra.mxu0 %v1628
        %v2302 = vpop.f32.mrf.mxu0
        %v2303 = vadd.f32 %v2214, %v2302
        %v2304 = vpop.f32.mrf.mxu0
        %v2305 = vadd.f32 %v2216, %v2304
        %2306 = vmatmul.bf16.gmra.mxu0 %v1633
        %v2307 = vpop.f32.mrf.mxu0
        %v2308 = vadd.f32 %v2219, %v2307
        %v2309 = vpop.f32.mrf.mxu0
        %v2310 = vadd.f32 %v2221, %v2309
        %2311 = vmatmul.bf16.gmra.mxu0 %v1637
        %v2312 = vpop.f32.mrf.mxu0
        %v2313 = vadd.f32 %v2224, %v2312
        %v2314 = vpop.f32.mrf.mxu0
        %v2315 = vadd.f32 %v2226, %v2314
        %2316 = vmatmul.bf16.gmra.mxu0 %v1641
        %v2317 = vpop.f32.mrf.mxu0
        %v2318 = vadd.f32 %v2229, %v2317
        %v2319 = vpop.f32.mrf.mxu0
        %v2320 = vadd.f32 %v2231, %v2319
        %2321 = vmatmul.bf16.gmra.mxu0 %v1645
        %v2322 = vpop.f32.mrf.mxu0
        %v2323 = vadd.f32 %v2234, %v2322
        %v2324 = vpop.f32.mrf.mxu0
        %v2325 = vadd.f32 %v2236, %v2324
        %2326 = vmatmul.bf16.gmra.mxu0 %v1649
        %v2327 = vpop.f32.mrf.mxu0
        %v2328 = vadd.f32 %v2239, %v2327
        %v2329 = vpop.f32.mrf.mxu0
        %v2330 = vadd.f32 %v2241, %v2329
        %2331 = vmatmul.bf16.gmra.mxu0 %v1653
        %v2332 = vpop.f32.mrf.mxu0
        %v2333 = vadd.f32 %v2244, %v2332
        %v2334 = vpop.f32.mrf.mxu0
        %v2335 = vadd.f32 %v2246, %v2334
        %2336 = vmatmul.bf16.gmra.mxu0 %v1657
        %v2337 = vpop.f32.mrf.mxu0
        %v2338 = vadd.f32 %v2249, %v2337
        %v2339 = vpop.f32.mrf.mxu0
        %v2340 = vadd.f32 %v2251, %v2339
        %2341 = vmatmul.bf16.gmra.mxu0 %v1661
        %v2342 = vpop.f32.mrf.mxu0
        %v2343 = vadd.f32 %v2254, %v2342
        %v2344 = vpop.f32.mrf.mxu0
        %v2345 = vadd.f32 %v2256, %v2344
        %2346 = vmatmul.bf16.gmra.mxu0 %v1665
        %v2347 = vpop.f32.mrf.mxu0
        %v2348 = vadd.f32 %v2259, %v2347
        %v2349 = vpop.f32.mrf.mxu0
        %v2350 = vadd.f32 %v2261, %v2349
        %2351 = vmatmul.bf16.gmra.mxu0 %v1669
        %v2352 = vpop.f32.mrf.mxu0
        %v2353 = vadd.f32 %v2264, %v2352
        %v2354 = vpop.f32.mrf.mxu0
        %v2355 = vadd.f32 %v2266, %v2354
        %2356 = vmatmul.bf16.gmra.mxu0 %v1673
        %v2357 = vpop.f32.mrf.mxu0
        %v2358 = vadd.f32 %v2269, %v2357
        %v2359 = vpop.f32.mrf.mxu0
        %v2360 = vadd.f32 %v2271, %v2359
        %2361 = vmatmul.bf16.gmra.mxu0 %v1677
        %v2362 = vpop.f32.mrf.mxu0
        %v2363 = vadd.f32 %v2274, %v2362
        %v2364 = vpop.f32.mrf.mxu0
        %v2365 = vadd.f32 %v2276, %v2364
        %2366 = vmatmul.bf16.gmra.mxu0 %v1681
        %v2367 = vpop.f32.mrf.mxu0
        %v2368 = vadd.f32 %v2279, %v2367
        %v2369 = vpop.f32.mrf.mxu0
        %v2370 = vadd.f32 %v2281, %v2369
        %2371 = vmatmul.bf16.gmra.mxu0 %v1685
        %v2372 = vpop.f32.mrf.mxu0
        %v2373 = vadd.f32 %v2284, %v2372
        %v2374 = vpop.f32.mrf.mxu0
        %v2375 = vadd.f32 %v2286, %v2374
        %2376 = vmatmul.bf16.gmra.mxu0 %v1625
        %v2377 = vpop.f32.mrf.mxu0
        %v2378 = vadd.f32 %v2289, %v2377
        %v2379 = vpop.f32.mrf.mxu0
        %v2380 = vadd.f32 %v2291, %v2379
        %2381 = vdwg.mxu0
        %2382 = vmatpush.bf16.msra.mxu0 0
        %2383 = vmatpush.bf16.msra.mxu0 0
        %2384 = vmatpush.bf16.msra.mxu0 0
        %2385 = vmatpush.bf16.msra.mxu0 0
        %2386 = vmatpush.bf16.msra.mxu0 %v1941
        %2387 = vmatpush.bf16.msra.mxu0 %v1940
        %2388 = vmatpush.bf16.msra.mxu0 %v1939
        %2389 = vmatpush.bf16.msra.mxu0 %v1938
        %2390 = vmatmul.bf16.gmra.mxu0 %v1979
        %v2391 = vpop.f32.mrf.mxu0
        %v2392 = vadd.f32 %v2303, %v2391
        %v2393 = vpop.f32.mrf.mxu0
        %v2394 = vadd.f32 %v2305, %v2393
        %2395 = vmatmul.bf16.gmra.mxu0 %v1982
        %v2396 = vpop.f32.mrf.mxu0
        %v2397 = vadd.f32 %v2308, %v2396
        %v2398 = vpop.f32.mrf.mxu0
        %v2399 = vadd.f32 %v2310, %v2398
        %2400 = vmatmul.bf16.gmra.mxu0 %v1985
        %v2401 = vpop.f32.mrf.mxu0
        %v2402 = vadd.f32 %v2313, %v2401
        %v2403 = vpop.f32.mrf.mxu0
        %v2404 = vadd.f32 %v2315, %v2403
        %2405 = vmatmul.bf16.gmra.mxu0 %v1988
        %v2406 = vpop.f32.mrf.mxu0
        %v2407 = vadd.f32 %v2318, %v2406
        %v2408 = vpop.f32.mrf.mxu0
        %v2409 = vadd.f32 %v2320, %v2408
        %2410 = vmatmul.bf16.gmra.mxu0 %v1991
        %v2411 = vpop.f32.mrf.mxu0
        %v2412 = vadd.f32 %v2323, %v2411
        %v2413 = vpop.f32.mrf.mxu0
        %v2414 = vadd.f32 %v2325, %v2413
        %2415 = vmatmul.bf16.gmra.mxu0 %v1994
        %v2416 = vpop.f32.mrf.mxu0
        %v2417 = vadd.f32 %v2328, %v2416
        %v2418 = vpop.f32.mrf.mxu0
        %v2419 = vadd.f32 %v2330, %v2418
        %2420 = vmatmul.bf16.gmra.mxu0 %v1997
        %v2421 = vpop.f32.mrf.mxu0
        %v2422 = vadd.f32 %v2333, %v2421
        %v2423 = vpop.f32.mrf.mxu0
        %v2424 = vadd.f32 %v2335, %v2423
        %2425 = vmatmul.bf16.gmra.mxu0 %v2000
        %v2426 = vpop.f32.mrf.mxu0
        %v2427 = vadd.f32 %v2338, %v2426
        %v2428 = vpop.f32.mrf.mxu0
        %v2429 = vadd.f32 %v2340, %v2428
        %2430 = vmatmul.bf16.gmra.mxu0 %v2003
        %v2431 = vpop.f32.mrf.mxu0
        %v2432 = vadd.f32 %v2343, %v2431
        %v2433 = vpop.f32.mrf.mxu0
        %v2434 = vadd.f32 %v2345, %v2433
        %2435 = vmatmul.bf16.gmra.mxu0 %v2006
        %v2436 = vpop.f32.mrf.mxu0
        %v2437 = vadd.f32 %v2348, %v2436
        %v2438 = vpop.f32.mrf.mxu0
        %v2439 = vadd.f32 %v2350, %v2438
        %2440 = vmatmul.bf16.gmra.mxu0 %v2009
        %v2441 = vpop.f32.mrf.mxu0
        %v2442 = vadd.f32 %v2353, %v2441
        %v2443 = vpop.f32.mrf.mxu0
        %v2444 = vadd.f32 %v2355, %v2443
        %2445 = vmatmul.bf16.gmra.mxu0 %v2012
        %v2446 = vpop.f32.mrf.mxu0
        %v2447 = vadd.f32 %v2358, %v2446
        %v2448 = vpop.f32.mrf.mxu0
        %v2449 = vadd.f32 %v2360, %v2448
        %2450 = vmatmul.bf16.gmra.mxu0 %v2015
        %v2451 = vpop.f32.mrf.mxu0
        %v2452 = vadd.f32 %v2363, %v2451
        %v2453 = vpop.f32.mrf.mxu0
        %v2454 = vadd.f32 %v2365, %v2453
        %2455 = vmatmul.bf16.gmra.mxu0 %v2018
        %v2456 = vpop.f32.mrf.mxu0
        %v2457 = vadd.f32 %v2368, %v2456
        %v2458 = vpop.f32.mrf.mxu0
        %v2459 = vadd.f32 %v2370, %v2458
        %2460 = vmatmul.bf16.gmra.mxu0 %v2021
        %v2461 = vpop.f32.mrf.mxu0
        %v2462 = vadd.f32 %v2373, %v2461
        %v2463 = vpop.f32.mrf.mxu0
        %v2464 = vadd.f32 %v2375, %v2463
        %2465 = vmatmul.bf16.gmra.mxu0 %v2024
        %v2466 = vpop.f32.mrf.mxu0
        %v2467 = vadd.f32 %v2378, %v2466
        %v2468 = vpop.f32.mrf.mxu0
        %v2469 = vadd.f32 %v2380, %v2468
        %2470 = vdwg.mxu0
        %v2471 = vld [vmem:[#allocation7] sm:$0x1]
        %v2473 = vperm.slane %v2471, 0
        %v2475 = vmul.f32 %v2392, %v2473
        %v2476 = vmul.f32 %v2394, %v2473
        %v2477 = vmul.f32 %v2397, %v2473
        %v2478 = vmul.f32 %v2399, %v2473
        %v2479 = vmul.f32 %v2402, %v2473
        %v2480 = vmul.f32 %v2404, %v2473
        %v2481 = vmul.f32 %v2407, %v2473
        %v2482 = vmul.f32 %v2409, %v2473
        %v2483 = vmul.f32 %v2412, %v2473
        %v2484 = vmul.f32 %v2414, %v2473
        %v2485 = vmul.f32 %v2417, %v2473
        %v2486 = vmul.f32 %v2419, %v2473
        %v2487 = vmul.f32 %v2422, %v2473
        %v2488 = vmul.f32 %v2424, %v2473
        %v2489 = vmul.f32 %v2427, %v2473
        %v2490 = vmul.f32 %v2429, %v2473
        %v2491 = vmul.f32 %v2432, %v2473
        %v2492 = vmul.f32 %v2434, %v2473
        %v2493 = vmul.f32 %v2437, %v2473
        %v2494 = vmul.f32 %v2439, %v2473
        %v2495 = vmul.f32 %v2442, %v2473
        %v2496 = vmul.f32 %v2444, %v2473
        %v2497 = vmul.f32 %v2447, %v2473
        %v2498 = vmul.f32 %v2449, %v2473
        %v2499 = vmul.f32 %v2452, %v2473
        %v2500 = vmul.f32 %v2454, %v2473
        %v2501 = vmul.f32 %v2457, %v2473
        %v2502 = vmul.f32 %v2459, %v2473
        %v2503 = vmul.f32 %v2462, %v2473
        %v2504 = vmul.f32 %v2464, %v2473
        %v2505 = vmul.f32 %v2467, %v2473
        %v2506 = vmul.f32 %v2469, %v2473
        %v2507 = vld [vmem:[#allocation8] sm:$0x1]
        %v2509 = vperm.slane %v2507, 0
        %v2511 = vadd.f32 %v2475, %v2509
        %v2512 = vadd.f32 %v2476, %v2509
        %v2513 = vadd.f32 %v2477, %v2509
        %v2514 = vadd.f32 %v2478, %v2509
        %v2515 = vadd.f32 %v2479, %v2509
        %v2516 = vadd.f32 %v2480, %v2509
        %v2517 = vadd.f32 %v2481, %v2509
        %v2518 = vadd.f32 %v2482, %v2509
        %v2519 = vadd.f32 %v2483, %v2509
        %v2520 = vadd.f32 %v2484, %v2509
        %v2521 = vadd.f32 %v2485, %v2509
        %v2522 = vadd.f32 %v2486, %v2509
        %v2523 = vadd.f32 %v2487, %v2509
        %v2524 = vadd.f32 %v2488, %v2509
        %v2525 = vadd.f32 %v2489, %v2509
        %v2526 = vadd.f32 %v2490, %v2509
        %v2527 = vadd.f32 %v2491, %v2509
        %v2528 = vadd.f32 %v2492, %v2509
        %v2529 = vadd.f32 %v2493, %v2509
        %v2530 = vadd.f32 %v2494, %v2509
        %v2531 = vadd.f32 %v2495, %v2509
        %v2532 = vadd.f32 %v2496, %v2509
        %v2533 = vadd.f32 %v2497, %v2509
        %v2534 = vadd.f32 %v2498, %v2509
        %v2535 = vadd.f32 %v2499, %v2509
        %v2536 = vadd.f32 %v2500, %v2509
        %v2537 = vadd.f32 %v2501, %v2509
        %v2538 = vadd.f32 %v2502, %v2509
        %v2539 = vadd.f32 %v2503, %v2509
        %v2540 = vadd.f32 %v2504, %v2509
        %v2541 = vadd.f32 %v2505, %v2509
        %v2542 = vadd.f32 %v2506, %v2509
        %v2543 = vmax.f32 %v2511, 0.0
        %v2544 = vmax.f32 %v2512, 0.0
        %v2545 = vmax.f32 %v2513, 0.0
        %v2546 = vmax.f32 %v2514, 0.0
        %v2547 = vmax.f32 %v2515, 0.0
        %v2548 = vmax.f32 %v2516, 0.0
        %v2549 = vmax.f32 %v2517, 0.0
        %v2550 = vmax.f32 %v2518, 0.0
        %v2551 = vmax.f32 %v2519, 0.0
        %v2552 = vmax.f32 %v2520, 0.0
        %v2553 = vmax.f32 %v2521, 0.0
        %v2554 = vmax.f32 %v2522, 0.0
        %v2555 = vmax.f32 %v2523, 0.0
        %v2556 = vmax.f32 %v2524, 0.0
        %v2557 = vmax.f32 %v2525, 0.0
        %v2558 = vmax.f32 %v2526, 0.0
        %v2559 = vmax.f32 %v2527, 0.0
        %v2560 = vmax.f32 %v2528, 0.0
        %v2561 = vmax.f32 %v2529, 0.0
        %v2562 = vmax.f32 %v2530, 0.0
        %v2563 = vmax.f32 %v2531, 0.0
        %v2564 = vmax.f32 %v2532, 0.0
        %v2565 = vmax.f32 %v2533, 0.0
        %v2566 = vmax.f32 %v2534, 0.0
        %v2567 = vmax.f32 %v2535, 0.0
        %v2568 = vmax.f32 %v2536, 0.0
        %v2569 = vmax.f32 %v2537, 0.0
        %v2570 = vmax.f32 %v2538, 0.0
        %v2571 = vmax.f32 %v2539, 0.0
        %v2572 = vmax.f32 %v2540, 0.0
        %v2573 = vmax.f32 %v2541, 0.0
        %v2574 = vmax.f32 %v2542, 0.0
        %v2607 = vrot.slane %v2543, 7
        %v2608 = vrot.slane %v2544, 7
        %v2609 = vsel %vm843, %v2607, %v2608
        %v2610 = vrot.slane %v2545, 7
        %v2611 = vrot.slane %v2546, 7
        %v2612 = vsel %vm843, %v2610, %v2611
        %v2613 = vrot.slane %v2547, 7
        %v2614 = vrot.slane %v2548, 7
        %v2615 = vsel %vm843, %v2613, %v2614
        %v2616 = vrot.slane %v2549, 7
        %v2617 = vrot.slane %v2550, 7
        %v2618 = vsel %vm843, %v2616, %v2617
        %v2619 = vrot.slane %v2551, 7
        %v2620 = vrot.slane %v2552, 7
        %v2621 = vsel %vm843, %v2619, %v2620
        %v2622 = vrot.slane %v2553, 7
        %v2623 = vrot.slane %v2554, 7
        %v2624 = vsel %vm843, %v2622, %v2623
        %v2625 = vrot.slane %v2555, 7
        %v2626 = vrot.slane %v2556, 7
        %v2627 = vsel %vm843, %v2625, %v2626
        %v2628 = vrot.slane %v2557, 7
        %v2629 = vrot.slane %v2558, 7
        %v2630 = vsel %vm843, %v2628, %v2629
        %v2631 = vrot.slane %v2559, 7
        %v2632 = vrot.slane %v2560, 7
        %v2633 = vsel %vm843, %v2631, %v2632
        %v2634 = vrot.slane %v2561, 7
        %v2635 = vrot.slane %v2562, 7
        %v2636 = vsel %vm843, %v2634, %v2635
        %v2637 = vrot.slane %v2563, 7
        %v2638 = vrot.slane %v2564, 7
        %v2639 = vsel %vm843, %v2637, %v2638
        %v2640 = vrot.slane %v2565, 7
        %v2641 = vrot.slane %v2566, 7
        %v2642 = vsel %vm843, %v2640, %v2641
        %v2643 = vrot.slane %v2567, 7
        %v2644 = vrot.slane %v2568, 7
        %v2645 = vsel %vm843, %v2643, %v2644
        %v2646 = vrot.slane %v2569, 7
        %v2647 = vrot.slane %v2570, 7
        %v2648 = vsel %vm843, %v2646, %v2647
        %v2649 = vrot.slane %v2571, 7
        %v2650 = vrot.slane %v2572, 7
        %v2651 = vsel %vm843, %v2649, %v2650
        %v2652 = vrot.slane %v2573, 7
        %v2653 = vrot.slane %v2574, 7
        %v2654 = vsel %vm843, %v2652, %v2653
        %v2703 = vsel %vm843, 0.0, %v2607
        %v2704 = vsel %vm843, 0.0, %v2610
        %v2705 = vsel %vm843, 0.0, %v2613
        %v2706 = vsel %vm843, 0.0, %v2616
        %v2707 = vsel %vm843, 0.0, %v2619
        %v2708 = vsel %vm843, 0.0, %v2622
        %v2709 = vsel %vm843, 0.0, %v2625
        %v2710 = vsel %vm843, 0.0, %v2628
        %v2711 = vsel %vm843, 0.0, %v2631
        %v2712 = vsel %vm843, 0.0, %v2634
        %v2713 = vsel %vm843, 0.0, %v2637
        %v2714 = vsel %vm843, 0.0, %v2640
        %v2715 = vsel %vm843, 0.0, %v2643
        %v2716 = vsel %vm843, 0.0, %v2646
        %v2717 = vsel %vm843, 0.0, %v2649
        %v2718 = vsel %vm843, 0.0, %v2652
        %v2719 = vsel %vm843, %v2608, 0.0
        %v2720 = vsel %vm843, %v2611, 0.0
        %v2721 = vsel %vm843, %v2614, 0.0
        %v2722 = vsel %vm843, %v2617, 0.0
        %v2723 = vsel %vm843, %v2620, 0.0
        %v2724 = vsel %vm843, %v2623, 0.0
        %v2725 = vsel %vm843, %v2626, 0.0
        %v2726 = vsel %vm843, %v2629, 0.0
        %v2727 = vsel %vm843, %v2632, 0.0
        %v2728 = vsel %vm843, %v2635, 0.0
        %v2729 = vsel %vm843, %v2638, 0.0
        %v2730 = vsel %vm843, %v2641, 0.0
        %v2731 = vsel %vm843, %v2644, 0.0
        %v2732 = vsel %vm843, %v2647, 0.0
        %v2733 = vsel %vm843, %v2650, 0.0
        %v2734 = vsel %vm843, %v2653, 0.0
        %v2735 = vld [vmem:[#allocation10] sm:$0xff]
        %v2736 = vld [vmem:[#allocation10 + $0x8] sm:$0x1]
        %v2737 = vld [vmem:[#allocation14] sm:$0xff]
        %v2738 = vld [vmem:[#allocation14 + $0x8] sm:$0x1]
        %v2739 = vperm.slane %v2735, 0
        %v2740 = vmul.f32 %v2739, 0.0
        %v2741 = vmul.f32 %v2703, %v2739
        %v2742 = vmul.f32 %v2609, %v2739
        %v2743 = vmul.f32 %v2704, %v2739
        %v2744 = vmul.f32 %v2612, %v2739
        %v2745 = vmul.f32 %v2705, %v2739
        %v2746 = vmul.f32 %v2615, %v2739
        %v2747 = vmul.f32 %v2706, %v2739
        %v2748 = vmul.f32 %v2618, %v2739
        %v2749 = vmul.f32 %v2707, %v2739
        %v2750 = vmul.f32 %v2621, %v2739
        %v2751 = vmul.f32 %v2708, %v2739
        %v2752 = vmul.f32 %v2624, %v2739
        %v2753 = vmul.f32 %v2709, %v2739
        %v2754 = vmul.f32 %v2627, %v2739
        %v2755 = vmul.f32 %v2710, %v2739
        %v2756 = vmul.f32 %v2630, %v2739
        %v2757 = vmul.f32 %v2711, %v2739
        %v2758 = vmul.f32 %v2633, %v2739
        %v2759 = vmul.f32 %v2712, %v2739
        %v2760 = vmul.f32 %v2636, %v2739
        %v2761 = vmul.f32 %v2713, %v2739
        %v2762 = vmul.f32 %v2639, %v2739
        %v2763 = vmul.f32 %v2714, %v2739
        %v2764 = vmul.f32 %v2642, %v2739
        %v2765 = vmul.f32 %v2715, %v2739
        %v2766 = vmul.f32 %v2645, %v2739
        %v2767 = vmul.f32 %v2716, %v2739
        %v2768 = vmul.f32 %v2648, %v2739
        %v2769 = vmul.f32 %v2717, %v2739
        %v2770 = vmul.f32 %v2651, %v2739
        %v2771 = vadd.f32 %v2740, 0.0
        %v2772 = vadd.f32 %v2741, 0.0
        %v2773 = vadd.f32 %v2742, 0.0
        %v2774 = vadd.f32 %v2743, 0.0
        %v2775 = vadd.f32 %v2744, 0.0
        %v2776 = vadd.f32 %v2745, 0.0
        %v2777 = vadd.f32 %v2746, 0.0
        %v2778 = vadd.f32 %v2747, 0.0
        %v2779 = vadd.f32 %v2748, 0.0
        %v2780 = vadd.f32 %v2749, 0.0
        %v2781 = vadd.f32 %v2750, 0.0
        %v2782 = vadd.f32 %v2751, 0.0
        %v2783 = vadd.f32 %v2752, 0.0
        %v2784 = vadd.f32 %v2753, 0.0
        %v2785 = vadd.f32 %v2754, 0.0
        %v2786 = vadd.f32 %v2755, 0.0
        %v2787 = vadd.f32 %v2756, 0.0
        %v2788 = vadd.f32 %v2757, 0.0
        %v2789 = vadd.f32 %v2758, 0.0
        %v2790 = vadd.f32 %v2759, 0.0
        %v2791 = vadd.f32 %v2760, 0.0
        %v2792 = vadd.f32 %v2761, 0.0
        %v2793 = vadd.f32 %v2762, 0.0
        %v2794 = vadd.f32 %v2763, 0.0
        %v2795 = vadd.f32 %v2764, 0.0
        %v2796 = vadd.f32 %v2765, 0.0
        %v2797 = vadd.f32 %v2766, 0.0
        %v2798 = vadd.f32 %v2767, 0.0
        %v2799 = vadd.f32 %v2768, 0.0
        %v2800 = vadd.f32 %v2769, 0.0
        %v2801 = vadd.f32 %v2770, 0.0
        %v2802 = vperm.slane %v2737, 0
        %v2803 = vmul.f32 %v2802, 0.0
        %v2804 = vmul.f32 %v2703, %v2802
        %v2805 = vmul.f32 %v2609, %v2802
        %v2806 = vmul.f32 %v2704, %v2802
        %v2807 = vmul.f32 %v2612, %v2802
        %v2808 = vmul.f32 %v2705, %v2802
        %v2809 = vmul.f32 %v2615, %v2802
        %v2810 = vmul.f32 %v2706, %v2802
        %v2811 = vmul.f32 %v2618, %v2802
        %v2812 = vmul.f32 %v2707, %v2802
        %v2813 = vmul.f32 %v2621, %v2802
        %v2814 = vmul.f32 %v2708, %v2802
        %v2815 = vmul.f32 %v2624, %v2802
        %v2816 = vmul.f32 %v2709, %v2802
        %v2817 = vmul.f32 %v2627, %v2802
        %v2818 = vmul.f32 %v2710, %v2802
        %v2819 = vmul.f32 %v2630, %v2802
        %v2820 = vmul.f32 %v2711, %v2802
        %v2821 = vmul.f32 %v2633, %v2802
        %v2822 = vmul.f32 %v2712, %v2802
        %v2823 = vmul.f32 %v2636, %v2802
        %v2824 = vmul.f32 %v2713, %v2802
        %v2825 = vmul.f32 %v2639, %v2802
        %v2826 = vmul.f32 %v2714, %v2802
        %v2827 = vmul.f32 %v2642, %v2802
        %v2828 = vmul.f32 %v2715, %v2802
        %v2829 = vmul.f32 %v2645, %v2802
        %v2830 = vmul.f32 %v2716, %v2802
        %v2831 = vmul.f32 %v2648, %v2802
        %v2832 = vmul.f32 %v2717, %v2802
        %v2833 = vmul.f32 %v2651, %v2802
        %v2834 = vadd.f32 %v2803, 0.0
        %v2835 = vadd.f32 %v2804, 0.0
        %v2836 = vadd.f32 %v2805, 0.0
        %v2837 = vadd.f32 %v2806, 0.0
        %v2838 = vadd.f32 %v2807, 0.0
        %v2839 = vadd.f32 %v2808, 0.0
        %v2840 = vadd.f32 %v2809, 0.0
        %v2841 = vadd.f32 %v2810, 0.0
        %v2842 = vadd.f32 %v2811, 0.0
        %v2843 = vadd.f32 %v2812, 0.0
        %v2844 = vadd.f32 %v2813, 0.0
        %v2845 = vadd.f32 %v2814, 0.0
        %v2846 = vadd.f32 %v2815, 0.0
        %v2847 = vadd.f32 %v2816, 0.0
        %v2848 = vadd.f32 %v2817, 0.0
        %v2849 = vadd.f32 %v2818, 0.0
        %v2850 = vadd.f32 %v2819, 0.0
        %v2851 = vadd.f32 %v2820, 0.0
        %v2852 = vadd.f32 %v2821, 0.0
        %v2853 = vadd.f32 %v2822, 0.0
        %v2854 = vadd.f32 %v2823, 0.0
        %v2855 = vadd.f32 %v2824, 0.0
        %v2856 = vadd.f32 %v2825, 0.0
        %v2857 = vadd.f32 %v2826, 0.0
        %v2858 = vadd.f32 %v2827, 0.0
        %v2859 = vadd.f32 %v2828, 0.0
        %v2860 = vadd.f32 %v2829, 0.0
        %v2861 = vadd.f32 %v2830, 0.0
        %v2862 = vadd.f32 %v2831, 0.0
        %v2863 = vadd.f32 %v2832, 0.0
        %v2864 = vadd.f32 %v2833, 0.0
        %v2865 = vperm.slane %v2735, 1
        %v2866 = vmul.f32 %v2865, 0.0
        %v2867 = vmul.f32 %v2703, %v2865
        %v2868 = vmul.f32 %v2609, %v2865
        %v2869 = vmul.f32 %v2719, %v2865
        %v2870 = vmul.f32 %v2704, %v2865
        %v2871 = vmul.f32 %v2612, %v2865
        %v2872 = vmul.f32 %v2720, %v2865
        %v2873 = vmul.f32 %v2705, %v2865
        %v2874 = vmul.f32 %v2615, %v2865
        %v2875 = vmul.f32 %v2721, %v2865
        %v2876 = vmul.f32 %v2706, %v2865
        %v2877 = vmul.f32 %v2618, %v2865
        %v2878 = vmul.f32 %v2722, %v2865
        %v2879 = vmul.f32 %v2707, %v2865
        %v2880 = vmul.f32 %v2621, %v2865
        %v2881 = vmul.f32 %v2723, %v2865
        %v2882 = vmul.f32 %v2708, %v2865
        %v2883 = vmul.f32 %v2624, %v2865
        %v2884 = vmul.f32 %v2724, %v2865
        %v2885 = vmul.f32 %v2709, %v2865
        %v2886 = vmul.f32 %v2627, %v2865
        %v2887 = vmul.f32 %v2725, %v2865
        %v2888 = vmul.f32 %v2710, %v2865
        %v2889 = vmul.f32 %v2630, %v2865
        %v2890 = vmul.f32 %v2726, %v2865
        %v2891 = vmul.f32 %v2711, %v2865
        %v2892 = vmul.f32 %v2633, %v2865
        %v2893 = vmul.f32 %v2727, %v2865
        %v2894 = vmul.f32 %v2712, %v2865
        %v2895 = vmul.f32 %v2636, %v2865
        %v2896 = vmul.f32 %v2728, %v2865
        %v2897 = vmul.f32 %v2713, %v2865
        %v2898 = vmul.f32 %v2639, %v2865
        %v2899 = vmul.f32 %v2729, %v2865
        %v2900 = vmul.f32 %v2714, %v2865
        %v2901 = vmul.f32 %v2642, %v2865
        %v2902 = vmul.f32 %v2730, %v2865
        %v2903 = vmul.f32 %v2715, %v2865
        %v2904 = vmul.f32 %v2645, %v2865
        %v2905 = vmul.f32 %v2731, %v2865
        %v2906 = vmul.f32 %v2716, %v2865
        %v2907 = vmul.f32 %v2648, %v2865
        %v2908 = vmul.f32 %v2732, %v2865
        %v2909 = vmul.f32 %v2717, %v2865
        %v2910 = vmul.f32 %v2651, %v2865
        %v2911 = vmul.f32 %v2733, %v2865
        %v2958 = vrot.slane %v2866, 1
        %v2959 = vsel %vm1005, %v2958, %v2958
        %v2960 = vrot.slane %v2867, 1
        %v2961 = vrot.slane %v2868, 1
        %v2962 = vsel %vm1005, %v2960, %v2961
        %v2963 = vrot.slane %v2869, 1
        %v2964 = vsel %vm1005, %v2961, %v2963
        %v2965 = vrot.slane %v2870, 1
        %v2966 = vrot.slane %v2871, 1
        %v2967 = vsel %vm1005, %v2965, %v2966
        %v2968 = vrot.slane %v2872, 1
        %v2969 = vsel %vm1005, %v2966, %v2968
        %v2970 = vrot.slane %v2873, 1
        %v2971 = vrot.slane %v2874, 1
        %v2972 = vsel %vm1005, %v2970, %v2971
        %v2973 = vrot.slane %v2875, 1
        %v2974 = vsel %vm1005, %v2971, %v2973
        %v2975 = vrot.slane %v2876, 1
        %v2976 = vrot.slane %v2877, 1
        %v2977 = vsel %vm1005, %v2975, %v2976
        %v2978 = vrot.slane %v2878, 1
        %v2979 = vsel %vm1005, %v2976, %v2978
        %v2980 = vrot.slane %v2879, 1
        %v2981 = vrot.slane %v2880, 1
        %v2982 = vsel %vm1005, %v2980, %v2981
        %v2983 = vrot.slane %v2881, 1
        %v2984 = vsel %vm1005, %v2981, %v2983
        %v2985 = vrot.slane %v2882, 1
        %v2986 = vrot.slane %v2883, 1
        %v2987 = vsel %vm1005, %v2985, %v2986
        %v2988 = vrot.slane %v2884, 1
        %v2989 = vsel %vm1005, %v2986, %v2988
        %v2990 = vrot.slane %v2885, 1
        %v2991 = vrot.slane %v2886, 1
        %v2992 = vsel %vm1005, %v2990, %v2991
        %v2993 = vrot.slane %v2887, 1
        %v2994 = vsel %vm1005, %v2991, %v2993
        %v2995 = vrot.slane %v2888, 1
        %v2996 = vrot.slane %v2889, 1
        %v2997 = vsel %vm1005, %v2995, %v2996
        %v2998 = vrot.slane %v2890, 1
        %v2999 = vsel %vm1005, %v2996, %v2998
        %v3000 = vrot.slane %v2891, 1
        %v3001 = vrot.slane %v2892, 1
        %v3002 = vsel %vm1005, %v3000, %v3001
        %v3003 = vrot.slane %v2893, 1
        %v3004 = vsel %vm1005, %v3001, %v3003
        %v3005 = vrot.slane %v2894, 1
        %v3006 = vrot.slane %v2895, 1
        %v3007 = vsel %vm1005, %v3005, %v3006
        %v3008 = vrot.slane %v2896, 1
        %v3009 = vsel %vm1005, %v3006, %v3008
        %v3010 = vrot.slane %v2897, 1
        %v3011 = vrot.slane %v2898, 1
        %v3012 = vsel %vm1005, %v3010, %v3011
        %v3013 = vrot.slane %v2899, 1
        %v3014 = vsel %vm1005, %v3011, %v3013
        %v3015 = vrot.slane %v2900, 1
        %v3016 = vrot.slane %v2901, 1
        %v3017 = vsel %vm1005, %v3015, %v3016
        %v3018 = vrot.slane %v2902, 1
        %v3019 = vsel %vm1005, %v3016, %v3018
        %v3020 = vrot.slane %v2903, 1
        %v3021 = vrot.slane %v2904, 1
        %v3022 = vsel %vm1005, %v3020, %v3021
        %v3023 = vrot.slane %v2905, 1
        %v3024 = vsel %vm1005, %v3021, %v3023
        %v3025 = vrot.slane %v2906, 1
        %v3026 = vrot.slane %v2907, 1
        %v3027 = vsel %vm1005, %v3025, %v3026
        %v3028 = vrot.slane %v2908, 1
        %v3029 = vsel %vm1005, %v3026, %v3028
        %v3030 = vrot.slane %v2909, 1
        %v3031 = vrot.slane %v2910, 1
        %v3032 = vsel %vm1005, %v3030, %v3031
        %v3033 = vrot.slane %v2911, 1
        %v3034 = vsel %vm1005, %v3031, %v3033
        %v3066 = vadd.f32 %v2771, %v2959
        %v3067 = vadd.f32 %v2772, %v2962
        %v3068 = vadd.f32 %v2773, %v2964
        %v3069 = vadd.f32 %v2774, %v2967
        %v3070 = vadd.f32 %v2775, %v2969
        %v3071 = vadd.f32 %v2776, %v2972
        %v3072 = vadd.f32 %v2777, %v2974
        %v3073 = vadd.f32 %v2778, %v2977
        %v3074 = vadd.f32 %v2779, %v2979
        %v3075 = vadd.f32 %v2780, %v2982
        %v3076 = vadd.f32 %v2781, %v2984
        %v3077 = vadd.f32 %v2782, %v2987
        %v3078 = vadd.f32 %v2783, %v2989
        %v3079 = vadd.f32 %v2784, %v2992
        %v3080 = vadd.f32 %v2785, %v2994
        %v3081 = vadd.f32 %v2786, %v2997
        %v3082 = vadd.f32 %v2787, %v2999
        %v3083 = vadd.f32 %v2788, %v3002
        %v3084 = vadd.f32 %v2789, %v3004
        %v3085 = vadd.f32 %v2790, %v3007
        %v3086 = vadd.f32 %v2791, %v3009
        %v3087 = vadd.f32 %v2792, %v3012
        %v3088 = vadd.f32 %v2793, %v3014
        %v3089 = vadd.f32 %v2794, %v3017
        %v3090 = vadd.f32 %v2795, %v3019
        %v3091 = vadd.f32 %v2796, %v3022
        %v3092 = vadd.f32 %v2797, %v3024
        %v3093 = vadd.f32 %v2798, %v3027
        %v3094 = vadd.f32 %v2799, %v3029
        %v3095 = vadd.f32 %v2800, %v3032
        %v3096 = vadd.f32 %v2801, %v3034
        %v3097 = vperm.slane %v2737, 1
        %v3098 = vmul.f32 %v3097, 0.0
        %v3099 = vmul.f32 %v2703, %v3097
        %v3100 = vmul.f32 %v2609, %v3097
        %v3101 = vmul.f32 %v2719, %v3097
        %v3102 = vmul.f32 %v2704, %v3097
        %v3103 = vmul.f32 %v2612, %v3097
        %v3104 = vmul.f32 %v2720, %v3097
        %v3105 = vmul.f32 %v2705, %v3097
        %v3106 = vmul.f32 %v2615, %v3097
        %v3107 = vmul.f32 %v2721, %v3097
        %v3108 = vmul.f32 %v2706, %v3097
        %v3109 = vmul.f32 %v2618, %v3097
        %v3110 = vmul.f32 %v2722, %v3097
        %v3111 = vmul.f32 %v2707, %v3097
        %v3112 = vmul.f32 %v2621, %v3097
        %v3113 = vmul.f32 %v2723, %v3097
        %v3114 = vmul.f32 %v2708, %v3097
        %v3115 = vmul.f32 %v2624, %v3097
        %v3116 = vmul.f32 %v2724, %v3097
        %v3117 = vmul.f32 %v2709, %v3097
        %v3118 = vmul.f32 %v2627, %v3097
        %v3119 = vmul.f32 %v2725, %v3097
        %v3120 = vmul.f32 %v2710, %v3097
        %v3121 = vmul.f32 %v2630, %v3097
        %v3122 = vmul.f32 %v2726, %v3097
        %v3123 = vmul.f32 %v2711, %v3097
        %v3124 = vmul.f32 %v2633, %v3097
        %v3125 = vmul.f32 %v2727, %v3097
        %v3126 = vmul.f32 %v2712, %v3097
        %v3127 = vmul.f32 %v2636, %v3097
        %v3128 = vmul.f32 %v2728, %v3097
        %v3129 = vmul.f32 %v2713, %v3097
        %v3130 = vmul.f32 %v2639, %v3097
        %v3131 = vmul.f32 %v2729, %v3097
        %v3132 = vmul.f32 %v2714, %v3097
        %v3133 = vmul.f32 %v2642, %v3097
        %v3134 = vmul.f32 %v2730, %v3097
        %v3135 = vmul.f32 %v2715, %v3097
        %v3136 = vmul.f32 %v2645, %v3097
        %v3137 = vmul.f32 %v2731, %v3097
        %v3138 = vmul.f32 %v2716, %v3097
        %v3139 = vmul.f32 %v2648, %v3097
        %v3140 = vmul.f32 %v2732, %v3097
        %v3141 = vmul.f32 %v2717, %v3097
        %v3142 = vmul.f32 %v2651, %v3097
        %v3143 = vmul.f32 %v2733, %v3097
        %v3190 = vrot.slane %v3098, 1
        %v3191 = vsel %vm1005, %v3190, %v3190
        %v3192 = vrot.slane %v3099, 1
        %v3193 = vrot.slane %v3100, 1
        %v3194 = vsel %vm1005, %v3192, %v3193
        %v3195 = vrot.slane %v3101, 1
        %v3196 = vsel %vm1005, %v3193, %v3195
        %v3197 = vrot.slane %v3102, 1
        %v3198 = vrot.slane %v3103, 1
        %v3199 = vsel %vm1005, %v3197, %v3198
        %v3200 = vrot.slane %v3104, 1
        %v3201 = vsel %vm1005, %v3198, %v3200
        %v3202 = vrot.slane %v3105, 1
        %v3203 = vrot.slane %v3106, 1
        %v3204 = vsel %vm1005, %v3202, %v3203
        %v3205 = vrot.slane %v3107, 1
        %v3206 = vsel %vm1005, %v3203, %v3205
        %v3207 = vrot.slane %v3108, 1
        %v3208 = vrot.slane %v3109, 1
        %v3209 = vsel %vm1005, %v3207, %v3208
        %v3210 = vrot.slane %v3110, 1
        %v3211 = vsel %vm1005, %v3208, %v3210
        %v3212 = vrot.slane %v3111, 1
        %v3213 = vrot.slane %v3112, 1
        %v3214 = vsel %vm1005, %v3212, %v3213
        %v3215 = vrot.slane %v3113, 1
        %v3216 = vsel %vm1005, %v3213, %v3215
        %v3217 = vrot.slane %v3114, 1
        %v3218 = vrot.slane %v3115, 1
        %v3219 = vsel %vm1005, %v3217, %v3218
        %v3220 = vrot.slane %v3116, 1
        %v3221 = vsel %vm1005, %v3218, %v3220
        %v3222 = vrot.slane %v3117, 1
        %v3223 = vrot.slane %v3118, 1
        %v3224 = vsel %vm1005, %v3222, %v3223
        %v3225 = vrot.slane %v3119, 1
        %v3226 = vsel %vm1005, %v3223, %v3225
        %v3227 = vrot.slane %v3120, 1
        %v3228 = vrot.slane %v3121, 1
        %v3229 = vsel %vm1005, %v3227, %v3228
        %v3230 = vrot.slane %v3122, 1
        %v3231 = vsel %vm1005, %v3228, %v3230
        %v3232 = vrot.slane %v3123, 1
        %v3233 = vrot.slane %v3124, 1
        %v3234 = vsel %vm1005, %v3232, %v3233
        %v3235 = vrot.slane %v3125, 1
        %v3236 = vsel %vm1005, %v3233, %v3235
        %v3237 = vrot.slane %v3126, 1
        %v3238 = vrot.slane %v3127, 1
        %v3239 = vsel %vm1005, %v3237, %v3238
        %v3240 = vrot.slane %v3128, 1
        %v3241 = vsel %vm1005, %v3238, %v3240
        %v3242 = vrot.slane %v3129, 1
        %v3243 = vrot.slane %v3130, 1
        %v3244 = vsel %vm1005, %v3242, %v3243
        %v3245 = vrot.slane %v3131, 1
        %v3246 = vsel %vm1005, %v3243, %v3245
        %v3247 = vrot.slane %v3132, 1
        %v3248 = vrot.slane %v3133, 1
        %v3249 = vsel %vm1005, %v3247, %v3248
        %v3250 = vrot.slane %v3134, 1
        %v3251 = vsel %vm1005, %v3248, %v3250
        %v3252 = vrot.slane %v3135, 1
        %v3253 = vrot.slane %v3136, 1
        %v3254 = vsel %vm1005, %v3252, %v3253
        %v3255 = vrot.slane %v3137, 1
        %v3256 = vsel %vm1005, %v3253, %v3255
        %v3257 = vrot.slane %v3138, 1
        %v3258 = vrot.slane %v3139, 1
        %v3259 = vsel %vm1005, %v3257, %v3258
        %v3260 = vrot.slane %v3140, 1
        %v3261 = vsel %vm1005, %v3258, %v3260
        %v3262 = vrot.slane %v3141, 1
        %v3263 = vrot.slane %v3142, 1
        %v3264 = vsel %vm1005, %v3262, %v3263
        %v3265 = vrot.slane %v3143, 1
        %v3266 = vsel %vm1005, %v3263, %v3265
        %v3298 = vadd.f32 %v2834, %v3191
        %v3299 = vadd.f32 %v2835, %v3194
        %v3300 = vadd.f32 %v2836, %v3196
        %v3301 = vadd.f32 %v2837, %v3199
        %v3302 = vadd.f32 %v2838, %v3201
        %v3303 = vadd.f32 %v2839, %v3204
        %v3304 = vadd.f32 %v2840, %v3206
        %v3305 = vadd.f32 %v2841, %v3209
        %v3306 = vadd.f32 %v2842, %v3211
        %v3307 = vadd.f32 %v2843, %v3214
        %v3308 = vadd.f32 %v2844, %v3216
        %v3309 = vadd.f32 %v2845, %v3219
        %v3310 = vadd.f32 %v2846, %v3221
        %v3311 = vadd.f32 %v2847, %v3224
        %v3312 = vadd.f32 %v2848, %v3226
        %v3313 = vadd.f32 %v2849, %v3229
        %v3314 = vadd.f32 %v2850, %v3231
        %v3315 = vadd.f32 %v2851, %v3234
        %v3316 = vadd.f32 %v2852, %v3236
        %v3317 = vadd.f32 %v2853, %v3239
        %v3318 = vadd.f32 %v2854, %v3241
        %v3319 = vadd.f32 %v2855, %v3244
        %v3320 = vadd.f32 %v2856, %v3246
        %v3321 = vadd.f32 %v2857, %v3249
        %v3322 = vadd.f32 %v2858, %v3251
        %v3323 = vadd.f32 %v2859, %v3254
        %v3324 = vadd.f32 %v2860, %v3256
        %v3325 = vadd.f32 %v2861, %v3259
        %v3326 = vadd.f32 %v2862, %v3261
        %v3327 = vadd.f32 %v2863, %v3264
        %v3328 = vadd.f32 %v2864, %v3266
        %v3329 = vperm.slane %v2735, 2
        %v3330 = vmul.f32 %v3329, 0.0
        %v3331 = vmul.f32 %v2703, %v3329
        %v3332 = vmul.f32 %v2609, %v3329
        %v3333 = vmul.f32 %v2719, %v3329
        %v3334 = vmul.f32 %v2704, %v3329
        %v3335 = vmul.f32 %v2612, %v3329
        %v3336 = vmul.f32 %v2720, %v3329
        %v3337 = vmul.f32 %v2705, %v3329
        %v3338 = vmul.f32 %v2615, %v3329
        %v3339 = vmul.f32 %v2721, %v3329
        %v3340 = vmul.f32 %v2706, %v3329
        %v3341 = vmul.f32 %v2618, %v3329
        %v3342 = vmul.f32 %v2722, %v3329
        %v3343 = vmul.f32 %v2707, %v3329
        %v3344 = vmul.f32 %v2621, %v3329
        %v3345 = vmul.f32 %v2723, %v3329
        %v3346 = vmul.f32 %v2708, %v3329
        %v3347 = vmul.f32 %v2624, %v3329
        %v3348 = vmul.f32 %v2724, %v3329
        %v3349 = vmul.f32 %v2709, %v3329
        %v3350 = vmul.f32 %v2627, %v3329
        %v3351 = vmul.f32 %v2725, %v3329
        %v3352 = vmul.f32 %v2710, %v3329
        %v3353 = vmul.f32 %v2630, %v3329
        %v3354 = vmul.f32 %v2726, %v3329
        %v3355 = vmul.f32 %v2711, %v3329
        %v3356 = vmul.f32 %v2633, %v3329
        %v3357 = vmul.f32 %v2727, %v3329
        %v3358 = vmul.f32 %v2712, %v3329
        %v3359 = vmul.f32 %v2636, %v3329
        %v3360 = vmul.f32 %v2728, %v3329
        %v3361 = vmul.f32 %v2713, %v3329
        %v3362 = vmul.f32 %v2639, %v3329
        %v3363 = vmul.f32 %v2729, %v3329
        %v3364 = vmul.f32 %v2714, %v3329
        %v3365 = vmul.f32 %v2642, %v3329
        %v3366 = vmul.f32 %v2730, %v3329
        %v3367 = vmul.f32 %v2715, %v3329
        %v3368 = vmul.f32 %v2645, %v3329
        %v3369 = vmul.f32 %v2731, %v3329
        %v3370 = vmul.f32 %v2716, %v3329
        %v3371 = vmul.f32 %v2648, %v3329
        %v3372 = vmul.f32 %v2732, %v3329
        %v3373 = vmul.f32 %v2717, %v3329
        %v3374 = vmul.f32 %v2651, %v3329
        %v3375 = vmul.f32 %v2733, %v3329
        %v3422 = vrot.slane %v3330, 2
        %v3423 = vsel %vm1187, %v3422, %v3422
        %v3424 = vrot.slane %v3331, 2
        %v3425 = vrot.slane %v3332, 2
        %v3426 = vsel %vm1187, %v3424, %v3425
        %v3427 = vrot.slane %v3333, 2
        %v3428 = vsel %vm1187, %v3425, %v3427
        %v3429 = vrot.slane %v3334, 2
        %v3430 = vrot.slane %v3335, 2
        %v3431 = vsel %vm1187, %v3429, %v3430
        %v3432 = vrot.slane %v3336, 2
        %v3433 = vsel %vm1187, %v3430, %v3432
        %v3434 = vrot.slane %v3337, 2
        %v3435 = vrot.slane %v3338, 2
        %v3436 = vsel %vm1187, %v3434, %v3435
        %v3437 = vrot.slane %v3339, 2
        %v3438 = vsel %vm1187, %v3435, %v3437
        %v3439 = vrot.slane %v3340, 2
        %v3440 = vrot.slane %v3341, 2
        %v3441 = vsel %vm1187, %v3439, %v3440
        %v3442 = vrot.slane %v3342, 2
        %v3443 = vsel %vm1187, %v3440, %v3442
        %v3444 = vrot.slane %v3343, 2
        %v3445 = vrot.slane %v3344, 2
        %v3446 = vsel %vm1187, %v3444, %v3445
        %v3447 = vrot.slane %v3345, 2
        %v3448 = vsel %vm1187, %v3445, %v3447
        %v3449 = vrot.slane %v3346, 2
        %v3450 = vrot.slane %v3347, 2
        %v3451 = vsel %vm1187, %v3449, %v3450
        %v3452 = vrot.slane %v3348, 2
        %v3453 = vsel %vm1187, %v3450, %v3452
        %v3454 = vrot.slane %v3349, 2
        %v3455 = vrot.slane %v3350, 2
        %v3456 = vsel %vm1187, %v3454, %v3455
        %v3457 = vrot.slane %v3351, 2
        %v3458 = vsel %vm1187, %v3455, %v3457
        %v3459 = vrot.slane %v3352, 2
        %v3460 = vrot.slane %v3353, 2
        %v3461 = vsel %vm1187, %v3459, %v3460
        %v3462 = vrot.slane %v3354, 2
        %v3463 = vsel %vm1187, %v3460, %v3462
        %v3464 = vrot.slane %v3355, 2
        %v3465 = vrot.slane %v3356, 2
        %v3466 = vsel %vm1187, %v3464, %v3465
        %v3467 = vrot.slane %v3357, 2
        %v3468 = vsel %vm1187, %v3465, %v3467
        %v3469 = vrot.slane %v3358, 2
        %v3470 = vrot.slane %v3359, 2
        %v3471 = vsel %vm1187, %v3469, %v3470
        %v3472 = vrot.slane %v3360, 2
        %v3473 = vsel %vm1187, %v3470, %v3472
        %v3474 = vrot.slane %v3361, 2
        %v3475 = vrot.slane %v3362, 2
        %v3476 = vsel %vm1187, %v3474, %v3475
        %v3477 = vrot.slane %v3363, 2
        %v3478 = vsel %vm1187, %v3475, %v3477
        %v3479 = vrot.slane %v3364, 2
        %v3480 = vrot.slane %v3365, 2
        %v3481 = vsel %vm1187, %v3479, %v3480
        %v3482 = vrot.slane %v3366, 2
        %v3483 = vsel %vm1187, %v3480, %v3482
        %v3484 = vrot.slane %v3367, 2
        %v3485 = vrot.slane %v3368, 2
        %v3486 = vsel %vm1187, %v3484, %v3485
        %v3487 = vrot.slane %v3369, 2
        %v3488 = vsel %vm1187, %v3485, %v3487
        %v3489 = vrot.slane %v3370, 2
        %v3490 = vrot.slane %v3371, 2
        %v3491 = vsel %vm1187, %v3489, %v3490
        %v3492 = vrot.slane %v3372, 2
        %v3493 = vsel %vm1187, %v3490, %v3492
        %v3494 = vrot.slane %v3373, 2
        %v3495 = vrot.slane %v3374, 2
        %v3496 = vsel %vm1187, %v3494, %v3495
        %v3497 = vrot.slane %v3375, 2
        %v3498 = vsel %vm1187, %v3495, %v3497
        %v3530 = vadd.f32 %v3066, %v3423
        %v3531 = vadd.f32 %v3067, %v3426
        %v3532 = vadd.f32 %v3068, %v3428
        %v3533 = vadd.f32 %v3069, %v3431
        %v3534 = vadd.f32 %v3070, %v3433
        %v3535 = vadd.f32 %v3071, %v3436
        %v3536 = vadd.f32 %v3072, %v3438
        %v3537 = vadd.f32 %v3073, %v3441
        %v3538 = vadd.f32 %v3074, %v3443
        %v3539 = vadd.f32 %v3075, %v3446
        %v3540 = vadd.f32 %v3076, %v3448
        %v3541 = vadd.f32 %v3077, %v3451
        %v3542 = vadd.f32 %v3078, %v3453
        %v3543 = vadd.f32 %v3079, %v3456
        %v3544 = vadd.f32 %v3080, %v3458
        %v3545 = vadd.f32 %v3081, %v3461
        %v3546 = vadd.f32 %v3082, %v3463
        %v3547 = vadd.f32 %v3083, %v3466
        %v3548 = vadd.f32 %v3084, %v3468
        %v3549 = vadd.f32 %v3085, %v3471
        %v3550 = vadd.f32 %v3086, %v3473
        %v3551 = vadd.f32 %v3087, %v3476
        %v3552 = vadd.f32 %v3088, %v3478
        %v3553 = vadd.f32 %v3089, %v3481
        %v3554 = vadd.f32 %v3090, %v3483
        %v3555 = vadd.f32 %v3091, %v3486
        %v3556 = vadd.f32 %v3092, %v3488
        %v3557 = vadd.f32 %v3093, %v3491
        %v3558 = vadd.f32 %v3094, %v3493
        %v3559 = vadd.f32 %v3095, %v3496
        %v3560 = vadd.f32 %v3096, %v3498
        %v3561 = vperm.slane %v2737, 2
        %v3562 = vmul.f32 %v3561, 0.0
        %v3563 = vmul.f32 %v2703, %v3561
        %v3564 = vmul.f32 %v2609, %v3561
        %v3565 = vmul.f32 %v2719, %v3561
        %v3566 = vmul.f32 %v2704, %v3561
        %v3567 = vmul.f32 %v2612, %v3561
        %v3568 = vmul.f32 %v2720, %v3561
        %v3569 = vmul.f32 %v2705, %v3561
        %v3570 = vmul.f32 %v2615, %v3561
        %v3571 = vmul.f32 %v2721, %v3561
        %v3572 = vmul.f32 %v2706, %v3561
        %v3573 = vmul.f32 %v2618, %v3561
        %v3574 = vmul.f32 %v2722, %v3561
        %v3575 = vmul.f32 %v2707, %v3561
        %v3576 = vmul.f32 %v2621, %v3561
        %v3577 = vmul.f32 %v2723, %v3561
        %v3578 = vmul.f32 %v2708, %v3561
        %v3579 = vmul.f32 %v2624, %v3561
        %v3580 = vmul.f32 %v2724, %v3561
        %v3581 = vmul.f32 %v2709, %v3561
        %v3582 = vmul.f32 %v2627, %v3561
        %v3583 = vmul.f32 %v2725, %v3561
        %v3584 = vmul.f32 %v2710, %v3561
        %v3585 = vmul.f32 %v2630, %v3561
        %v3586 = vmul.f32 %v2726, %v3561
        %v3587 = vmul.f32 %v2711, %v3561
        %v3588 = vmul.f32 %v2633, %v3561
        %v3589 = vmul.f32 %v2727, %v3561
        %v3590 = vmul.f32 %v2712, %v3561
        %v3591 = vmul.f32 %v2636, %v3561
        %v3592 = vmul.f32 %v2728, %v3561
        %v3593 = vmul.f32 %v2713, %v3561
        %v3594 = vmul.f32 %v2639, %v3561
        %v3595 = vmul.f32 %v2729, %v3561
        %v3596 = vmul.f32 %v2714, %v3561
        %v3597 = vmul.f32 %v2642, %v3561
        %v3598 = vmul.f32 %v2730, %v3561
        %v3599 = vmul.f32 %v2715, %v3561
        %v3600 = vmul.f32 %v2645, %v3561
        %v3601 = vmul.f32 %v2731, %v3561
        %v3602 = vmul.f32 %v2716, %v3561
        %v3603 = vmul.f32 %v2648, %v3561
        %v3604 = vmul.f32 %v2732, %v3561
        %v3605 = vmul.f32 %v2717, %v3561
        %v3606 = vmul.f32 %v2651, %v3561
        %v3607 = vmul.f32 %v2733, %v3561
        %v3654 = vrot.slane %v3562, 2
        %v3655 = vsel %vm1187, %v3654, %v3654
        %v3656 = vrot.slane %v3563, 2
        %v3657 = vrot.slane %v3564, 2
        %v3658 = vsel %vm1187, %v3656, %v3657
        %v3659 = vrot.slane %v3565, 2
        %v3660 = vsel %vm1187, %v3657, %v3659
        %v3661 = vrot.slane %v3566, 2
        %v3662 = vrot.slane %v3567, 2
        %v3663 = vsel %vm1187, %v3661, %v3662
        %v3664 = vrot.slane %v3568, 2
        %v3665 = vsel %vm1187, %v3662, %v3664
        %v3666 = vrot.slane %v3569, 2
        %v3667 = vrot.slane %v3570, 2
        %v3668 = vsel %vm1187, %v3666, %v3667
        %v3669 = vrot.slane %v3571, 2
        %v3670 = vsel %vm1187, %v3667, %v3669
        %v3671 = vrot.slane %v3572, 2
        %v3672 = vrot.slane %v3573, 2
        %v3673 = vsel %vm1187, %v3671, %v3672
        %v3674 = vrot.slane %v3574, 2
        %v3675 = vsel %vm1187, %v3672, %v3674
        %v3676 = vrot.slane %v3575, 2
        %v3677 = vrot.slane %v3576, 2
        %v3678 = vsel %vm1187, %v3676, %v3677
        %v3679 = vrot.slane %v3577, 2
        %v3680 = vsel %vm1187, %v3677, %v3679
        %v3681 = vrot.slane %v3578, 2
        %v3682 = vrot.slane %v3579, 2
        %v3683 = vsel %vm1187, %v3681, %v3682
        %v3684 = vrot.slane %v3580, 2
        %v3685 = vsel %vm1187, %v3682, %v3684
        %v3686 = vrot.slane %v3581, 2
        %v3687 = vrot.slane %v3582, 2
        %v3688 = vsel %vm1187, %v3686, %v3687
        %v3689 = vrot.slane %v3583, 2
        %v3690 = vsel %vm1187, %v3687, %v3689
        %v3691 = vrot.slane %v3584, 2
        %v3692 = vrot.slane %v3585, 2
        %v3693 = vsel %vm1187, %v3691, %v3692
        %v3694 = vrot.slane %v3586, 2
        %v3695 = vsel %vm1187, %v3692, %v3694
        %v3696 = vrot.slane %v3587, 2
        %v3697 = vrot.slane %v3588, 2
        %v3698 = vsel %vm1187, %v3696, %v3697
        %v3699 = vrot.slane %v3589, 2
        %v3700 = vsel %vm1187, %v3697, %v3699
        %v3701 = vrot.slane %v3590, 2
        %v3702 = vrot.slane %v3591, 2
        %v3703 = vsel %vm1187, %v3701, %v3702
        %v3704 = vrot.slane %v3592, 2
        %v3705 = vsel %vm1187, %v3702, %v3704
        %v3706 = vrot.slane %v3593, 2
        %v3707 = vrot.slane %v3594, 2
        %v3708 = vsel %vm1187, %v3706, %v3707
        %v3709 = vrot.slane %v3595, 2
        %v3710 = vsel %vm1187, %v3707, %v3709
        %v3711 = vrot.slane %v3596, 2
        %v3712 = vrot.slane %v3597, 2
        %v3713 = vsel %vm1187, %v3711, %v3712
        %v3714 = vrot.slane %v3598, 2
        %v3715 = vsel %vm1187, %v3712, %v3714
        %v3716 = vrot.slane %v3599, 2
        %v3717 = vrot.slane %v3600, 2
        %v3718 = vsel %vm1187, %v3716, %v3717
        %v3719 = vrot.slane %v3601, 2
        %v3720 = vsel %vm1187, %v3717, %v3719
        %v3721 = vrot.slane %v3602, 2
        %v3722 = vrot.slane %v3603, 2
        %v3723 = vsel %vm1187, %v3721, %v3722
        %v3724 = vrot.slane %v3604, 2
        %v3725 = vsel %vm1187, %v3722, %v3724
        %v3726 = vrot.slane %v3605, 2
        %v3727 = vrot.slane %v3606, 2
        %v3728 = vsel %vm1187, %v3726, %v3727
        %v3729 = vrot.slane %v3607, 2
        %v3730 = vsel %vm1187, %v3727, %v3729
        %v3762 = vadd.f32 %v3298, %v3655
        %v3763 = vadd.f32 %v3299, %v3658
        %v3764 = vadd.f32 %v3300, %v3660
        %v3765 = vadd.f32 %v3301, %v3663
        %v3766 = vadd.f32 %v3302, %v3665
        %v3767 = vadd.f32 %v3303, %v3668
        %v3768 = vadd.f32 %v3304, %v3670
        %v3769 = vadd.f32 %v3305, %v3673
        %v3770 = vadd.f32 %v3306, %v3675
        %v3771 = vadd.f32 %v3307, %v3678
        %v3772 = vadd.f32 %v3308, %v3680
        %v3773 = vadd.f32 %v3309, %v3683
        %v3774 = vadd.f32 %v3310, %v3685
        %v3775 = vadd.f32 %v3311, %v3688
        %v3776 = vadd.f32 %v3312, %v3690
        %v3777 = vadd.f32 %v3313, %v3693
        %v3778 = vadd.f32 %v3314, %v3695
        %v3779 = vadd.f32 %v3315, %v3698
        %v3780 = vadd.f32 %v3316, %v3700
        %v3781 = vadd.f32 %v3317, %v3703
        %v3782 = vadd.f32 %v3318, %v3705
        %v3783 = vadd.f32 %v3319, %v3708
        %v3784 = vadd.f32 %v3320, %v3710
        %v3785 = vadd.f32 %v3321, %v3713
        %v3786 = vadd.f32 %v3322, %v3715
        %v3787 = vadd.f32 %v3323, %v3718
        %v3788 = vadd.f32 %v3324, %v3720
        %v3789 = vadd.f32 %v3325, %v3723
        %v3790 = vadd.f32 %v3326, %v3725
        %v3791 = vadd.f32 %v3327, %v3728
        %v3792 = vadd.f32 %v3328, %v3730
        %v3793 = vperm.slane %v2735, 3
        %v3794 = vmul.f32 %v2703, %v3793
        %v3795 = vmul.f32 %v2609, %v3793
        %v3796 = vmul.f32 %v2704, %v3793
        %v3797 = vmul.f32 %v2612, %v3793
        %v3798 = vmul.f32 %v2705, %v3793
        %v3799 = vmul.f32 %v2615, %v3793
        %v3800 = vmul.f32 %v2706, %v3793
        %v3801 = vmul.f32 %v2618, %v3793
        %v3802 = vmul.f32 %v2707, %v3793
        %v3803 = vmul.f32 %v2621, %v3793
        %v3804 = vmul.f32 %v2708, %v3793
        %v3805 = vmul.f32 %v2624, %v3793
        %v3806 = vmul.f32 %v2709, %v3793
        %v3807 = vmul.f32 %v2627, %v3793
        %v3808 = vmul.f32 %v2710, %v3793
        %v3809 = vmul.f32 %v2630, %v3793
        %v3810 = vmul.f32 %v2711, %v3793
        %v3811 = vmul.f32 %v2633, %v3793
        %v3812 = vmul.f32 %v2712, %v3793
        %v3813 = vmul.f32 %v2636, %v3793
        %v3814 = vmul.f32 %v2713, %v3793
        %v3815 = vmul.f32 %v2639, %v3793
        %v3816 = vmul.f32 %v2714, %v3793
        %v3817 = vmul.f32 %v2642, %v3793
        %v3818 = vmul.f32 %v2715, %v3793
        %v3819 = vmul.f32 %v2645, %v3793
        %v3820 = vmul.f32 %v2716, %v3793
        %v3821 = vmul.f32 %v2648, %v3793
        %v3822 = vmul.f32 %v2717, %v3793
        %v3823 = vmul.f32 %v2651, %v3793
        %v3824 = vmul.f32 %v2718, %v3793
        %v3825 = vmul.f32 %v2654, %v3793
        %v3826 = vadd.f32 %v3530, %v3794
        %v3827 = vadd.f32 %v3530, %v3795
        %v3828 = vadd.f32 %v3531, %v3796
        %v3829 = vadd.f32 %v3532, %v3797
        %v3830 = vadd.f32 %v3533, %v3798
        %v3831 = vadd.f32 %v3534, %v3799
        %v3832 = vadd.f32 %v3535, %v3800
        %v3833 = vadd.f32 %v3536, %v3801
        %v3834 = vadd.f32 %v3537, %v3802
        %v3835 = vadd.f32 %v3538, %v3803
        %v3836 = vadd.f32 %v3539, %v3804
        %v3837 = vadd.f32 %v3540, %v3805
        %v3838 = vadd.f32 %v3541, %v3806
        %v3839 = vadd.f32 %v3542, %v3807
        %v3840 = vadd.f32 %v3543, %v3808
        %v3841 = vadd.f32 %v3544, %v3809
        %v3842 = vadd.f32 %v3545, %v3810
        %v3843 = vadd.f32 %v3546, %v3811
        %v3844 = vadd.f32 %v3547, %v3812
        %v3845 = vadd.f32 %v3548, %v3813
        %v3846 = vadd.f32 %v3549, %v3814
        %v3847 = vadd.f32 %v3550, %v3815
        %v3848 = vadd.f32 %v3551, %v3816
        %v3849 = vadd.f32 %v3552, %v3817
        %v3850 = vadd.f32 %v3553, %v3818
        %v3851 = vadd.f32 %v3554, %v3819
        %v3852 = vadd.f32 %v3555, %v3820
        %v3853 = vadd.f32 %v3556, %v3821
        %v3854 = vadd.f32 %v3557, %v3822
        %v3855 = vadd.f32 %v3558, %v3823
        %v3856 = vadd.f32 %v3559, %v3824
        %v3857 = vadd.f32 %v3560, %v3825
        %v3858 = vperm.slane %v2737, 3
        %v3859 = vmul.f32 %v2703, %v3858
        %v3860 = vmul.f32 %v2609, %v3858
        %v3861 = vmul.f32 %v2704, %v3858
        %v3862 = vmul.f32 %v2612, %v3858
        %v3863 = vmul.f32 %v2705, %v3858
        %v3864 = vmul.f32 %v2615, %v3858
        %v3865 = vmul.f32 %v2706, %v3858
        %v3866 = vmul.f32 %v2618, %v3858
        %v3867 = vmul.f32 %v2707, %v3858
        %v3868 = vmul.f32 %v2621, %v3858
        %v3869 = vmul.f32 %v2708, %v3858
        %v3870 = vmul.f32 %v2624, %v3858
        %v3871 = vmul.f32 %v2709, %v3858
        %v3872 = vmul.f32 %v2627, %v3858
        %v3873 = vmul.f32 %v2710, %v3858
        %v3874 = vmul.f32 %v2630, %v3858
        %v3875 = vmul.f32 %v2711, %v3858
        %v3876 = vmul.f32 %v2633, %v3858
        %v3877 = vmul.f32 %v2712, %v3858
        %v3878 = vmul.f32 %v2636, %v3858
        %v3879 = vmul.f32 %v2713, %v3858
        %v3880 = vmul.f32 %v2639, %v3858
        %v3881 = vmul.f32 %v2714, %v3858
        %v3882 = vmul.f32 %v2642, %v3858
        %v3883 = vmul.f32 %v2715, %v3858
        %v3884 = vmul.f32 %v2645, %v3858
        %v3885 = vmul.f32 %v2716, %v3858
        %v3886 = vmul.f32 %v2648, %v3858
        %v3887 = vmul.f32 %v2717, %v3858
        %v3888 = vmul.f32 %v2651, %v3858
        %v3889 = vmul.f32 %v2718, %v3858
        %v3890 = vmul.f32 %v2654, %v3858
        %v3891 = vadd.f32 %v3762, %v3859
        %v3892 = vadd.f32 %v3762, %v3860
        %v3893 = vadd.f32 %v3763, %v3861
        %v3894 = vadd.f32 %v3764, %v3862
        %v3895 = vadd.f32 %v3765, %v3863
        %v3896 = vadd.f32 %v3766, %v3864
        %v3897 = vadd.f32 %v3767, %v3865
        %v3898 = vadd.f32 %v3768, %v3866
        %v3899 = vadd.f32 %v3769, %v3867
        %v3900 = vadd.f32 %v3770, %v3868
        %v3901 = vadd.f32 %v3771, %v3869
        %v3902 = vadd.f32 %v3772, %v3870
        %v3903 = vadd.f32 %v3773, %v3871
        %v3904 = vadd.f32 %v3774, %v3872
        %v3905 = vadd.f32 %v3775, %v3873
        %v3906 = vadd.f32 %v3776, %v3874
        %v3907 = vadd.f32 %v3777, %v3875
        %v3908 = vadd.f32 %v3778, %v3876
        %v3909 = vadd.f32 %v3779, %v3877
        %v3910 = vadd.f32 %v3780, %v3878
        %v3911 = vadd.f32 %v3781, %v3879
        %v3912 = vadd.f32 %v3782, %v3880
        %v3913 = vadd.f32 %v3783, %v3881
        %v3914 = vadd.f32 %v3784, %v3882
        %v3915 = vadd.f32 %v3785, %v3883
        %v3916 = vadd.f32 %v3786, %v3884
        %v3917 = vadd.f32 %v3787, %v3885
        %v3918 = vadd.f32 %v3788, %v3886
        %v3919 = vadd.f32 %v3789, %v3887
        %v3920 = vadd.f32 %v3790, %v3888
        %v3921 = vadd.f32 %v3791, %v3889
        %v3922 = vadd.f32 %v3792, %v3890
        %v3923 = vperm.slane %v2735, 4
        %v3924 = vmul.f32 %v2703, %v3923
        %v3925 = vmul.f32 %v2609, %v3923
        %v3926 = vmul.f32 %v2719, %v3923
        %v3927 = vmul.f32 %v2704, %v3923
        %v3928 = vmul.f32 %v2612, %v3923
        %v3929 = vmul.f32 %v2720, %v3923
        %v3930 = vmul.f32 %v2705, %v3923
        %v3931 = vmul.f32 %v2615, %v3923
        %v3932 = vmul.f32 %v2721, %v3923
        %v3933 = vmul.f32 %v2706, %v3923
        %v3934 = vmul.f32 %v2618, %v3923
        %v3935 = vmul.f32 %v2722, %v3923
        %v3936 = vmul.f32 %v2707, %v3923
        %v3937 = vmul.f32 %v2621, %v3923
        %v3938 = vmul.f32 %v2723, %v3923
        %v3939 = vmul.f32 %v2708, %v3923
        %v3940 = vmul.f32 %v2624, %v3923
        %v3941 = vmul.f32 %v2724, %v3923
        %v3942 = vmul.f32 %v2709, %v3923
        %v3943 = vmul.f32 %v2627, %v3923
        %v3944 = vmul.f32 %v2725, %v3923
        %v3945 = vmul.f32 %v2710, %v3923
        %v3946 = vmul.f32 %v2630, %v3923
        %v3947 = vmul.f32 %v2726, %v3923
        %v3948 = vmul.f32 %v2711, %v3923
        %v3949 = vmul.f32 %v2633, %v3923
        %v3950 = vmul.f32 %v2727, %v3923
        %v3951 = vmul.f32 %v2712, %v3923
        %v3952 = vmul.f32 %v2636, %v3923
        %v3953 = vmul.f32 %v2728, %v3923
        %v3954 = vmul.f32 %v2713, %v3923
        %v3955 = vmul.f32 %v2639, %v3923
        %v3956 = vmul.f32 %v2729, %v3923
        %v3957 = vmul.f32 %v2714, %v3923
        %v3958 = vmul.f32 %v2642, %v3923
        %v3959 = vmul.f32 %v2730, %v3923
        %v3960 = vmul.f32 %v2715, %v3923
        %v3961 = vmul.f32 %v2645, %v3923
        %v3962 = vmul.f32 %v2731, %v3923
        %v3963 = vmul.f32 %v2716, %v3923
        %v3964 = vmul.f32 %v2648, %v3923
        %v3965 = vmul.f32 %v2732, %v3923
        %v3966 = vmul.f32 %v2717, %v3923
        %v3967 = vmul.f32 %v2651, %v3923
        %v3968 = vmul.f32 %v2733, %v3923
        %v3969 = vmul.f32 %v2718, %v3923
        %v3970 = vmul.f32 %v2654, %v3923
        %v3971 = vmul.f32 %v2734, %v3923
        %v4020 = vrot.slane %v3924, 1
        %v4021 = vrot.slane %v3925, 1
        %v4022 = vsel %vm1005, %v4020, %v4021
        %v4023 = vrot.slane %v3926, 1
        %v4024 = vsel %vm1005, %v4021, %v4023
        %v4025 = vrot.slane %v3927, 1
        %v4026 = vrot.slane %v3928, 1
        %v4027 = vsel %vm1005, %v4025, %v4026
        %v4028 = vrot.slane %v3929, 1
        %v4029 = vsel %vm1005, %v4026, %v4028
        %v4030 = vrot.slane %v3930, 1
        %v4031 = vrot.slane %v3931, 1
        %v4032 = vsel %vm1005, %v4030, %v4031
        %v4033 = vrot.slane %v3932, 1
        %v4034 = vsel %vm1005, %v4031, %v4033
        %v4035 = vrot.slane %v3933, 1
        %v4036 = vrot.slane %v3934, 1
        %v4037 = vsel %vm1005, %v4035, %v4036
        %v4038 = vrot.slane %v3935, 1
        %v4039 = vsel %vm1005, %v4036, %v4038
        %v4040 = vrot.slane %v3936, 1
        %v4041 = vrot.slane %v3937, 1
        %v4042 = vsel %vm1005, %v4040, %v4041
        %v4043 = vrot.slane %v3938, 1
        %v4044 = vsel %vm1005, %v4041, %v4043
        %v4045 = vrot.slane %v3939, 1
        %v4046 = vrot.slane %v3940, 1
        %v4047 = vsel %vm1005, %v4045, %v4046
        %v4048 = vrot.slane %v3941, 1
        %v4049 = vsel %vm1005, %v4046, %v4048
        %v4050 = vrot.slane %v3942, 1
        %v4051 = vrot.slane %v3943, 1
        %v4052 = vsel %vm1005, %v4050, %v4051
        %v4053 = vrot.slane %v3944, 1
        %v4054 = vsel %vm1005, %v4051, %v4053
        %v4055 = vrot.slane %v3945, 1
        %v4056 = vrot.slane %v3946, 1
        %v4057 = vsel %vm1005, %v4055, %v4056
        %v4058 = vrot.slane %v3947, 1
        %v4059 = vsel %vm1005, %v4056, %v4058
        %v4060 = vrot.slane %v3948, 1
        %v4061 = vrot.slane %v3949, 1
        %v4062 = vsel %vm1005, %v4060, %v4061
        %v4063 = vrot.slane %v3950, 1
        %v4064 = vsel %vm1005, %v4061, %v4063
        %v4065 = vrot.slane %v3951, 1
        %v4066 = vrot.slane %v3952, 1
        %v4067 = vsel %vm1005, %v4065, %v4066
        %v4068 = vrot.slane %v3953, 1
        %v4069 = vsel %vm1005, %v4066, %v4068
        %v4070 = vrot.slane %v3954, 1
        %v4071 = vrot.slane %v3955, 1
        %v4072 = vsel %vm1005, %v4070, %v4071
        %v4073 = vrot.slane %v3956, 1
        %v4074 = vsel %vm1005, %v4071, %v4073
        %v4075 = vrot.slane %v3957, 1
        %v4076 = vrot.slane %v3958, 1
        %v4077 = vsel %vm1005, %v4075, %v4076
        %v4078 = vrot.slane %v3959, 1
        %v4079 = vsel %vm1005, %v4076, %v4078
        %v4080 = vrot.slane %v3960, 1
        %v4081 = vrot.slane %v3961, 1
        %v4082 = vsel %vm1005, %v4080, %v4081
        %v4083 = vrot.slane %v3962, 1
        %v4084 = vsel %vm1005, %v4081, %v4083
        %v4085 = vrot.slane %v3963, 1
        %v4086 = vrot.slane %v3964, 1
        %v4087 = vsel %vm1005, %v4085, %v4086
        %v4088 = vrot.slane %v3965, 1
        %v4089 = vsel %vm1005, %v4086, %v4088
        %v4090 = vrot.slane %v3966, 1
        %v4091 = vrot.slane %v3967, 1
        %v4092 = vsel %vm1005, %v4090, %v4091
        %v4093 = vrot.slane %v3968, 1
        %v4094 = vsel %vm1005, %v4091, %v4093
        %v4095 = vrot.slane %v3969, 1
        %v4096 = vrot.slane %v3970, 1
        %v4097 = vsel %vm1005, %v4095, %v4096
        %v4098 = vrot.slane %v3971, 1
        %v4099 = vsel %vm1005, %v4096, %v4098
        %v4132 = vadd.f32 %v3826, %v4022
        %v4133 = vadd.f32 %v3827, %v4024
        %v4134 = vadd.f32 %v3828, %v4027
        %v4135 = vadd.f32 %v3829, %v4029
        %v4136 = vadd.f32 %v3830, %v4032
        %v4137 = vadd.f32 %v3831, %v4034
        %v4138 = vadd.f32 %v3832, %v4037
        %v4139 = vadd.f32 %v3833, %v4039
        %v4140 = vadd.f32 %v3834, %v4042
        %v4141 = vadd.f32 %v3835, %v4044
        %v4142 = vadd.f32 %v3836, %v4047
        %v4143 = vadd.f32 %v3837, %v4049
        %v4144 = vadd.f32 %v3838, %v4052
        %v4145 = vadd.f32 %v3839, %v4054
        %v4146 = vadd.f32 %v3840, %v4057
        %v4147 = vadd.f32 %v3841, %v4059
        %v4148 = vadd.f32 %v3842, %v4062
        %v4149 = vadd.f32 %v3843, %v4064
        %v4150 = vadd.f32 %v3844, %v4067
        %v4151 = vadd.f32 %v3845, %v4069
        %v4152 = vadd.f32 %v3846, %v4072
        %v4153 = vadd.f32 %v3847, %v4074
        %v4154 = vadd.f32 %v3848, %v4077
        %v4155 = vadd.f32 %v3849, %v4079
        %v4156 = vadd.f32 %v3850, %v4082
        %v4157 = vadd.f32 %v3851, %v4084
        %v4158 = vadd.f32 %v3852, %v4087
        %v4159 = vadd.f32 %v3853, %v4089
        %v4160 = vadd.f32 %v3854, %v4092
        %v4161 = vadd.f32 %v3855, %v4094
        %v4162 = vadd.f32 %v3856, %v4097
        %v4163 = vadd.f32 %v3857, %v4099
        %v4164 = vperm.slane %v2737, 4
        %v4165 = vmul.f32 %v2703, %v4164
        %v4166 = vmul.f32 %v2609, %v4164
        %v4167 = vmul.f32 %v2719, %v4164
        %v4168 = vmul.f32 %v2704, %v4164
        %v4169 = vmul.f32 %v2612, %v4164
        %v4170 = vmul.f32 %v2720, %v4164
        %v4171 = vmul.f32 %v2705, %v4164
        %v4172 = vmul.f32 %v2615, %v4164
        %v4173 = vmul.f32 %v2721, %v4164
        %v4174 = vmul.f32 %v2706, %v4164
        %v4175 = vmul.f32 %v2618, %v4164
        %v4176 = vmul.f32 %v2722, %v4164
        %v4177 = vmul.f32 %v2707, %v4164
        %v4178 = vmul.f32 %v2621, %v4164
        %v4179 = vmul.f32 %v2723, %v4164
        %v4180 = vmul.f32 %v2708, %v4164
        %v4181 = vmul.f32 %v2624, %v4164
        %v4182 = vmul.f32 %v2724, %v4164
        %v4183 = vmul.f32 %v2709, %v4164
        %v4184 = vmul.f32 %v2627, %v4164
        %v4185 = vmul.f32 %v2725, %v4164
        %v4186 = vmul.f32 %v2710, %v4164
        %v4187 = vmul.f32 %v2630, %v4164
        %v4188 = vmul.f32 %v2726, %v4164
        %v4189 = vmul.f32 %v2711, %v4164
        %v4190 = vmul.f32 %v2633, %v4164
        %v4191 = vmul.f32 %v2727, %v4164
        %v4192 = vmul.f32 %v2712, %v4164
        %v4193 = vmul.f32 %v2636, %v4164
        %v4194 = vmul.f32 %v2728, %v4164
        %v4195 = vmul.f32 %v2713, %v4164
        %v4196 = vmul.f32 %v2639, %v4164
        %v4197 = vmul.f32 %v2729, %v4164
        %v4198 = vmul.f32 %v2714, %v4164
        %v4199 = vmul.f32 %v2642, %v4164
        %v4200 = vmul.f32 %v2730, %v4164
        %v4201 = vmul.f32 %v2715, %v4164
        %v4202 = vmul.f32 %v2645, %v4164
        %v4203 = vmul.f32 %v2731, %v4164
        %v4204 = vmul.f32 %v2716, %v4164
        %v4205 = vmul.f32 %v2648, %v4164
        %v4206 = vmul.f32 %v2732, %v4164
        %v4207 = vmul.f32 %v2717, %v4164
        %v4208 = vmul.f32 %v2651, %v4164
        %v4209 = vmul.f32 %v2733, %v4164
        %v4210 = vmul.f32 %v2718, %v4164
        %v4211 = vmul.f32 %v2654, %v4164
        %v4212 = vmul.f32 %v2734, %v4164
        %v4261 = vrot.slane %v4165, 1
        %v4262 = vrot.slane %v4166, 1
        %v4263 = vsel %vm1005, %v4261, %v4262
        %v4264 = vrot.slane %v4167, 1
        %v4265 = vsel %vm1005, %v4262, %v4264
        %v4266 = vrot.slane %v4168, 1
        %v4267 = vrot.slane %v4169, 1
        %v4268 = vsel %vm1005, %v4266, %v4267
        %v4269 = vrot.slane %v4170, 1
        %v4270 = vsel %vm1005, %v4267, %v4269
        %v4271 = vrot.slane %v4171, 1
        %v4272 = vrot.slane %v4172, 1
        %v4273 = vsel %vm1005, %v4271, %v4272
        %v4274 = vrot.slane %v4173, 1
        %v4275 = vsel %vm1005, %v4272, %v4274
        %v4276 = vrot.slane %v4174, 1
        %v4277 = vrot.slane %v4175, 1
        %v4278 = vsel %vm1005, %v4276, %v4277
        %v4279 = vrot.slane %v4176, 1
        %v4280 = vsel %vm1005, %v4277, %v4279
        %v4281 = vrot.slane %v4177, 1
        %v4282 = vrot.slane %v4178, 1
        %v4283 = vsel %vm1005, %v4281, %v4282
        %v4284 = vrot.slane %v4179, 1
        %v4285 = vsel %vm1005, %v4282, %v4284
        %v4286 = vrot.slane %v4180, 1
        %v4287 = vrot.slane %v4181, 1
        %v4288 = vsel %vm1005, %v4286, %v4287
        %v4289 = vrot.slane %v4182, 1
        %v4290 = vsel %vm1005, %v4287, %v4289
        %v4291 = vrot.slane %v4183, 1
        %v4292 = vrot.slane %v4184, 1
        %v4293 = vsel %vm1005, %v4291, %v4292
        %v4294 = vrot.slane %v4185, 1
        %v4295 = vsel %vm1005, %v4292, %v4294
        %v4296 = vrot.slane %v4186, 1
        %v4297 = vrot.slane %v4187, 1
        %v4298 = vsel %vm1005, %v4296, %v4297
        %v4299 = vrot.slane %v4188, 1
        %v4300 = vsel %vm1005, %v4297, %v4299
        %v4301 = vrot.slane %v4189, 1
        %v4302 = vrot.slane %v4190, 1
        %v4303 = vsel %vm1005, %v4301, %v4302
        %v4304 = vrot.slane %v4191, 1
        %v4305 = vsel %vm1005, %v4302, %v4304
        %v4306 = vrot.slane %v4192, 1
        %v4307 = vrot.slane %v4193, 1
        %v4308 = vsel %vm1005, %v4306, %v4307
        %v4309 = vrot.slane %v4194, 1
        %v4310 = vsel %vm1005, %v4307, %v4309
        %v4311 = vrot.slane %v4195, 1
        %v4312 = vrot.slane %v4196, 1
        %v4313 = vsel %vm1005, %v4311, %v4312
        %v4314 = vrot.slane %v4197, 1
        %v4315 = vsel %vm1005, %v4312, %v4314
        %v4316 = vrot.slane %v4198, 1
        %v4317 = vrot.slane %v4199, 1
        %v4318 = vsel %vm1005, %v4316, %v4317
        %v4319 = vrot.slane %v4200, 1
        %v4320 = vsel %vm1005, %v4317, %v4319
        %v4321 = vrot.slane %v4201, 1
        %v4322 = vrot.slane %v4202, 1
        %v4323 = vsel %vm1005, %v4321, %v4322
        %v4324 = vrot.slane %v4203, 1
        %v4325 = vsel %vm1005, %v4322, %v4324
        %v4326 = vrot.slane %v4204, 1
        %v4327 = vrot.slane %v4205, 1
        %v4328 = vsel %vm1005, %v4326, %v4327
        %v4329 = vrot.slane %v4206, 1
        %v4330 = vsel %vm1005, %v4327, %v4329
        %v4331 = vrot.slane %v4207, 1
        %v4332 = vrot.slane %v4208, 1
        %v4333 = vsel %vm1005, %v4331, %v4332
        %v4334 = vrot.slane %v4209, 1
        %v4335 = vsel %vm1005, %v4332, %v4334
        %v4336 = vrot.slane %v4210, 1
        %v4337 = vrot.slane %v4211, 1
        %v4338 = vsel %vm1005, %v4336, %v4337
        %v4339 = vrot.slane %v4212, 1
        %v4340 = vsel %vm1005, %v4337, %v4339
        %v4373 = vadd.f32 %v3891, %v4263
        %v4374 = vadd.f32 %v3892, %v4265
        %v4375 = vadd.f32 %v3893, %v4268
        %v4376 = vadd.f32 %v3894, %v4270
        %v4377 = vadd.f32 %v3895, %v4273
        %v4378 = vadd.f32 %v3896, %v4275
        %v4379 = vadd.f32 %v3897, %v4278
        %v4380 = vadd.f32 %v3898, %v4280
        %v4381 = vadd.f32 %v3899, %v4283
        %v4382 = vadd.f32 %v3900, %v4285
        %v4383 = vadd.f32 %v3901, %v4288
        %v4384 = vadd.f32 %v3902, %v4290
        %v4385 = vadd.f32 %v3903, %v4293
        %v4386 = vadd.f32 %v3904, %v4295
        %v4387 = vadd.f32 %v3905, %v4298
        %v4388 = vadd.f32 %v3906, %v4300
        %v4389 = vadd.f32 %v3907, %v4303
        %v4390 = vadd.f32 %v3908, %v4305
        %v4391 = vadd.f32 %v3909, %v4308
        %v4392 = vadd.f32 %v3910, %v4310
        %v4393 = vadd.f32 %v3911, %v4313
        %v4394 = vadd.f32 %v3912, %v4315
        %v4395 = vadd.f32 %v3913, %v4318
        %v4396 = vadd.f32 %v3914, %v4320
        %v4397 = vadd.f32 %v3915, %v4323
        %v4398 = vadd.f32 %v3916, %v4325
        %v4399 = vadd.f32 %v3917, %v4328
        %v4400 = vadd.f32 %v3918, %v4330
        %v4401 = vadd.f32 %v3919, %v4333
        %v4402 = vadd.f32 %v3920, %v4335
        %v4403 = vadd.f32 %v3921, %v4338
        %v4404 = vadd.f32 %v3922, %v4340
        %v4405 = vperm.slane %v2735, 5
        %v4406 = vmul.f32 %v2703, %v4405
        %v4407 = vmul.f32 %v2609, %v4405
        %v4408 = vmul.f32 %v2719, %v4405
        %v4409 = vmul.f32 %v2704, %v4405
        %v4410 = vmul.f32 %v2612, %v4405
        %v4411 = vmul.f32 %v2720, %v4405
        %v4412 = vmul.f32 %v2705, %v4405
        %v4413 = vmul.f32 %v2615, %v4405
        %v4414 = vmul.f32 %v2721, %v4405
        %v4415 = vmul.f32 %v2706, %v4405
        %v4416 = vmul.f32 %v2618, %v4405
        %v4417 = vmul.f32 %v2722, %v4405
        %v4418 = vmul.f32 %v2707, %v4405
        %v4419 = vmul.f32 %v2621, %v4405
        %v4420 = vmul.f32 %v2723, %v4405
        %v4421 = vmul.f32 %v2708, %v4405
        %v4422 = vmul.f32 %v2624, %v4405
        %v4423 = vmul.f32 %v2724, %v4405
        %v4424 = vmul.f32 %v2709, %v4405
        %v4425 = vmul.f32 %v2627, %v4405
        %v4426 = vmul.f32 %v2725, %v4405
        %v4427 = vmul.f32 %v2710, %v4405
        %v4428 = vmul.f32 %v2630, %v4405
        %v4429 = vmul.f32 %v2726, %v4405
        %v4430 = vmul.f32 %v2711, %v4405
        %v4431 = vmul.f32 %v2633, %v4405
        %v4432 = vmul.f32 %v2727, %v4405
        %v4433 = vmul.f32 %v2712, %v4405
        %v4434 = vmul.f32 %v2636, %v4405
        %v4435 = vmul.f32 %v2728, %v4405
        %v4436 = vmul.f32 %v2713, %v4405
        %v4437 = vmul.f32 %v2639, %v4405
        %v4438 = vmul.f32 %v2729, %v4405
        %v4439 = vmul.f32 %v2714, %v4405
        %v4440 = vmul.f32 %v2642, %v4405
        %v4441 = vmul.f32 %v2730, %v4405
        %v4442 = vmul.f32 %v2715, %v4405
        %v4443 = vmul.f32 %v2645, %v4405
        %v4444 = vmul.f32 %v2731, %v4405
        %v4445 = vmul.f32 %v2716, %v4405
        %v4446 = vmul.f32 %v2648, %v4405
        %v4447 = vmul.f32 %v2732, %v4405
        %v4448 = vmul.f32 %v2717, %v4405
        %v4449 = vmul.f32 %v2651, %v4405
        %v4450 = vmul.f32 %v2733, %v4405
        %v4451 = vmul.f32 %v2718, %v4405
        %v4452 = vmul.f32 %v2654, %v4405
        %v4453 = vmul.f32 %v2734, %v4405
        %v4502 = vrot.slane %v4406, 2
        %v4503 = vrot.slane %v4407, 2
        %v4504 = vsel %vm1187, %v4502, %v4503
        %v4505 = vrot.slane %v4408, 2
        %v4506 = vsel %vm1187, %v4503, %v4505
        %v4507 = vrot.slane %v4409, 2
        %v4508 = vrot.slane %v4410, 2
        %v4509 = vsel %vm1187, %v4507, %v4508
        %v4510 = vrot.slane %v4411, 2
        %v4511 = vsel %vm1187, %v4508, %v4510
        %v4512 = vrot.slane %v4412, 2
        %v4513 = vrot.slane %v4413, 2
        %v4514 = vsel %vm1187, %v4512, %v4513
        %v4515 = vrot.slane %v4414, 2
        %v4516 = vsel %vm1187, %v4513, %v4515
        %v4517 = vrot.slane %v4415, 2
        %v4518 = vrot.slane %v4416, 2
        %v4519 = vsel %vm1187, %v4517, %v4518
        %v4520 = vrot.slane %v4417, 2
        %v4521 = vsel %vm1187, %v4518, %v4520
        %v4522 = vrot.slane %v4418, 2
        %v4523 = vrot.slane %v4419, 2
        %v4524 = vsel %vm1187, %v4522, %v4523
        %v4525 = vrot.slane %v4420, 2
        %v4526 = vsel %vm1187, %v4523, %v4525
        %v4527 = vrot.slane %v4421, 2
        %v4528 = vrot.slane %v4422, 2
        %v4529 = vsel %vm1187, %v4527, %v4528
        %v4530 = vrot.slane %v4423, 2
        %v4531 = vsel %vm1187, %v4528, %v4530
        %v4532 = vrot.slane %v4424, 2
        %v4533 = vrot.slane %v4425, 2
        %v4534 = vsel %vm1187, %v4532, %v4533
        %v4535 = vrot.slane %v4426, 2
        %v4536 = vsel %vm1187, %v4533, %v4535
        %v4537 = vrot.slane %v4427, 2
        %v4538 = vrot.slane %v4428, 2
        %v4539 = vsel %vm1187, %v4537, %v4538
        %v4540 = vrot.slane %v4429, 2
        %v4541 = vsel %vm1187, %v4538, %v4540
        %v4542 = vrot.slane %v4430, 2
        %v4543 = vrot.slane %v4431, 2
        %v4544 = vsel %vm1187, %v4542, %v4543
        %v4545 = vrot.slane %v4432, 2
        %v4546 = vsel %vm1187, %v4543, %v4545
        %v4547 = vrot.slane %v4433, 2
        %v4548 = vrot.slane %v4434, 2
        %v4549 = vsel %vm1187, %v4547, %v4548
        %v4550 = vrot.slane %v4435, 2
        %v4551 = vsel %vm1187, %v4548, %v4550
        %v4552 = vrot.slane %v4436, 2
        %v4553 = vrot.slane %v4437, 2
        %v4554 = vsel %vm1187, %v4552, %v4553
        %v4555 = vrot.slane %v4438, 2
        %v4556 = vsel %vm1187, %v4553, %v4555
        %v4557 = vrot.slane %v4439, 2
        %v4558 = vrot.slane %v4440, 2
        %v4559 = vsel %vm1187, %v4557, %v4558
        %v4560 = vrot.slane %v4441, 2
        %v4561 = vsel %vm1187, %v4558, %v4560
        %v4562 = vrot.slane %v4442, 2
        %v4563 = vrot.slane %v4443, 2
        %v4564 = vsel %vm1187, %v4562, %v4563
        %v4565 = vrot.slane %v4444, 2
        %v4566 = vsel %vm1187, %v4563, %v4565
        %v4567 = vrot.slane %v4445, 2
        %v4568 = vrot.slane %v4446, 2
        %v4569 = vsel %vm1187, %v4567, %v4568
        %v4570 = vrot.slane %v4447, 2
        %v4571 = vsel %vm1187, %v4568, %v4570
        %v4572 = vrot.slane %v4448, 2
        %v4573 = vrot.slane %v4449, 2
        %v4574 = vsel %vm1187, %v4572, %v4573
        %v4575 = vrot.slane %v4450, 2
        %v4576 = vsel %vm1187, %v4573, %v4575
        %v4577 = vrot.slane %v4451, 2
        %v4578 = vrot.slane %v4452, 2
        %v4579 = vsel %vm1187, %v4577, %v4578
        %v4580 = vrot.slane %v4453, 2
        %v4581 = vsel %vm1187, %v4578, %v4580
        %v4614 = vadd.f32 %v4132, %v4504
        %v4615 = vadd.f32 %v4133, %v4506
        %v4616 = vadd.f32 %v4134, %v4509
        %v4617 = vadd.f32 %v4135, %v4511
        %v4618 = vadd.f32 %v4136, %v4514
        %v4619 = vadd.f32 %v4137, %v4516
        %v4620 = vadd.f32 %v4138, %v4519
        %v4621 = vadd.f32 %v4139, %v4521
        %v4622 = vadd.f32 %v4140, %v4524
        %v4623 = vadd.f32 %v4141, %v4526
        %v4624 = vadd.f32 %v4142, %v4529
        %v4625 = vadd.f32 %v4143, %v4531
        %v4626 = vadd.f32 %v4144, %v4534
        %v4627 = vadd.f32 %v4145, %v4536
        %v4628 = vadd.f32 %v4146, %v4539
        %v4629 = vadd.f32 %v4147, %v4541
        %v4630 = vadd.f32 %v4148, %v4544
        %v4631 = vadd.f32 %v4149, %v4546
        %v4632 = vadd.f32 %v4150, %v4549
        %v4633 = vadd.f32 %v4151, %v4551
        %v4634 = vadd.f32 %v4152, %v4554
        %v4635 = vadd.f32 %v4153, %v4556
        %v4636 = vadd.f32 %v4154, %v4559
        %v4637 = vadd.f32 %v4155, %v4561
        %v4638 = vadd.f32 %v4156, %v4564
        %v4639 = vadd.f32 %v4157, %v4566
        %v4640 = vadd.f32 %v4158, %v4569
        %v4641 = vadd.f32 %v4159, %v4571
        %v4642 = vadd.f32 %v4160, %v4574
        %v4643 = vadd.f32 %v4161, %v4576
        %v4644 = vadd.f32 %v4162, %v4579
        %v4645 = vadd.f32 %v4163, %v4581
        %v4646 = vperm.slane %v2737, 5
        %v4647 = vmul.f32 %v2703, %v4646
        %v4648 = vmul.f32 %v2609, %v4646
        %v4649 = vmul.f32 %v2719, %v4646
        %v4650 = vmul.f32 %v2704, %v4646
        %v4651 = vmul.f32 %v2612, %v4646
        %v4652 = vmul.f32 %v2720, %v4646
        %v4653 = vmul.f32 %v2705, %v4646
        %v4654 = vmul.f32 %v2615, %v4646
        %v4655 = vmul.f32 %v2721, %v4646
        %v4656 = vmul.f32 %v2706, %v4646
        %v4657 = vmul.f32 %v2618, %v4646
        %v4658 = vmul.f32 %v2722, %v4646
        %v4659 = vmul.f32 %v2707, %v4646
        %v4660 = vmul.f32 %v2621, %v4646
        %v4661 = vmul.f32 %v2723, %v4646
        %v4662 = vmul.f32 %v2708, %v4646
        %v4663 = vmul.f32 %v2624, %v4646
        %v4664 = vmul.f32 %v2724, %v4646
        %v4665 = vmul.f32 %v2709, %v4646
        %v4666 = vmul.f32 %v2627, %v4646
        %v4667 = vmul.f32 %v2725, %v4646
        %v4668 = vmul.f32 %v2710, %v4646
        %v4669 = vmul.f32 %v2630, %v4646
        %v4670 = vmul.f32 %v2726, %v4646
        %v4671 = vmul.f32 %v2711, %v4646
        %v4672 = vmul.f32 %v2633, %v4646
        %v4673 = vmul.f32 %v2727, %v4646
        %v4674 = vmul.f32 %v2712, %v4646
        %v4675 = vmul.f32 %v2636, %v4646
        %v4676 = vmul.f32 %v2728, %v4646
        %v4677 = vmul.f32 %v2713, %v4646
        %v4678 = vmul.f32 %v2639, %v4646
        %v4679 = vmul.f32 %v2729, %v4646
        %v4680 = vmul.f32 %v2714, %v4646
        %v4681 = vmul.f32 %v2642, %v4646
        %v4682 = vmul.f32 %v2730, %v4646
        %v4683 = vmul.f32 %v2715, %v4646
        %v4684 = vmul.f32 %v2645, %v4646
        %v4685 = vmul.f32 %v2731, %v4646
        %v4686 = vmul.f32 %v2716, %v4646
        %v4687 = vmul.f32 %v2648, %v4646
        %v4688 = vmul.f32 %v2732, %v4646
        %v4689 = vmul.f32 %v2717, %v4646
        %v4690 = vmul.f32 %v2651, %v4646
        %v4691 = vmul.f32 %v2733, %v4646
        %v4692 = vmul.f32 %v2718, %v4646
        %v4693 = vmul.f32 %v2654, %v4646
        %v4694 = vmul.f32 %v2734, %v4646
        %v4743 = vrot.slane %v4647, 2
        %v4744 = vrot.slane %v4648, 2
        %v4745 = vsel %vm1187, %v4743, %v4744
        %v4746 = vrot.slane %v4649, 2
        %v4747 = vsel %vm1187, %v4744, %v4746
        %v4748 = vrot.slane %v4650, 2
        %v4749 = vrot.slane %v4651, 2
        %v4750 = vsel %vm1187, %v4748, %v4749
        %v4751 = vrot.slane %v4652, 2
        %v4752 = vsel %vm1187, %v4749, %v4751
        %v4753 = vrot.slane %v4653, 2
        %v4754 = vrot.slane %v4654, 2
        %v4755 = vsel %vm1187, %v4753, %v4754
        %v4756 = vrot.slane %v4655, 2
        %v4757 = vsel %vm1187, %v4754, %v4756
        %v4758 = vrot.slane %v4656, 2
        %v4759 = vrot.slane %v4657, 2
        %v4760 = vsel %vm1187, %v4758, %v4759
        %v4761 = vrot.slane %v4658, 2
        %v4762 = vsel %vm1187, %v4759, %v4761
        %v4763 = vrot.slane %v4659, 2
        %v4764 = vrot.slane %v4660, 2
        %v4765 = vsel %vm1187, %v4763, %v4764
        %v4766 = vrot.slane %v4661, 2
        %v4767 = vsel %vm1187, %v4764, %v4766
        %v4768 = vrot.slane %v4662, 2
        %v4769 = vrot.slane %v4663, 2
        %v4770 = vsel %vm1187, %v4768, %v4769
        %v4771 = vrot.slane %v4664, 2
        %v4772 = vsel %vm1187, %v4769, %v4771
        %v4773 = vrot.slane %v4665, 2
        %v4774 = vrot.slane %v4666, 2
        %v4775 = vsel %vm1187, %v4773, %v4774
        %v4776 = vrot.slane %v4667, 2
        %v4777 = vsel %vm1187, %v4774, %v4776
        %v4778 = vrot.slane %v4668, 2
        %v4779 = vrot.slane %v4669, 2
        %v4780 = vsel %vm1187, %v4778, %v4779
        %v4781 = vrot.slane %v4670, 2
        %v4782 = vsel %vm1187, %v4779, %v4781
        %v4783 = vrot.slane %v4671, 2
        %v4784 = vrot.slane %v4672, 2
        %v4785 = vsel %vm1187, %v4783, %v4784
        %v4786 = vrot.slane %v4673, 2
        %v4787 = vsel %vm1187, %v4784, %v4786
        %v4788 = vrot.slane %v4674, 2
        %v4789 = vrot.slane %v4675, 2
        %v4790 = vsel %vm1187, %v4788, %v4789
        %v4791 = vrot.slane %v4676, 2
        %v4792 = vsel %vm1187, %v4789, %v4791
        %v4793 = vrot.slane %v4677, 2
        %v4794 = vrot.slane %v4678, 2
        %v4795 = vsel %vm1187, %v4793, %v4794
        %v4796 = vrot.slane %v4679, 2
        %v4797 = vsel %vm1187, %v4794, %v4796
        %v4798 = vrot.slane %v4680, 2
        %v4799 = vrot.slane %v4681, 2
        %v4800 = vsel %vm1187, %v4798, %v4799
        %v4801 = vrot.slane %v4682, 2
        %v4802 = vsel %vm1187, %v4799, %v4801
        %v4803 = vrot.slane %v4683, 2
        %v4804 = vrot.slane %v4684, 2
        %v4805 = vsel %vm1187, %v4803, %v4804
        %v4806 = vrot.slane %v4685, 2
        %v4807 = vsel %vm1187, %v4804, %v4806
        %v4808 = vrot.slane %v4686, 2
        %v4809 = vrot.slane %v4687, 2
        %v4810 = vsel %vm1187, %v4808, %v4809
        %v4811 = vrot.slane %v4688, 2
        %v4812 = vsel %vm1187, %v4809, %v4811
        %v4813 = vrot.slane %v4689, 2
        %v4814 = vrot.slane %v4690, 2
        %v4815 = vsel %vm1187, %v4813, %v4814
        %v4816 = vrot.slane %v4691, 2
        %v4817 = vsel %vm1187, %v4814, %v4816
        %v4818 = vrot.slane %v4692, 2
        %v4819 = vrot.slane %v4693, 2
        %v4820 = vsel %vm1187, %v4818, %v4819
        %v4821 = vrot.slane %v4694, 2
        %v4822 = vsel %vm1187, %v4819, %v4821
        %v4855 = vadd.f32 %v4373, %v4745
        %v4856 = vadd.f32 %v4374, %v4747
        %v4857 = vadd.f32 %v4375, %v4750
        %v4858 = vadd.f32 %v4376, %v4752
        %v4859 = vadd.f32 %v4377, %v4755
        %v4860 = vadd.f32 %v4378, %v4757
        %v4861 = vadd.f32 %v4379, %v4760
        %v4862 = vadd.f32 %v4380, %v4762
        %v4863 = vadd.f32 %v4381, %v4765
        %v4864 = vadd.f32 %v4382, %v4767
        %v4865 = vadd.f32 %v4383, %v4770
        %v4866 = vadd.f32 %v4384, %v4772
        %v4867 = vadd.f32 %v4385, %v4775
        %v4868 = vadd.f32 %v4386, %v4777
        %v4869 = vadd.f32 %v4387, %v4780
        %v4870 = vadd.f32 %v4388, %v4782
        %v4871 = vadd.f32 %v4389, %v4785
        %v4872 = vadd.f32 %v4390, %v4787
        %v4873 = vadd.f32 %v4391, %v4790
        %v4874 = vadd.f32 %v4392, %v4792
        %v4875 = vadd.f32 %v4393, %v4795
        %v4876 = vadd.f32 %v4394, %v4797
        %v4877 = vadd.f32 %v4395, %v4800
        %v4878 = vadd.f32 %v4396, %v4802
        %v4879 = vadd.f32 %v4397, %v4805
        %v4880 = vadd.f32 %v4398, %v4807
        %v4881 = vadd.f32 %v4399, %v4810
        %v4882 = vadd.f32 %v4400, %v4812
        %v4883 = vadd.f32 %v4401, %v4815
        %v4884 = vadd.f32 %v4402, %v4817
        %v4885 = vadd.f32 %v4403, %v4820
        %v4886 = vadd.f32 %v4404, %v4822
        %v4887 = vperm.slane %v2735, 6
        %v4888 = vmul.f32 %v2704, %v4887
        %v4889 = vmul.f32 %v2612, %v4887
        %v4890 = vmul.f32 %v2705, %v4887
        %v4891 = vmul.f32 %v2615, %v4887
        %v4892 = vmul.f32 %v2706, %v4887
        %v4893 = vmul.f32 %v2618, %v4887
        %v4894 = vmul.f32 %v2707, %v4887
        %v4895 = vmul.f32 %v2621, %v4887
        %v4896 = vmul.f32 %v2708, %v4887
        %v4897 = vmul.f32 %v2624, %v4887
        %v4898 = vmul.f32 %v2709, %v4887
        %v4899 = vmul.f32 %v2627, %v4887
        %v4900 = vmul.f32 %v2710, %v4887
        %v4901 = vmul.f32 %v2630, %v4887
        %v4902 = vmul.f32 %v2711, %v4887
        %v4903 = vmul.f32 %v2633, %v4887
        %v4904 = vmul.f32 %v2712, %v4887
        %v4905 = vmul.f32 %v2636, %v4887
        %v4906 = vmul.f32 %v2713, %v4887
        %v4907 = vmul.f32 %v2639, %v4887
        %v4908 = vmul.f32 %v2714, %v4887
        %v4909 = vmul.f32 %v2642, %v4887
        %v4910 = vmul.f32 %v2715, %v4887
        %v4911 = vmul.f32 %v2645, %v4887
        %v4912 = vmul.f32 %v2716, %v4887
        %v4913 = vmul.f32 %v2648, %v4887
        %v4914 = vmul.f32 %v2717, %v4887
        %v4915 = vmul.f32 %v2651, %v4887
        %v4916 = vmul.f32 %v2718, %v4887
        %v4917 = vmul.f32 %v2654, %v4887
        %v4918 = vmul.f32 %v4887, 0.0
        %v4919 = vadd.f32 %v4614, %v4888
        %v4920 = vadd.f32 %v4615, %v4889
        %v4921 = vadd.f32 %v4616, %v4890
        %v4922 = vadd.f32 %v4617, %v4891
        %v4923 = vadd.f32 %v4618, %v4892
        %v4924 = vadd.f32 %v4619, %v4893
        %v4925 = vadd.f32 %v4620, %v4894
        %v4926 = vadd.f32 %v4621, %v4895
        %v4927 = vadd.f32 %v4622, %v4896
        %v4928 = vadd.f32 %v4623, %v4897
        %v4929 = vadd.f32 %v4624, %v4898
        %v4930 = vadd.f32 %v4625, %v4899
        %v4931 = vadd.f32 %v4626, %v4900
        %v4932 = vadd.f32 %v4627, %v4901
        %v4933 = vadd.f32 %v4628, %v4902
        %v4934 = vadd.f32 %v4629, %v4903
        %v4935 = vadd.f32 %v4630, %v4904
        %v4936 = vadd.f32 %v4631, %v4905
        %v4937 = vadd.f32 %v4632, %v4906
        %v4938 = vadd.f32 %v4633, %v4907
        %v4939 = vadd.f32 %v4634, %v4908
        %v4940 = vadd.f32 %v4635, %v4909
        %v4941 = vadd.f32 %v4636, %v4910
        %v4942 = vadd.f32 %v4637, %v4911
        %v4943 = vadd.f32 %v4638, %v4912
        %v4944 = vadd.f32 %v4639, %v4913
        %v4945 = vadd.f32 %v4640, %v4914
        %v4946 = vadd.f32 %v4641, %v4915
        %v4947 = vadd.f32 %v4642, %v4916
        %v4948 = vadd.f32 %v4643, %v4917
        %v4949 = vadd.f32 %v4644, %v4918
        %v4950 = vadd.f32 %v4645, %v4918
        %v4951 = vperm.slane %v2737, 6
        %v4952 = vmul.f32 %v2704, %v4951
        %v4953 = vmul.f32 %v2612, %v4951
        %v4954 = vmul.f32 %v2705, %v4951
        %v4955 = vmul.f32 %v2615, %v4951
        %v4956 = vmul.f32 %v2706, %v4951
        %v4957 = vmul.f32 %v2618, %v4951
        %v4958 = vmul.f32 %v2707, %v4951
        %v4959 = vmul.f32 %v2621, %v4951
        %v4960 = vmul.f32 %v2708, %v4951
        %v4961 = vmul.f32 %v2624, %v4951
        %v4962 = vmul.f32 %v2709, %v4951
        %v4963 = vmul.f32 %v2627, %v4951
        %v4964 = vmul.f32 %v2710, %v4951
        %v4965 = vmul.f32 %v2630, %v4951
        %v4966 = vmul.f32 %v2711, %v4951
        %v4967 = vmul.f32 %v2633, %v4951
        %v4968 = vmul.f32 %v2712, %v4951
        %v4969 = vmul.f32 %v2636, %v4951
        %v4970 = vmul.f32 %v2713, %v4951
        %v4971 = vmul.f32 %v2639, %v4951
        %v4972 = vmul.f32 %v2714, %v4951
        %v4973 = vmul.f32 %v2642, %v4951
        %v4974 = vmul.f32 %v2715, %v4951
        %v4975 = vmul.f32 %v2645, %v4951
        %v4976 = vmul.f32 %v2716, %v4951
        %v4977 = vmul.f32 %v2648, %v4951
        %v4978 = vmul.f32 %v2717, %v4951
        %v4979 = vmul.f32 %v2651, %v4951
        %v4980 = vmul.f32 %v2718, %v4951
        %v4981 = vmul.f32 %v2654, %v4951
        %v4982 = vmul.f32 %v4951, 0.0
        %v4983 = vadd.f32 %v4855, %v4952
        %v4984 = vadd.f32 %v4856, %v4953
        %v4985 = vadd.f32 %v4857, %v4954
        %v4986 = vadd.f32 %v4858, %v4955
        %v4987 = vadd.f32 %v4859, %v4956
        %v4988 = vadd.f32 %v4860, %v4957
        %v4989 = vadd.f32 %v4861, %v4958
        %v4990 = vadd.f32 %v4862, %v4959
        %v4991 = vadd.f32 %v4863, %v4960
        %v4992 = vadd.f32 %v4864, %v4961
        %v4993 = vadd.f32 %v4865, %v4962
        %v4994 = vadd.f32 %v4866, %v4963
        %v4995 = vadd.f32 %v4867, %v4964
        %v4996 = vadd.f32 %v4868, %v4965
        %v4997 = vadd.f32 %v4869, %v4966
        %v4998 = vadd.f32 %v4870, %v4967
        %v4999 = vadd.f32 %v4871, %v4968
        %v5000 = vadd.f32 %v4872, %v4969
        %v5001 = vadd.f32 %v4873, %v4970
        %v5002 = vadd.f32 %v4874, %v4971
        %v5003 = vadd.f32 %v4875, %v4972
        %v5004 = vadd.f32 %v4876, %v4973
        %v5005 = vadd.f32 %v4877, %v4974
        %v5006 = vadd.f32 %v4878, %v4975
        %v5007 = vadd.f32 %v4879, %v4976
        %v5008 = vadd.f32 %v4880, %v4977
        %v5009 = vadd.f32 %v4881, %v4978
        %v5010 = vadd.f32 %v4882, %v4979
        %v5011 = vadd.f32 %v4883, %v4980
        %v5012 = vadd.f32 %v4884, %v4981
        %v5013 = vadd.f32 %v4885, %v4982
        %v5014 = vadd.f32 %v4886, %v4982
        %v5015 = vperm.slane %v2735, 7
        %v5016 = vmul.f32 %v2704, %v5015
        %v5017 = vmul.f32 %v2612, %v5015
        %v5018 = vmul.f32 %v2720, %v5015
        %v5019 = vmul.f32 %v2705, %v5015
        %v5020 = vmul.f32 %v2615, %v5015
        %v5021 = vmul.f32 %v2721, %v5015
        %v5022 = vmul.f32 %v2706, %v5015
        %v5023 = vmul.f32 %v2618, %v5015
        %v5024 = vmul.f32 %v2722, %v5015
        %v5025 = vmul.f32 %v2707, %v5015
        %v5026 = vmul.f32 %v2621, %v5015
        %v5027 = vmul.f32 %v2723, %v5015
        %v5028 = vmul.f32 %v2708, %v5015
        %v5029 = vmul.f32 %v2624, %v5015
        %v5030 = vmul.f32 %v2724, %v5015
        %v5031 = vmul.f32 %v2709, %v5015
        %v5032 = vmul.f32 %v2627, %v5015
        %v5033 = vmul.f32 %v2725, %v5015
        %v5034 = vmul.f32 %v2710, %v5015
        %v5035 = vmul.f32 %v2630, %v5015
        %v5036 = vmul.f32 %v2726, %v5015
        %v5037 = vmul.f32 %v2711, %v5015
        %v5038 = vmul.f32 %v2633, %v5015
        %v5039 = vmul.f32 %v2727, %v5015
        %v5040 = vmul.f32 %v2712, %v5015
        %v5041 = vmul.f32 %v2636, %v5015
        %v5042 = vmul.f32 %v2728, %v5015
        %v5043 = vmul.f32 %v2713, %v5015
        %v5044 = vmul.f32 %v2639, %v5015
        %v5045 = vmul.f32 %v2729, %v5015
        %v5046 = vmul.f32 %v2714, %v5015
        %v5047 = vmul.f32 %v2642, %v5015
        %v5048 = vmul.f32 %v2730, %v5015
        %v5049 = vmul.f32 %v2715, %v5015
        %v5050 = vmul.f32 %v2645, %v5015
        %v5051 = vmul.f32 %v2731, %v5015
        %v5052 = vmul.f32 %v2716, %v5015
        %v5053 = vmul.f32 %v2648, %v5015
        %v5054 = vmul.f32 %v2732, %v5015
        %v5055 = vmul.f32 %v2717, %v5015
        %v5056 = vmul.f32 %v2651, %v5015
        %v5057 = vmul.f32 %v2733, %v5015
        %v5058 = vmul.f32 %v2718, %v5015
        %v5059 = vmul.f32 %v2654, %v5015
        %v5060 = vmul.f32 %v2734, %v5015
        %v5061 = vmul.f32 %v5015, 0.0
        %v5108 = vrot.slane %v5016, 1
        %v5109 = vrot.slane %v5017, 1
        %v5110 = vsel %vm1005, %v5108, %v5109
        %v5111 = vrot.slane %v5018, 1
        %v5112 = vsel %vm1005, %v5109, %v5111
        %v5113 = vrot.slane %v5019, 1
        %v5114 = vrot.slane %v5020, 1
        %v5115 = vsel %vm1005, %v5113, %v5114
        %v5116 = vrot.slane %v5021, 1
        %v5117 = vsel %vm1005, %v5114, %v5116
        %v5118 = vrot.slane %v5022, 1
        %v5119 = vrot.slane %v5023, 1
        %v5120 = vsel %vm1005, %v5118, %v5119
        %v5121 = vrot.slane %v5024, 1
        %v5122 = vsel %vm1005, %v5119, %v5121
        %v5123 = vrot.slane %v5025, 1
        %v5124 = vrot.slane %v5026, 1
        %v5125 = vsel %vm1005, %v5123, %v5124
        %v5126 = vrot.slane %v5027, 1
        %v5127 = vsel %vm1005, %v5124, %v5126
        %v5128 = vrot.slane %v5028, 1
        %v5129 = vrot.slane %v5029, 1
        %v5130 = vsel %vm1005, %v5128, %v5129
        %v5131 = vrot.slane %v5030, 1
        %v5132 = vsel %vm1005, %v5129, %v5131
        %v5133 = vrot.slane %v5031, 1
        %v5134 = vrot.slane %v5032, 1
        %v5135 = vsel %vm1005, %v5133, %v5134
        %v5136 = vrot.slane %v5033, 1
        %v5137 = vsel %vm1005, %v5134, %v5136
        %v5138 = vrot.slane %v5034, 1
        %v5139 = vrot.slane %v5035, 1
        %v5140 = vsel %vm1005, %v5138, %v5139
        %v5141 = vrot.slane %v5036, 1
        %v5142 = vsel %vm1005, %v5139, %v5141
        %v5143 = vrot.slane %v5037, 1
        %v5144 = vrot.slane %v5038, 1
        %v5145 = vsel %vm1005, %v5143, %v5144
        %v5146 = vrot.slane %v5039, 1
        %v5147 = vsel %vm1005, %v5144, %v5146
        %v5148 = vrot.slane %v5040, 1
        %v5149 = vrot.slane %v5041, 1
        %v5150 = vsel %vm1005, %v5148, %v5149
        %v5151 = vrot.slane %v5042, 1
        %v5152 = vsel %vm1005, %v5149, %v5151
        %v5153 = vrot.slane %v5043, 1
        %v5154 = vrot.slane %v5044, 1
        %v5155 = vsel %vm1005, %v5153, %v5154
        %v5156 = vrot.slane %v5045, 1
        %v5157 = vsel %vm1005, %v5154, %v5156
        %v5158 = vrot.slane %v5046, 1
        %v5159 = vrot.slane %v5047, 1
        %v5160 = vsel %vm1005, %v5158, %v5159
        %v5161 = vrot.slane %v5048, 1
        %v5162 = vsel %vm1005, %v5159, %v5161
        %v5163 = vrot.slane %v5049, 1
        %v5164 = vrot.slane %v5050, 1
        %v5165 = vsel %vm1005, %v5163, %v5164
        %v5166 = vrot.slane %v5051, 1
        %v5167 = vsel %vm1005, %v5164, %v5166
        %v5168 = vrot.slane %v5052, 1
        %v5169 = vrot.slane %v5053, 1
        %v5170 = vsel %vm1005, %v5168, %v5169
        %v5171 = vrot.slane %v5054, 1
        %v5172 = vsel %vm1005, %v5169, %v5171
        %v5173 = vrot.slane %v5055, 1
        %v5174 = vrot.slane %v5056, 1
        %v5175 = vsel %vm1005, %v5173, %v5174
        %v5176 = vrot.slane %v5057, 1
        %v5177 = vsel %vm1005, %v5174, %v5176
        %v5178 = vrot.slane %v5058, 1
        %v5179 = vrot.slane %v5059, 1
        %v5180 = vsel %vm1005, %v5178, %v5179
        %v5181 = vrot.slane %v5060, 1
        %v5182 = vsel %vm1005, %v5179, %v5181
        %v5183 = vrot.slane %v5061, 1
        %v5184 = vsel %vm1005, %v5183, %v5183
        %v5216 = vadd.f32 %v4919, %v5110
        %v5217 = vadd.f32 %v4920, %v5112
        %v5218 = vadd.f32 %v4921, %v5115
        %v5219 = vadd.f32 %v4922, %v5117
        %v5220 = vadd.f32 %v4923, %v5120
        %v5221 = vadd.f32 %v4924, %v5122
        %v5222 = vadd.f32 %v4925, %v5125
        %v5223 = vadd.f32 %v4926, %v5127
        %v5224 = vadd.f32 %v4927, %v5130
        %v5225 = vadd.f32 %v4928, %v5132
        %v5226 = vadd.f32 %v4929, %v5135
        %v5227 = vadd.f32 %v4930, %v5137
        %v5228 = vadd.f32 %v4931, %v5140
        %v5229 = vadd.f32 %v4932, %v5142
        %v5230 = vadd.f32 %v4933, %v5145
        %v5231 = vadd.f32 %v4934, %v5147
        %v5232 = vadd.f32 %v4935, %v5150
        %v5233 = vadd.f32 %v4936, %v5152
        %v5234 = vadd.f32 %v4937, %v5155
        %v5235 = vadd.f32 %v4938, %v5157
        %v5236 = vadd.f32 %v4939, %v5160
        %v5237 = vadd.f32 %v4940, %v5162
        %v5238 = vadd.f32 %v4941, %v5165
        %v5239 = vadd.f32 %v4942, %v5167
        %v5240 = vadd.f32 %v4943, %v5170
        %v5241 = vadd.f32 %v4944, %v5172
        %v5242 = vadd.f32 %v4945, %v5175
        %v5243 = vadd.f32 %v4946, %v5177
        %v5244 = vadd.f32 %v4947, %v5180
        %v5245 = vadd.f32 %v4948, %v5182
        %v5246 = vadd.f32 %v4949, %v5184
        %v5247 = vadd.f32 %v4950, %v5184
        %v5248 = vperm.slane %v2737, 7
        %v5249 = vmul.f32 %v2704, %v5248
        %v5250 = vmul.f32 %v2612, %v5248
        %v5251 = vmul.f32 %v2720, %v5248
        %v5252 = vmul.f32 %v2705, %v5248
        %v5253 = vmul.f32 %v2615, %v5248
        %v5254 = vmul.f32 %v2721, %v5248
        %v5255 = vmul.f32 %v2706, %v5248
        %v5256 = vmul.f32 %v2618, %v5248
        %v5257 = vmul.f32 %v2722, %v5248
        %v5258 = vmul.f32 %v2707, %v5248
        %v5259 = vmul.f32 %v2621, %v5248
        %v5260 = vmul.f32 %v2723, %v5248
        %v5261 = vmul.f32 %v2708, %v5248
        %v5262 = vmul.f32 %v2624, %v5248
        %v5263 = vmul.f32 %v2724, %v5248
        %v5264 = vmul.f32 %v2709, %v5248
        %v5265 = vmul.f32 %v2627, %v5248
        %v5266 = vmul.f32 %v2725, %v5248
        %v5267 = vmul.f32 %v2710, %v5248
        %v5268 = vmul.f32 %v2630, %v5248
        %v5269 = vmul.f32 %v2726, %v5248
        %v5270 = vmul.f32 %v2711, %v5248
        %v5271 = vmul.f32 %v2633, %v5248
        %v5272 = vmul.f32 %v2727, %v5248
        %v5273 = vmul.f32 %v2712, %v5248
        %v5274 = vmul.f32 %v2636, %v5248
        %v5275 = vmul.f32 %v2728, %v5248
        %v5276 = vmul.f32 %v2713, %v5248
        %v5277 = vmul.f32 %v2639, %v5248
        %v5278 = vmul.f32 %v2729, %v5248
        %v5279 = vmul.f32 %v2714, %v5248
        %v5280 = vmul.f32 %v2642, %v5248
        %v5281 = vmul.f32 %v2730, %v5248
        %v5282 = vmul.f32 %v2715, %v5248
        %v5283 = vmul.f32 %v2645, %v5248
        %v5284 = vmul.f32 %v2731, %v5248
        %v5285 = vmul.f32 %v2716, %v5248
        %v5286 = vmul.f32 %v2648, %v5248
        %v5287 = vmul.f32 %v2732, %v5248
        %v5288 = vmul.f32 %v2717, %v5248
        %v5289 = vmul.f32 %v2651, %v5248
        %v5290 = vmul.f32 %v2733, %v5248
        %v5291 = vmul.f32 %v2718, %v5248
        %v5292 = vmul.f32 %v2654, %v5248
        %v5293 = vmul.f32 %v2734, %v5248
        %v5294 = vmul.f32 %v5248, 0.0
        %v5341 = vrot.slane %v5249, 1
        %v5342 = vrot.slane %v5250, 1
        %v5343 = vsel %vm1005, %v5341, %v5342
        %v5344 = vrot.slane %v5251, 1
        %v5345 = vsel %vm1005, %v5342, %v5344
        %v5346 = vrot.slane %v5252, 1
        %v5347 = vrot.slane %v5253, 1
        %v5348 = vsel %vm1005, %v5346, %v5347
        %v5349 = vrot.slane %v5254, 1
        %v5350 = vsel %vm1005, %v5347, %v5349
        %v5351 = vrot.slane %v5255, 1
        %v5352 = vrot.slane %v5256, 1
        %v5353 = vsel %vm1005, %v5351, %v5352
        %v5354 = vrot.slane %v5257, 1
        %v5355 = vsel %vm1005, %v5352, %v5354
        %v5356 = vrot.slane %v5258, 1
        %v5357 = vrot.slane %v5259, 1
        %v5358 = vsel %vm1005, %v5356, %v5357
        %v5359 = vrot.slane %v5260, 1
        %v5360 = vsel %vm1005, %v5357, %v5359
        %v5361 = vrot.slane %v5261, 1
        %v5362 = vrot.slane %v5262, 1
        %v5363 = vsel %vm1005, %v5361, %v5362
        %v5364 = vrot.slane %v5263, 1
        %v5365 = vsel %vm1005, %v5362, %v5364
        %v5366 = vrot.slane %v5264, 1
        %v5367 = vrot.slane %v5265, 1
        %v5368 = vsel %vm1005, %v5366, %v5367
        %v5369 = vrot.slane %v5266, 1
        %v5370 = vsel %vm1005, %v5367, %v5369
        %v5371 = vrot.slane %v5267, 1
        %v5372 = vrot.slane %v5268, 1
        %v5373 = vsel %vm1005, %v5371, %v5372
        %v5374 = vrot.slane %v5269, 1
        %v5375 = vsel %vm1005, %v5372, %v5374
        %v5376 = vrot.slane %v5270, 1
        %v5377 = vrot.slane %v5271, 1
        %v5378 = vsel %vm1005, %v5376, %v5377
        %v5379 = vrot.slane %v5272, 1
        %v5380 = vsel %vm1005, %v5377, %v5379
        %v5381 = vrot.slane %v5273, 1
        %v5382 = vrot.slane %v5274, 1
        %v5383 = vsel %vm1005, %v5381, %v5382
        %v5384 = vrot.slane %v5275, 1
        %v5385 = vsel %vm1005, %v5382, %v5384
        %v5386 = vrot.slane %v5276, 1
        %v5387 = vrot.slane %v5277, 1
        %v5388 = vsel %vm1005, %v5386, %v5387
        %v5389 = vrot.slane %v5278, 1
        %v5390 = vsel %vm1005, %v5387, %v5389
        %v5391 = vrot.slane %v5279, 1
        %v5392 = vrot.slane %v5280, 1
        %v5393 = vsel %vm1005, %v5391, %v5392
        %v5394 = vrot.slane %v5281, 1
        %v5395 = vsel %vm1005, %v5392, %v5394
        %v5396 = vrot.slane %v5282, 1
        %v5397 = vrot.slane %v5283, 1
        %v5398 = vsel %vm1005, %v5396, %v5397
        %v5399 = vrot.slane %v5284, 1
        %v5400 = vsel %vm1005, %v5397, %v5399
        %v5401 = vrot.slane %v5285, 1
        %v5402 = vrot.slane %v5286, 1
        %v5403 = vsel %vm1005, %v5401, %v5402
        %v5404 = vrot.slane %v5287, 1
        %v5405 = vsel %vm1005, %v5402, %v5404
        %v5406 = vrot.slane %v5288, 1
        %v5407 = vrot.slane %v5289, 1
        %v5408 = vsel %vm1005, %v5406, %v5407
        %v5409 = vrot.slane %v5290, 1
        %v5410 = vsel %vm1005, %v5407, %v5409
        %v5411 = vrot.slane %v5291, 1
        %v5412 = vrot.slane %v5292, 1
        %v5413 = vsel %vm1005, %v5411, %v5412
        %v5414 = vrot.slane %v5293, 1
        %v5415 = vsel %vm1005, %v5412, %v5414
        %v5416 = vrot.slane %v5294, 1
        %v5417 = vsel %vm1005, %v5416, %v5416
        %v5449 = vadd.f32 %v4983, %v5343
        %v5450 = vadd.f32 %v4984, %v5345
        %v5451 = vadd.f32 %v4985, %v5348
        %v5452 = vadd.f32 %v4986, %v5350
        %v5453 = vadd.f32 %v4987, %v5353
        %v5454 = vadd.f32 %v4988, %v5355
        %v5455 = vadd.f32 %v4989, %v5358
        %v5456 = vadd.f32 %v4990, %v5360
        %v5457 = vadd.f32 %v4991, %v5363
        %v5458 = vadd.f32 %v4992, %v5365
        %v5459 = vadd.f32 %v4993, %v5368
        %v5460 = vadd.f32 %v4994, %v5370
        %v5461 = vadd.f32 %v4995, %v5373
        %v5462 = vadd.f32 %v4996, %v5375
        %v5463 = vadd.f32 %v4997, %v5378
        %v5464 = vadd.f32 %v4998, %v5380
        %v5465 = vadd.f32 %v4999, %v5383
        %v5466 = vadd.f32 %v5000, %v5385
        %v5467 = vadd.f32 %v5001, %v5388
        %v5468 = vadd.f32 %v5002, %v5390
        %v5469 = vadd.f32 %v5003, %v5393
        %v5470 = vadd.f32 %v5004, %v5395
        %v5471 = vadd.f32 %v5005, %v5398
        %v5472 = vadd.f32 %v5006, %v5400
        %v5473 = vadd.f32 %v5007, %v5403
        %v5474 = vadd.f32 %v5008, %v5405
        %v5475 = vadd.f32 %v5009, %v5408
        %v5476 = vadd.f32 %v5010, %v5410
        %v5477 = vadd.f32 %v5011, %v5413
        %v5478 = vadd.f32 %v5012, %v5415
        %v5479 = vadd.f32 %v5013, %v5417
        %v5480 = vadd.f32 %v5014, %v5417
        %v5481 = vperm.slane %v2736, 0
        %v5482 = vmul.f32 %v2704, %v5481
        %v5483 = vmul.f32 %v2612, %v5481
        %v5484 = vmul.f32 %v2720, %v5481
        %v5485 = vmul.f32 %v2705, %v5481
        %v5486 = vmul.f32 %v2615, %v5481
        %v5487 = vmul.f32 %v2721, %v5481
        %v5488 = vmul.f32 %v2706, %v5481
        %v5489 = vmul.f32 %v2618, %v5481
        %v5490 = vmul.f32 %v2722, %v5481
        %v5491 = vmul.f32 %v2707, %v5481
        %v5492 = vmul.f32 %v2621, %v5481
        %v5493 = vmul.f32 %v2723, %v5481
        %v5494 = vmul.f32 %v2708, %v5481
        %v5495 = vmul.f32 %v2624, %v5481
        %v5496 = vmul.f32 %v2724, %v5481
        %v5497 = vmul.f32 %v2709, %v5481
        %v5498 = vmul.f32 %v2627, %v5481
        %v5499 = vmul.f32 %v2725, %v5481
        %v5500 = vmul.f32 %v2710, %v5481
        %v5501 = vmul.f32 %v2630, %v5481
        %v5502 = vmul.f32 %v2726, %v5481
        %v5503 = vmul.f32 %v2711, %v5481
        %v5504 = vmul.f32 %v2633, %v5481
        %v5505 = vmul.f32 %v2727, %v5481
        %v5506 = vmul.f32 %v2712, %v5481
        %v5507 = vmul.f32 %v2636, %v5481
        %v5508 = vmul.f32 %v2728, %v5481
        %v5509 = vmul.f32 %v2713, %v5481
        %v5510 = vmul.f32 %v2639, %v5481
        %v5511 = vmul.f32 %v2729, %v5481
        %v5512 = vmul.f32 %v2714, %v5481
        %v5513 = vmul.f32 %v2642, %v5481
        %v5514 = vmul.f32 %v2730, %v5481
        %v5515 = vmul.f32 %v2715, %v5481
        %v5516 = vmul.f32 %v2645, %v5481
        %v5517 = vmul.f32 %v2731, %v5481
        %v5518 = vmul.f32 %v2716, %v5481
        %v5519 = vmul.f32 %v2648, %v5481
        %v5520 = vmul.f32 %v2732, %v5481
        %v5521 = vmul.f32 %v2717, %v5481
        %v5522 = vmul.f32 %v2651, %v5481
        %v5523 = vmul.f32 %v2733, %v5481
        %v5524 = vmul.f32 %v2718, %v5481
        %v5525 = vmul.f32 %v2654, %v5481
        %v5526 = vmul.f32 %v2734, %v5481
        %v5527 = vmul.f32 %v5481, 0.0
        %v5574 = vrot.slane %v5482, 2
        %v5575 = vrot.slane %v5483, 2
        %v5576 = vsel %vm1187, %v5574, %v5575
        %v5577 = vrot.slane %v5484, 2
        %v5578 = vsel %vm1187, %v5575, %v5577
        %v5579 = vrot.slane %v5485, 2
        %v5580 = vrot.slane %v5486, 2
        %v5581 = vsel %vm1187, %v5579, %v5580
        %v5582 = vrot.slane %v5487, 2
        %v5583 = vsel %vm1187, %v5580, %v5582
        %v5584 = vrot.slane %v5488, 2
        %v5585 = vrot.slane %v5489, 2
        %v5586 = vsel %vm1187, %v5584, %v5585
        %v5587 = vrot.slane %v5490, 2
        %v5588 = vsel %vm1187, %v5585, %v5587
        %v5589 = vrot.slane %v5491, 2
        %v5590 = vrot.slane %v5492, 2
        %v5591 = vsel %vm1187, %v5589, %v5590
        %v5592 = vrot.slane %v5493, 2
        %v5593 = vsel %vm1187, %v5590, %v5592
        %v5594 = vrot.slane %v5494, 2
        %v5595 = vrot.slane %v5495, 2
        %v5596 = vsel %vm1187, %v5594, %v5595
        %v5597 = vrot.slane %v5496, 2
        %v5598 = vsel %vm1187, %v5595, %v5597
        %v5599 = vrot.slane %v5497, 2
        %v5600 = vrot.slane %v5498, 2
        %v5601 = vsel %vm1187, %v5599, %v5600
        %v5602 = vrot.slane %v5499, 2
        %v5603 = vsel %vm1187, %v5600, %v5602
        %v5604 = vrot.slane %v5500, 2
        %v5605 = vrot.slane %v5501, 2
        %v5606 = vsel %vm1187, %v5604, %v5605
        %v5607 = vrot.slane %v5502, 2
        %v5608 = vsel %vm1187, %v5605, %v5607
        %v5609 = vrot.slane %v5503, 2
        %v5610 = vrot.slane %v5504, 2
        %v5611 = vsel %vm1187, %v5609, %v5610
        %v5612 = vrot.slane %v5505, 2
        %v5613 = vsel %vm1187, %v5610, %v5612
        %v5614 = vrot.slane %v5506, 2
        %v5615 = vrot.slane %v5507, 2
        %v5616 = vsel %vm1187, %v5614, %v5615
        %v5617 = vrot.slane %v5508, 2
        %v5618 = vsel %vm1187, %v5615, %v5617
        %v5619 = vrot.slane %v5509, 2
        %v5620 = vrot.slane %v5510, 2
        %v5621 = vsel %vm1187, %v5619, %v5620
        %v5622 = vrot.slane %v5511, 2
        %v5623 = vsel %vm1187, %v5620, %v5622
        %v5624 = vrot.slane %v5512, 2
        %v5625 = vrot.slane %v5513, 2
        %v5626 = vsel %vm1187, %v5624, %v5625
        %v5627 = vrot.slane %v5514, 2
        %v5628 = vsel %vm1187, %v5625, %v5627
        %v5629 = vrot.slane %v5515, 2
        %v5630 = vrot.slane %v5516, 2
        %v5631 = vsel %vm1187, %v5629, %v5630
        %v5632 = vrot.slane %v5517, 2
        %v5633 = vsel %vm1187, %v5630, %v5632
        %v5634 = vrot.slane %v5518, 2
        %v5635 = vrot.slane %v5519, 2
        %v5636 = vsel %vm1187, %v5634, %v5635
        %v5637 = vrot.slane %v5520, 2
        %v5638 = vsel %vm1187, %v5635, %v5637
        %v5639 = vrot.slane %v5521, 2
        %v5640 = vrot.slane %v5522, 2
        %v5641 = vsel %vm1187, %v5639, %v5640
        %v5642 = vrot.slane %v5523, 2
        %v5643 = vsel %vm1187, %v5640, %v5642
        %v5644 = vrot.slane %v5524, 2
        %v5645 = vrot.slane %v5525, 2
        %v5646 = vsel %vm1187, %v5644, %v5645
        %v5647 = vrot.slane %v5526, 2
        %v5648 = vsel %vm1187, %v5645, %v5647
        %v5649 = vrot.slane %v5527, 2
        %v5650 = vsel %vm1187, %v5649, %v5649
        %v5682 = vadd.f32 %v5216, %v5576
        %v5683 = vadd.f32 %v5217, %v5578
        %v5684 = vadd.f32 %v5218, %v5581
        %v5685 = vadd.f32 %v5219, %v5583
        %v5686 = vadd.f32 %v5220, %v5586
        %v5687 = vadd.f32 %v5221, %v5588
        %v5688 = vadd.f32 %v5222, %v5591
        %v5689 = vadd.f32 %v5223, %v5593
        %v5690 = vadd.f32 %v5224, %v5596
        %v5691 = vadd.f32 %v5225, %v5598
        %v5692 = vadd.f32 %v5226, %v5601
        %v5693 = vadd.f32 %v5227, %v5603
        %v5694 = vadd.f32 %v5228, %v5606
        %v5695 = vadd.f32 %v5229, %v5608
        %v5696 = vadd.f32 %v5230, %v5611
        %v5697 = vadd.f32 %v5231, %v5613
        %v5698 = vadd.f32 %v5232, %v5616
        %v5699 = vadd.f32 %v5233, %v5618
        %v5700 = vadd.f32 %v5234, %v5621
        %v5701 = vadd.f32 %v5235, %v5623
        %v5702 = vadd.f32 %v5236, %v5626
        %v5703 = vadd.f32 %v5237, %v5628
        %v5704 = vadd.f32 %v5238, %v5631
        %v5705 = vadd.f32 %v5239, %v5633
        %v5706 = vadd.f32 %v5240, %v5636
        %v5707 = vadd.f32 %v5241, %v5638
        %v5708 = vadd.f32 %v5242, %v5641
        %v5709 = vadd.f32 %v5243, %v5643
        %v5710 = vadd.f32 %v5244, %v5646
        %v5711 = vadd.f32 %v5245, %v5648
        %v5712 = vadd.f32 %v5246, %v5650
        %v5713 = vadd.f32 %v5247, %v5650
        %v5714 = vperm.slane %v2738, 0
        %v5715 = vmul.f32 %v2704, %v5714
        %v5716 = vmul.f32 %v2612, %v5714
        %v5717 = vmul.f32 %v2720, %v5714
        %v5718 = vmul.f32 %v2705, %v5714
        %v5719 = vmul.f32 %v2615, %v5714
        %v5720 = vmul.f32 %v2721, %v5714
        %v5721 = vmul.f32 %v2706, %v5714
        %v5722 = vmul.f32 %v2618, %v5714
        %v5723 = vmul.f32 %v2722, %v5714
        %v5724 = vmul.f32 %v2707, %v5714
        %v5725 = vmul.f32 %v2621, %v5714
        %v5726 = vmul.f32 %v2723, %v5714
        %v5727 = vmul.f32 %v2708, %v5714
        %v5728 = vmul.f32 %v2624, %v5714
        %v5729 = vmul.f32 %v2724, %v5714
        %v5730 = vmul.f32 %v2709, %v5714
        %v5731 = vmul.f32 %v2627, %v5714
        %v5732 = vmul.f32 %v2725, %v5714
        %v5733 = vmul.f32 %v2710, %v5714
        %v5734 = vmul.f32 %v2630, %v5714
        %v5735 = vmul.f32 %v2726, %v5714
        %v5736 = vmul.f32 %v2711, %v5714
        %v5737 = vmul.f32 %v2633, %v5714
        %v5738 = vmul.f32 %v2727, %v5714
        %v5739 = vmul.f32 %v2712, %v5714
        %v5740 = vmul.f32 %v2636, %v5714
        %v5741 = vmul.f32 %v2728, %v5714
        %v5742 = vmul.f32 %v2713, %v5714
        %v5743 = vmul.f32 %v2639, %v5714
        %v5744 = vmul.f32 %v2729, %v5714
        %v5745 = vmul.f32 %v2714, %v5714
        %v5746 = vmul.f32 %v2642, %v5714
        %v5747 = vmul.f32 %v2730, %v5714
        %v5748 = vmul.f32 %v2715, %v5714
        %v5749 = vmul.f32 %v2645, %v5714
        %v5750 = vmul.f32 %v2731, %v5714
        %v5751 = vmul.f32 %v2716, %v5714
        %v5752 = vmul.f32 %v2648, %v5714
        %v5753 = vmul.f32 %v2732, %v5714
        %v5754 = vmul.f32 %v2717, %v5714
        %v5755 = vmul.f32 %v2651, %v5714
        %v5756 = vmul.f32 %v2733, %v5714
        %v5757 = vmul.f32 %v2718, %v5714
        %v5758 = vmul.f32 %v2654, %v5714
        %v5759 = vmul.f32 %v2734, %v5714
        %v5760 = vmul.f32 %v5714, 0.0
        %v5807 = vrot.slane %v5715, 2
        %v5808 = vrot.slane %v5716, 2
        %v5809 = vsel %vm1187, %v5807, %v5808
        %v5810 = vrot.slane %v5717, 2
        %v5811 = vsel %vm1187, %v5808, %v5810
        %v5812 = vrot.slane %v5718, 2
        %v5813 = vrot.slane %v5719, 2
        %v5814 = vsel %vm1187, %v5812, %v5813
        %v5815 = vrot.slane %v5720, 2
        %v5816 = vsel %vm1187, %v5813, %v5815
        %v5817 = vrot.slane %v5721, 2
        %v5818 = vrot.slane %v5722, 2
        %v5819 = vsel %vm1187, %v5817, %v5818
        %v5820 = vrot.slane %v5723, 2
        %v5821 = vsel %vm1187, %v5818, %v5820
        %v5822 = vrot.slane %v5724, 2
        %v5823 = vrot.slane %v5725, 2
        %v5824 = vsel %vm1187, %v5822, %v5823
        %v5825 = vrot.slane %v5726, 2
        %v5826 = vsel %vm1187, %v5823, %v5825
        %v5827 = vrot.slane %v5727, 2
        %v5828 = vrot.slane %v5728, 2
        %v5829 = vsel %vm1187, %v5827, %v5828
        %v5830 = vrot.slane %v5729, 2
        %v5831 = vsel %vm1187, %v5828, %v5830
        %v5832 = vrot.slane %v5730, 2
        %v5833 = vrot.slane %v5731, 2
        %v5834 = vsel %vm1187, %v5832, %v5833
        %v5835 = vrot.slane %v5732, 2
        %v5836 = vsel %vm1187, %v5833, %v5835
        %v5837 = vrot.slane %v5733, 2
        %v5838 = vrot.slane %v5734, 2
        %v5839 = vsel %vm1187, %v5837, %v5838
        %v5840 = vrot.slane %v5735, 2
        %v5841 = vsel %vm1187, %v5838, %v5840
        %v5842 = vrot.slane %v5736, 2
        %v5843 = vrot.slane %v5737, 2
        %v5844 = vsel %vm1187, %v5842, %v5843
        %v5845 = vrot.slane %v5738, 2
        %v5846 = vsel %vm1187, %v5843, %v5845
        %v5847 = vrot.slane %v5739, 2
        %v5848 = vrot.slane %v5740, 2
        %v5849 = vsel %vm1187, %v5847, %v5848
        %v5850 = vrot.slane %v5741, 2
        %v5851 = vsel %vm1187, %v5848, %v5850
        %v5852 = vrot.slane %v5742, 2
        %v5853 = vrot.slane %v5743, 2
        %v5854 = vsel %vm1187, %v5852, %v5853
        %v5855 = vrot.slane %v5744, 2
        %v5856 = vsel %vm1187, %v5853, %v5855
        %v5857 = vrot.slane %v5745, 2
        %v5858 = vrot.slane %v5746, 2
        %v5859 = vsel %vm1187, %v5857, %v5858
        %v5860 = vrot.slane %v5747, 2
        %v5861 = vsel %vm1187, %v5858, %v5860
        %v5862 = vrot.slane %v5748, 2
        %v5863 = vrot.slane %v5749, 2
        %v5864 = vsel %vm1187, %v5862, %v5863
        %v5865 = vrot.slane %v5750, 2
        %v5866 = vsel %vm1187, %v5863, %v5865
        %v5867 = vrot.slane %v5751, 2
        %v5868 = vrot.slane %v5752, 2
        %v5869 = vsel %vm1187, %v5867, %v5868
        %v5870 = vrot.slane %v5753, 2
        %v5871 = vsel %vm1187, %v5868, %v5870
        %v5872 = vrot.slane %v5754, 2
        %v5873 = vrot.slane %v5755, 2
        %v5874 = vsel %vm1187, %v5872, %v5873
        %v5875 = vrot.slane %v5756, 2
        %v5876 = vsel %vm1187, %v5873, %v5875
        %v5877 = vrot.slane %v5757, 2
        %v5878 = vrot.slane %v5758, 2
        %v5879 = vsel %vm1187, %v5877, %v5878
        %v5880 = vrot.slane %v5759, 2
        %v5881 = vsel %vm1187, %v5878, %v5880
        %v5882 = vrot.slane %v5760, 2
        %v5883 = vsel %vm1187, %v5882, %v5882
        %v5915 = vadd.f32 %v5449, %v5809
        %v5916 = vadd.f32 %v5450, %v5811
        %v5917 = vadd.f32 %v5451, %v5814
        %v5918 = vadd.f32 %v5452, %v5816
        %v5919 = vadd.f32 %v5453, %v5819
        %v5920 = vadd.f32 %v5454, %v5821
        %v5921 = vadd.f32 %v5455, %v5824
        %v5922 = vadd.f32 %v5456, %v5826
        %v5923 = vadd.f32 %v5457, %v5829
        %v5924 = vadd.f32 %v5458, %v5831
        %v5925 = vadd.f32 %v5459, %v5834
        %v5926 = vadd.f32 %v5460, %v5836
        %v5927 = vadd.f32 %v5461, %v5839
        %v5928 = vadd.f32 %v5462, %v5841
        %v5929 = vadd.f32 %v5463, %v5844
        %v5930 = vadd.f32 %v5464, %v5846
        %v5931 = vadd.f32 %v5465, %v5849
        %v5932 = vadd.f32 %v5466, %v5851
        %v5933 = vadd.f32 %v5467, %v5854
        %v5934 = vadd.f32 %v5468, %v5856
        %v5935 = vadd.f32 %v5469, %v5859
        %v5936 = vadd.f32 %v5470, %v5861
        %v5937 = vadd.f32 %v5471, %v5864
        %v5938 = vadd.f32 %v5472, %v5866
        %v5939 = vadd.f32 %v5473, %v5869
        %v5940 = vadd.f32 %v5474, %v5871
        %v5941 = vadd.f32 %v5475, %v5874
        %v5942 = vadd.f32 %v5476, %v5876
        %v5943 = vadd.f32 %v5477, %v5879
        %v5944 = vadd.f32 %v5478, %v5881
        %v5945 = vadd.f32 %v5479, %v5883
        %v5946 = vadd.f32 %v5480, %v5883
        %v5947 = vld [vmem:[#allocation11] sm:$0x1]
        %v5949 = vperm.slane %v5947, 0
        %v5951 = vmul.f32 %v5682, %v5949
        %v5952 = vmul.f32 %v5683, %v5949
        %v5953 = vmul.f32 %v5684, %v5949
        %v5954 = vmul.f32 %v5685, %v5949
        %v5955 = vmul.f32 %v5686, %v5949
        %v5956 = vmul.f32 %v5687, %v5949
        %v5957 = vmul.f32 %v5688, %v5949
        %v5958 = vmul.f32 %v5689, %v5949
        %v5959 = vmul.f32 %v5690, %v5949
        %v5960 = vmul.f32 %v5691, %v5949
        %v5961 = vmul.f32 %v5692, %v5949
        %v5962 = vmul.f32 %v5693, %v5949
        %v5963 = vmul.f32 %v5694, %v5949
        %v5964 = vmul.f32 %v5695, %v5949
        %v5965 = vmul.f32 %v5696, %v5949
        %v5966 = vmul.f32 %v5697, %v5949
        %v5967 = vmul.f32 %v5698, %v5949
        %v5968 = vmul.f32 %v5699, %v5949
        %v5969 = vmul.f32 %v5700, %v5949
        %v5970 = vmul.f32 %v5701, %v5949
        %v5971 = vmul.f32 %v5702, %v5949
        %v5972 = vmul.f32 %v5703, %v5949
        %v5973 = vmul.f32 %v5704, %v5949
        %v5974 = vmul.f32 %v5705, %v5949
        %v5975 = vmul.f32 %v5706, %v5949
        %v5976 = vmul.f32 %v5707, %v5949
        %v5977 = vmul.f32 %v5708, %v5949
        %v5978 = vmul.f32 %v5709, %v5949
        %v5979 = vmul.f32 %v5710, %v5949
        %v5980 = vmul.f32 %v5711, %v5949
        %v5981 = vmul.f32 %v5712, %v5949
        %v5982 = vmul.f32 %v5713, %v5949
        %v5983 = vld [vmem:[#allocation13] sm:$0x1]
        %v5985 = vperm.slane %v5983, 0
        %v5987 = vadd.f32 %v5951, %v5985
        %v5988 = vadd.f32 %v5952, %v5985
        %v5989 = vadd.f32 %v5953, %v5985
        %v5990 = vadd.f32 %v5954, %v5985
        %v5991 = vadd.f32 %v5955, %v5985
        %v5992 = vadd.f32 %v5956, %v5985
        %v5993 = vadd.f32 %v5957, %v5985
        %v5994 = vadd.f32 %v5958, %v5985
        %v5995 = vadd.f32 %v5959, %v5985
        %v5996 = vadd.f32 %v5960, %v5985
        %v5997 = vadd.f32 %v5961, %v5985
        %v5998 = vadd.f32 %v5962, %v5985
        %v5999 = vadd.f32 %v5963, %v5985
        %v6000 = vadd.f32 %v5964, %v5985
        %v6001 = vadd.f32 %v5965, %v5985
        %v6002 = vadd.f32 %v5966, %v5985
        %v6003 = vadd.f32 %v5967, %v5985
        %v6004 = vadd.f32 %v5968, %v5985
        %v6005 = vadd.f32 %v5969, %v5985
        %v6006 = vadd.f32 %v5970, %v5985
        %v6007 = vadd.f32 %v5971, %v5985
        %v6008 = vadd.f32 %v5972, %v5985
        %v6009 = vadd.f32 %v5973, %v5985
        %v6010 = vadd.f32 %v5974, %v5985
        %v6011 = vadd.f32 %v5975, %v5985
        %v6012 = vadd.f32 %v5976, %v5985
        %v6013 = vadd.f32 %v5977, %v5985
        %v6014 = vadd.f32 %v5978, %v5985
        %v6015 = vadd.f32 %v5979, %v5985
        %v6016 = vadd.f32 %v5980, %v5985
        %v6017 = vadd.f32 %v5981, %v5985
        %v6018 = vadd.f32 %v5982, %v5985
        %v6019 = vmax.f32 %v5987, 0.0
        %v6020 = vmax.f32 %v5988, 0.0
        %v6021 = vmax.f32 %v5989, 0.0
        %v6022 = vmax.f32 %v5990, 0.0
        %v6023 = vmax.f32 %v5991, 0.0
        %v6024 = vmax.f32 %v5992, 0.0
        %v6025 = vmax.f32 %v5993, 0.0
        %v6026 = vmax.f32 %v5994, 0.0
        %v6027 = vmax.f32 %v5995, 0.0
        %v6028 = vmax.f32 %v5996, 0.0
        %v6029 = vmax.f32 %v5997, 0.0
        %v6030 = vmax.f32 %v5998, 0.0
        %v6031 = vmax.f32 %v5999, 0.0
        %v6032 = vmax.f32 %v6000, 0.0
        %v6033 = vmax.f32 %v6001, 0.0
        %v6034 = vmax.f32 %v6002, 0.0
        %v6035 = vmax.f32 %v6003, 0.0
        %v6036 = vmax.f32 %v6004, 0.0
        %v6037 = vmax.f32 %v6005, 0.0
        %v6038 = vmax.f32 %v6006, 0.0
        %v6039 = vmax.f32 %v6007, 0.0
        %v6040 = vmax.f32 %v6008, 0.0
        %v6041 = vmax.f32 %v6009, 0.0
        %v6042 = vmax.f32 %v6010, 0.0
        %v6043 = vmax.f32 %v6011, 0.0
        %v6044 = vmax.f32 %v6012, 0.0
        %v6045 = vmax.f32 %v6013, 0.0
        %v6046 = vmax.f32 %v6014, 0.0
        %v6047 = vmax.f32 %v6015, 0.0
        %v6048 = vmax.f32 %v6016, 0.0
        %v6049 = vmax.f32 %v6017, 0.0
        %v6050 = vmax.f32 %v6018, 0.0
        %v6051 = vld [vmem:[#allocation16] sm:$0x1]
        %v6053 = vperm.slane %v6051, 0
        %v6055 = vmul.f32 %v5915, %v6053
        %v6056 = vmul.f32 %v5916, %v6053
        %v6057 = vmul.f32 %v5917, %v6053
        %v6058 = vmul.f32 %v5918, %v6053
        %v6059 = vmul.f32 %v5919, %v6053
        %v6060 = vmul.f32 %v5920, %v6053
        %v6061 = vmul.f32 %v5921, %v6053
        %v6062 = vmul.f32 %v5922, %v6053
        %v6063 = vmul.f32 %v5923, %v6053
        %v6064 = vmul.f32 %v5924, %v6053
        %v6065 = vmul.f32 %v5925, %v6053
        %v6066 = vmul.f32 %v5926, %v6053
        %v6067 = vmul.f32 %v5927, %v6053
        %v6068 = vmul.f32 %v5928, %v6053
        %v6069 = vmul.f32 %v5929, %v6053
        %v6070 = vmul.f32 %v5930, %v6053
        %v6071 = vmul.f32 %v5931, %v6053
        %v6072 = vmul.f32 %v5932, %v6053
        %v6073 = vmul.f32 %v5933, %v6053
        %v6074 = vmul.f32 %v5934, %v6053
        %v6075 = vmul.f32 %v5935, %v6053
        %v6076 = vmul.f32 %v5936, %v6053
        %v6077 = vmul.f32 %v5937, %v6053
        %v6078 = vmul.f32 %v5938, %v6053
        %v6079 = vmul.f32 %v5939, %v6053
        %v6080 = vmul.f32 %v5940, %v6053
        %v6081 = vmul.f32 %v5941, %v6053
        %v6082 = vmul.f32 %v5942, %v6053
        %v6083 = vmul.f32 %v5943, %v6053
        %v6084 = vmul.f32 %v5944, %v6053
        %v6085 = vmul.f32 %v5945, %v6053
        %v6086 = vmul.f32 %v5946, %v6053
        %v6087 = vld [vmem:[%s9] sm:$0x1]
        %v6089 = vperm.slane %v6087, 0
        %v6091 = vadd.f32 %v6055, %v6089
        %v6092 = vadd.f32 %v6056, %v6089
        %v6093 = vadd.f32 %v6057, %v6089
        %v6094 = vadd.f32 %v6058, %v6089
        %v6095 = vadd.f32 %v6059, %v6089
        %v6096 = vadd.f32 %v6060, %v6089
        %v6097 = vadd.f32 %v6061, %v6089
        %v6098 = vadd.f32 %v6062, %v6089
        %v6099 = vadd.f32 %v6063, %v6089
        %v6100 = vadd.f32 %v6064, %v6089
        %v6101 = vadd.f32 %v6065, %v6089
        %v6102 = vadd.f32 %v6066, %v6089
        %v6103 = vadd.f32 %v6067, %v6089
        %v6104 = vadd.f32 %v6068, %v6089
        %v6105 = vadd.f32 %v6069, %v6089
        %v6106 = vadd.f32 %v6070, %v6089
        %v6107 = vadd.f32 %v6071, %v6089
        %v6108 = vadd.f32 %v6072, %v6089
        %v6109 = vadd.f32 %v6073, %v6089
        %v6110 = vadd.f32 %v6074, %v6089
        %v6111 = vadd.f32 %v6075, %v6089
        %v6112 = vadd.f32 %v6076, %v6089
        %v6113 = vadd.f32 %v6077, %v6089
        %v6114 = vadd.f32 %v6078, %v6089
        %v6115 = vadd.f32 %v6079, %v6089
        %v6116 = vadd.f32 %v6080, %v6089
        %v6117 = vadd.f32 %v6081, %v6089
        %v6118 = vadd.f32 %v6082, %v6089
        %v6119 = vadd.f32 %v6083, %v6089
        %v6120 = vadd.f32 %v6084, %v6089
        %v6121 = vadd.f32 %v6085, %v6089
        %v6122 = vadd.f32 %v6086, %v6089
        %v6123 = vmax.f32 %v6091, 0.0
        %v6124 = vmax.f32 %v6092, 0.0
        %v6125 = vmax.f32 %v6093, 0.0
        %v6126 = vmax.f32 %v6094, 0.0
        %v6127 = vmax.f32 %v6095, 0.0
        %v6128 = vmax.f32 %v6096, 0.0
        %v6129 = vmax.f32 %v6097, 0.0
        %v6130 = vmax.f32 %v6098, 0.0
        %v6131 = vmax.f32 %v6099, 0.0
        %v6132 = vmax.f32 %v6100, 0.0
        %v6133 = vmax.f32 %v6101, 0.0
        %v6134 = vmax.f32 %v6102, 0.0
        %v6135 = vmax.f32 %v6103, 0.0
        %v6136 = vmax.f32 %v6104, 0.0
        %v6137 = vmax.f32 %v6105, 0.0
        %v6138 = vmax.f32 %v6106, 0.0
        %v6139 = vmax.f32 %v6107, 0.0
        %v6140 = vmax.f32 %v6108, 0.0
        %v6141 = vmax.f32 %v6109, 0.0
        %v6142 = vmax.f32 %v6110, 0.0
        %v6143 = vmax.f32 %v6111, 0.0
        %v6144 = vmax.f32 %v6112, 0.0
        %v6145 = vmax.f32 %v6113, 0.0
        %v6146 = vmax.f32 %v6114, 0.0
        %v6147 = vmax.f32 %v6115, 0.0
        %v6148 = vmax.f32 %v6116, 0.0
        %v6149 = vmax.f32 %v6117, 0.0
        %v6150 = vmax.f32 %v6118, 0.0
        %v6151 = vmax.f32 %v6119, 0.0
        %v6152 = vmax.f32 %v6120, 0.0
        %v6153 = vmax.f32 %v6121, 0.0
        %v6154 = vmax.f32 %v6122, 0.0
        %v6155 = vpack.c.bf16 %v6124, %v6123
        %v6156 = vpack.c.bf16 %v6126, %v6125
        %v6157 = vpack.c.bf16 %v6128, %v6127
        %v6158 = vpack.c.bf16 %v6130, %v6129
        %v6159 = vpack.c.bf16 %v6132, %v6131
        %v6160 = vpack.c.bf16 %v6134, %v6133
        %v6161 = vpack.c.bf16 %v6136, %v6135
        %v6162 = vpack.c.bf16 %v6138, %v6137
        %v6163 = vpack.c.bf16 %v6140, %v6139
        %v6164 = vpack.c.bf16 %v6142, %v6141
        %v6165 = vpack.c.bf16 %v6144, %v6143
        %v6166 = vpack.c.bf16 %v6146, %v6145
        %v6167 = vpack.c.bf16 %v6148, %v6147
        %v6168 = vpack.c.bf16 %v6150, %v6149
        %v6169 = vpack.c.bf16 %v6152, %v6151
        %v6170 = vpack.c.bf16 %v6154, %v6153
        %v6171 = vld [vmem:[#allocation17] sm:$0xf]
        %v6172 = vld [vmem:[#allocation17 + $0x4] sm:$0xf]
        %v6173 = vld [vmem:[#allocation17 + $0x8] sm:$0xf]
        %v6174 = vld [vmem:[#allocation17 + $0xc] sm:$0xf]
        %v6179 = vunpack.c.l.b16 %v6171
        %v6180 = vunpack.c.l.b16 %v6172
        %v6181 = vunpack.c.l.b16 %v6173
        %v6182 = vunpack.c.l.b16 %v6174
        %v6183 = vpack.c.b16 %v6180, %v6179
        %v6184 = vpack.c.b16 %v6182, %v6181
        %vm6187 = vcmask 261120
        %v6189 = vsel %vm6187, %v6155, 0
        %v6192 = vsel %vm6187, %v6156, 0
        %v6195 = vsel %vm6187, %v6157, 0
        %v6198 = vsel %vm6187, %v6158, 0
        %v6201 = vsel %vm6187, %v6159, 0
        %v6204 = vsel %vm6187, %v6160, 0
        %v6207 = vsel %vm6187, %v6161, 0
        %v6210 = vsel %vm6187, %v6162, 0
        %v6213 = vsel %vm6187, %v6163, 0
        %v6216 = vsel %vm6187, %v6164, 0
        %v6219 = vsel %vm6187, %v6165, 0
        %v6222 = vsel %vm6187, %v6166, 0
        %v6225 = vsel %vm6187, %v6167, 0
        %v6228 = vsel %vm6187, %v6168, 0
        %v6231 = vsel %vm6187, %v6169, 0
        %v6234 = vsel %vm6187, %v6170, 0
        %6236 = vmatpush.bf16.msra.mxu0 0
        %6237 = vmatpush.bf16.msra.mxu0 0
        %6238 = vmatpush.bf16.msra.mxu0 0
        %6239 = vmatpush.bf16.msra.mxu0 0
        %6240 = vmatpush.bf16.msra.mxu0 0
        %6241 = vmatpush.bf16.msra.mxu0 0
        %6242 = vmatpush.bf16.msra.mxu0 %v6184
        %6243 = vmatpush.bf16.msra.mxu0 %v6183
        %6244 = vmatmul.bf16.gmra.mxu0 %v6189
        %v6245 = vpop.f32.mrf.mxu0
        %v6246 = vadd.f32 0.0, %v6245
        %v6247 = vpop.f32.mrf.mxu0
        %v6248 = vadd.f32 0.0, %v6247
        %6249 = vmatmul.bf16.gmra.mxu0 %v6192
        %v6250 = vpop.f32.mrf.mxu0
        %v6251 = vadd.f32 0.0, %v6250
        %v6252 = vpop.f32.mrf.mxu0
        %v6253 = vadd.f32 0.0, %v6252
        %6254 = vmatmul.bf16.gmra.mxu0 %v6195
        %v6255 = vpop.f32.mrf.mxu0
        %v6256 = vadd.f32 0.0, %v6255
        %v6257 = vpop.f32.mrf.mxu0
        %v6258 = vadd.f32 0.0, %v6257
        %6259 = vmatmul.bf16.gmra.mxu0 %v6198
        %v6260 = vpop.f32.mrf.mxu0
        %v6261 = vadd.f32 0.0, %v6260
        %v6262 = vpop.f32.mrf.mxu0
        %v6263 = vadd.f32 0.0, %v6262
        %6264 = vmatmul.bf16.gmra.mxu0 %v6201
        %v6265 = vpop.f32.mrf.mxu0
        %v6266 = vadd.f32 0.0, %v6265
        %v6267 = vpop.f32.mrf.mxu0
        %v6268 = vadd.f32 0.0, %v6267
        %6269 = vmatmul.bf16.gmra.mxu0 %v6204
        %v6270 = vpop.f32.mrf.mxu0
        %v6271 = vadd.f32 0.0, %v6270
        %v6272 = vpop.f32.mrf.mxu0
        %v6273 = vadd.f32 0.0, %v6272
        %6274 = vmatmul.bf16.gmra.mxu0 %v6207
        %v6275 = vpop.f32.mrf.mxu0
        %v6276 = vadd.f32 0.0, %v6275
        %v6277 = vpop.f32.mrf.mxu0
        %v6278 = vadd.f32 0.0, %v6277
        %6279 = vmatmul.bf16.gmra.mxu0 %v6210
        %v6280 = vpop.f32.mrf.mxu0
        %v6281 = vadd.f32 0.0, %v6280
        %v6282 = vpop.f32.mrf.mxu0
        %v6283 = vadd.f32 0.0, %v6282
        %6284 = vmatmul.bf16.gmra.mxu0 %v6213
        %v6285 = vpop.f32.mrf.mxu0
        %v6286 = vadd.f32 0.0, %v6285
        %v6287 = vpop.f32.mrf.mxu0
        %v6288 = vadd.f32 0.0, %v6287
        %6289 = vmatmul.bf16.gmra.mxu0 %v6216
        %v6290 = vpop.f32.mrf.mxu0
        %v6291 = vadd.f32 0.0, %v6290
        %v6292 = vpop.f32.mrf.mxu0
        %v6293 = vadd.f32 0.0, %v6292
        %6294 = vmatmul.bf16.gmra.mxu0 %v6219
        %v6295 = vpop.f32.mrf.mxu0
        %v6296 = vadd.f32 0.0, %v6295
        %v6297 = vpop.f32.mrf.mxu0
        %v6298 = vadd.f32 0.0, %v6297
        %6299 = vmatmul.bf16.gmra.mxu0 %v6222
        %v6300 = vpop.f32.mrf.mxu0
        %v6301 = vadd.f32 0.0, %v6300
        %v6302 = vpop.f32.mrf.mxu0
        %v6303 = vadd.f32 0.0, %v6302
        %6304 = vmatmul.bf16.gmra.mxu0 %v6225
        %v6305 = vpop.f32.mrf.mxu0
        %v6306 = vadd.f32 0.0, %v6305
        %v6307 = vpop.f32.mrf.mxu0
        %v6308 = vadd.f32 0.0, %v6307
        %6309 = vmatmul.bf16.gmra.mxu0 %v6228
        %v6310 = vpop.f32.mrf.mxu0
        %v6311 = vadd.f32 0.0, %v6310
        %v6312 = vpop.f32.mrf.mxu0
        %v6313 = vadd.f32 0.0, %v6312
        %6314 = vmatmul.bf16.gmra.mxu0 %v6231
        %v6315 = vpop.f32.mrf.mxu0
        %v6316 = vadd.f32 0.0, %v6315
        %v6317 = vpop.f32.mrf.mxu0
        %v6318 = vadd.f32 0.0, %v6317
        %6319 = vmatmul.bf16.gmra.mxu0 %v6234
        %v6320 = vpop.f32.mrf.mxu0
        %v6321 = vadd.f32 0.0, %v6320
        %v6322 = vpop.f32.mrf.mxu0
        %v6323 = vadd.f32 0.0, %v6322
        %6324 = vdwg.mxu0
        %v6325 = vld [vmem:[%s11] sm:$0x1]
        %v6327 = vperm.slane %v6325, 0
        %v6329 = vmul.f32 %v6246, %v6327
        %v6330 = vmul.f32 %v6248, %v6327
        %v6331 = vmul.f32 %v6251, %v6327
        %v6332 = vmul.f32 %v6253, %v6327
        %v6333 = vmul.f32 %v6256, %v6327
        %v6334 = vmul.f32 %v6258, %v6327
        %v6335 = vmul.f32 %v6261, %v6327
        %v6336 = vmul.f32 %v6263, %v6327
        %v6337 = vmul.f32 %v6266, %v6327
        %v6338 = vmul.f32 %v6268, %v6327
        %v6339 = vmul.f32 %v6271, %v6327
        %v6340 = vmul.f32 %v6273, %v6327
        %v6341 = vmul.f32 %v6276, %v6327
        %v6342 = vmul.f32 %v6278, %v6327
        %v6343 = vmul.f32 %v6281, %v6327
        %v6344 = vmul.f32 %v6283, %v6327
        %v6345 = vmul.f32 %v6286, %v6327
        %v6346 = vmul.f32 %v6288, %v6327
        %v6347 = vmul.f32 %v6291, %v6327
        %v6348 = vmul.f32 %v6293, %v6327
        %v6349 = vmul.f32 %v6296, %v6327
        %v6350 = vmul.f32 %v6298, %v6327
        %v6351 = vmul.f32 %v6301, %v6327
        %v6352 = vmul.f32 %v6303, %v6327
        %v6353 = vmul.f32 %v6306, %v6327
        %v6354 = vmul.f32 %v6308, %v6327
        %v6355 = vmul.f32 %v6311, %v6327
        %v6356 = vmul.f32 %v6313, %v6327
        %v6357 = vmul.f32 %v6316, %v6327
        %v6358 = vmul.f32 %v6318, %v6327
        %v6359 = vmul.f32 %v6321, %v6327
        %v6360 = vmul.f32 %v6323, %v6327
        %v6361 = vld [vmem:[%s12] sm:$0x1]
        %v6363 = vperm.slane %v6361, 0
        %v6365 = vadd.f32 %v6329, %v6363
        %v6366 = vadd.f32 %v6330, %v6363
        %v6367 = vadd.f32 %v6331, %v6363
        %v6368 = vadd.f32 %v6332, %v6363
        %v6369 = vadd.f32 %v6333, %v6363
        %v6370 = vadd.f32 %v6334, %v6363
        %v6371 = vadd.f32 %v6335, %v6363
        %v6372 = vadd.f32 %v6336, %v6363
        %v6373 = vadd.f32 %v6337, %v6363
        %v6374 = vadd.f32 %v6338, %v6363
        %v6375 = vadd.f32 %v6339, %v6363
        %v6376 = vadd.f32 %v6340, %v6363
        %v6377 = vadd.f32 %v6341, %v6363
        %v6378 = vadd.f32 %v6342, %v6363
        %v6379 = vadd.f32 %v6343, %v6363
        %v6380 = vadd.f32 %v6344, %v6363
        %v6381 = vadd.f32 %v6345, %v6363
        %v6382 = vadd.f32 %v6346, %v6363
        %v6383 = vadd.f32 %v6347, %v6363
        %v6384 = vadd.f32 %v6348, %v6363
        %v6385 = vadd.f32 %v6349, %v6363
        %v6386 = vadd.f32 %v6350, %v6363
        %v6387 = vadd.f32 %v6351, %v6363
        %v6388 = vadd.f32 %v6352, %v6363
        %v6389 = vadd.f32 %v6353, %v6363
        %v6390 = vadd.f32 %v6354, %v6363
        %v6391 = vadd.f32 %v6355, %v6363
        %v6392 = vadd.f32 %v6356, %v6363
        %v6393 = vadd.f32 %v6357, %v6363
        %v6394 = vadd.f32 %v6358, %v6363
        %v6395 = vadd.f32 %v6359, %v6363
        %v6396 = vadd.f32 %v6360, %v6363
        %v6397 = vmax.f32 %v6365, 0.0
        %v6398 = vmax.f32 %v6366, 0.0
        %v6399 = vmax.f32 %v6367, 0.0
        %v6400 = vmax.f32 %v6368, 0.0
        %v6401 = vmax.f32 %v6369, 0.0
        %v6402 = vmax.f32 %v6370, 0.0
        %v6403 = vmax.f32 %v6371, 0.0
        %v6404 = vmax.f32 %v6372, 0.0
        %v6405 = vmax.f32 %v6373, 0.0
        %v6406 = vmax.f32 %v6374, 0.0
        %v6407 = vmax.f32 %v6375, 0.0
        %v6408 = vmax.f32 %v6376, 0.0
        %v6409 = vmax.f32 %v6377, 0.0
        %v6410 = vmax.f32 %v6378, 0.0
        %v6411 = vmax.f32 %v6379, 0.0
        %v6412 = vmax.f32 %v6380, 0.0
        %v6413 = vmax.f32 %v6381, 0.0
        %v6414 = vmax.f32 %v6382, 0.0
        %v6415 = vmax.f32 %v6383, 0.0
        %v6416 = vmax.f32 %v6384, 0.0
        %v6417 = vmax.f32 %v6385, 0.0
        %v6418 = vmax.f32 %v6386, 0.0
        %v6419 = vmax.f32 %v6387, 0.0
        %v6420 = vmax.f32 %v6388, 0.0
        %v6421 = vmax.f32 %v6389, 0.0
        %v6422 = vmax.f32 %v6390, 0.0
        %v6423 = vmax.f32 %v6391, 0.0
        %v6424 = vmax.f32 %v6392, 0.0
        %v6425 = vmax.f32 %v6393, 0.0
        %v6426 = vmax.f32 %v6394, 0.0
        %v6427 = vmax.f32 %v6395, 0.0
        %v6428 = vmax.f32 %v6396, 0.0
        %6461 = vrot.lane.b32.xlu0 %v6397, 32
        %v6462 = vpop.permute.xlu0 %6461
        %6463 = vrot.lane.b32.xlu0 %v6398, 32
        %v6464 = vpop.permute.xlu0 %6463
        %6465 = vrot.lane.b32.xlu0 %v6399, 32
        %v6466 = vpop.permute.xlu0 %6465
        %6467 = vrot.lane.b32.xlu0 %v6400, 32
        %v6468 = vpop.permute.xlu0 %6467
        %6469 = vrot.lane.b32.xlu0 %v6401, 32
        %v6470 = vpop.permute.xlu0 %6469
        %6471 = vrot.lane.b32.xlu0 %v6402, 32
        %v6472 = vpop.permute.xlu0 %6471
        %6473 = vrot.lane.b32.xlu0 %v6403, 32
        %v6474 = vpop.permute.xlu0 %6473
        %6475 = vrot.lane.b32.xlu0 %v6404, 32
        %v6476 = vpop.permute.xlu0 %6475
        %6477 = vrot.lane.b32.xlu0 %v6405, 32
        %v6478 = vpop.permute.xlu0 %6477
        %6479 = vrot.lane.b32.xlu0 %v6406, 32
        %v6480 = vpop.permute.xlu0 %6479
        %6481 = vrot.lane.b32.xlu0 %v6407, 32
        %v6482 = vpop.permute.xlu0 %6481
        %6483 = vrot.lane.b32.xlu0 %v6408, 32
        %v6484 = vpop.permute.xlu0 %6483
        %6485 = vrot.lane.b32.xlu0 %v6409, 32
        %v6486 = vpop.permute.xlu0 %6485
        %6487 = vrot.lane.b32.xlu0 %v6410, 32
        %v6488 = vpop.permute.xlu0 %6487
        %6489 = vrot.lane.b32.xlu0 %v6411, 32
        %v6490 = vpop.permute.xlu0 %6489
        %6491 = vrot.lane.b32.xlu0 %v6412, 32
        %v6492 = vpop.permute.xlu0 %6491
        %6493 = vrot.lane.b32.xlu0 %v6413, 32
        %v6494 = vpop.permute.xlu0 %6493
        %6495 = vrot.lane.b32.xlu0 %v6414, 32
        %v6496 = vpop.permute.xlu0 %6495
        %6497 = vrot.lane.b32.xlu0 %v6415, 32
        %v6498 = vpop.permute.xlu0 %6497
        %6499 = vrot.lane.b32.xlu0 %v6416, 32
        %v6500 = vpop.permute.xlu0 %6499
        %6501 = vrot.lane.b32.xlu0 %v6417, 32
        %v6502 = vpop.permute.xlu0 %6501
        %6503 = vrot.lane.b32.xlu0 %v6418, 32
        %v6504 = vpop.permute.xlu0 %6503
        %6505 = vrot.lane.b32.xlu0 %v6419, 32
        %v6506 = vpop.permute.xlu0 %6505
        %6507 = vrot.lane.b32.xlu0 %v6420, 32
        %v6508 = vpop.permute.xlu0 %6507
        %6509 = vrot.lane.b32.xlu0 %v6421, 32
        %v6510 = vpop.permute.xlu0 %6509
        %6511 = vrot.lane.b32.xlu0 %v6422, 32
        %v6512 = vpop.permute.xlu0 %6511
        %6513 = vrot.lane.b32.xlu0 %v6423, 32
        %v6514 = vpop.permute.xlu0 %6513
        %6515 = vrot.lane.b32.xlu0 %v6424, 32
        %v6516 = vpop.permute.xlu0 %6515
        %6517 = vrot.lane.b32.xlu0 %v6425, 32
        %v6518 = vpop.permute.xlu0 %6517
        %6519 = vrot.lane.b32.xlu0 %v6426, 32
        %v6520 = vpop.permute.xlu0 %6519
        %6521 = vrot.lane.b32.xlu0 %v6427, 32
        %v6522 = vpop.permute.xlu0 %6521
        %6523 = vrot.lane.b32.xlu0 %v6428, 32
        %v6524 = vpop.permute.xlu0 %6523
        %v6557 = vsel %vm6187, %v6019, %v6462
        %v6558 = vsel %vm6187, %v6020, %v6464
        %v6559 = vsel %vm6187, %v6021, %v6466
        %v6560 = vsel %vm6187, %v6022, %v6468
        %v6561 = vsel %vm6187, %v6023, %v6470
        %v6562 = vsel %vm6187, %v6024, %v6472
        %v6563 = vsel %vm6187, %v6025, %v6474
        %v6564 = vsel %vm6187, %v6026, %v6476
        %v6565 = vsel %vm6187, %v6027, %v6478
        %v6566 = vsel %vm6187, %v6028, %v6480
        %v6567 = vsel %vm6187, %v6029, %v6482
        %v6568 = vsel %vm6187, %v6030, %v6484
        %v6569 = vsel %vm6187, %v6031, %v6486
        %v6570 = vsel %vm6187, %v6032, %v6488
        %v6571 = vsel %vm6187, %v6033, %v6490
        %v6572 = vsel %vm6187, %v6034, %v6492
        %v6573 = vsel %vm6187, %v6035, %v6494
        %v6574 = vsel %vm6187, %v6036, %v6496
        %v6575 = vsel %vm6187, %v6037, %v6498
        %v6576 = vsel %vm6187, %v6038, %v6500
        %v6577 = vsel %vm6187, %v6039, %v6502
        %v6578 = vsel %vm6187, %v6040, %v6504
        %v6579 = vsel %vm6187, %v6041, %v6506
        %v6580 = vsel %vm6187, %v6042, %v6508
        %v6581 = vsel %vm6187, %v6043, %v6510
        %v6582 = vsel %vm6187, %v6044, %v6512
        %v6583 = vsel %vm6187, %v6045, %v6514
        %v6584 = vsel %vm6187, %v6046, %v6516
        %v6585 = vsel %vm6187, %v6047, %v6518
        %v6586 = vsel %vm6187, %v6048, %v6520
        %v6587 = vsel %vm6187, %v6049, %v6522
        %v6588 = vsel %vm6187, %v6050, %v6524
        %v6589 = vpack.c.bf16 %v6558, %v6557
        %v6590 = vpack.c.bf16 %v6560, %v6559
        %v6591 = vpack.c.bf16 %v6562, %v6561
        %v6592 = vpack.c.bf16 %v6564, %v6563
        %v6593 = vpack.c.bf16 %v6566, %v6565
        %v6594 = vpack.c.bf16 %v6568, %v6567
        %v6595 = vpack.c.bf16 %v6570, %v6569
        %v6596 = vpack.c.bf16 %v6572, %v6571
        %v6597 = vpack.c.bf16 %v6574, %v6573
        %v6598 = vpack.c.bf16 %v6576, %v6575
        %v6599 = vpack.c.bf16 %v6578, %v6577
        %v6600 = vpack.c.bf16 %v6580, %v6579
        %v6601 = vpack.c.bf16 %v6582, %v6581
        %v6602 = vpack.c.bf16 %v6584, %v6583
        %v6603 = vpack.c.bf16 %v6586, %v6585
        %v6604 = vpack.c.bf16 %v6588, %v6587
        %v6605 = vld [vmem:[#allocation19] sm:$0xf]
        %v6606 = vld [vmem:[#allocation19 + $0x4] sm:$0xf]
        %v6607 = vld [vmem:[#allocation19 + $0x8] sm:$0xf]
        %v6608 = vld [vmem:[#allocation19 + $0xc] sm:$0xf]
        %v6609 = vld [vmem:[#allocation19 + $0x10] sm:$0xf]
        %v6610 = vld [vmem:[#allocation19 + $0x14] sm:$0xf]
        %v6611 = vld [vmem:[#allocation19 + $0x18] sm:$0xf]
        %v6612 = vld [vmem:[#allocation19 + $0x1c] sm:$0xf]
        %v6621 = vunpack.c.l.b16 %v6605
        %v6622 = vunpack.c.l.b16 %v6606
        %v6623 = vunpack.c.l.b16 %v6607
        %v6624 = vunpack.c.l.b16 %v6608
        %v6625 = vunpack.c.l.b16 %v6609
        %v6626 = vunpack.c.l.b16 %v6610
        %v6627 = vunpack.c.l.b16 %v6611
        %v6628 = vunpack.c.l.b16 %v6612
        %v6629 = vpack.c.b16 %v6622, %v6621
        %v6630 = vpack.c.b16 %v6624, %v6623
        %v6631 = vpack.c.b16 %v6626, %v6625
        %v6632 = vpack.c.b16 %v6628, %v6627
        %v6638 = vsel %vm1303, %v6589, 0
        %v6641 = vsel %vm1303, %v6590, 0
        %v6644 = vsel %vm1303, %v6591, 0
        %v6647 = vsel %vm1303, %v6592, 0
        %v6650 = vsel %vm1303, %v6593, 0
        %v6653 = vsel %vm1303, %v6594, 0
        %v6656 = vsel %vm1303, %v6595, 0
        %v6659 = vsel %vm1303, %v6596, 0
        %v6662 = vsel %vm1303, %v6597, 0
        %v6665 = vsel %vm1303, %v6598, 0
        %v6668 = vsel %vm1303, %v6599, 0
        %v6671 = vsel %vm1303, %v6600, 0
        %v6674 = vsel %vm1303, %v6601, 0
        %v6677 = vsel %vm1303, %v6602, 0
        %v6680 = vsel %vm1303, %v6603, 0
        %v6683 = vsel %vm1303, %v6604, 0
        %6685 = vmatpush.bf16.msra.mxu0 0
        %6686 = vmatpush.bf16.msra.mxu0 0
        %6687 = vmatpush.bf16.msra.mxu0 0
        %6688 = vmatpush.bf16.msra.mxu0 0
        %6689 = vmatpush.bf16.msra.mxu0 %v6632
        %6690 = vmatpush.bf16.msra.mxu0 %v6631
        %6691 = vmatpush.bf16.msra.mxu0 %v6630
        %6692 = vmatpush.bf16.msra.mxu0 %v6629
        %6693 = vmatmul.bf16.gmra.mxu0 %v6638
        %v6694 = vpop.f32.mrf.mxu0
        %v6695 = vadd.f32 0.0, %v6694
        %v6696 = vpop.f32.mrf.mxu0
        %v6697 = vadd.f32 0.0, %v6696
        %6698 = vmatmul.bf16.gmra.mxu0 %v6641
        %v6699 = vpop.f32.mrf.mxu0
        %v6700 = vadd.f32 0.0, %v6699
        %v6701 = vpop.f32.mrf.mxu0
        %v6702 = vadd.f32 0.0, %v6701
        %6703 = vmatmul.bf16.gmra.mxu0 %v6644
        %v6704 = vpop.f32.mrf.mxu0
        %v6705 = vadd.f32 0.0, %v6704
        %v6706 = vpop.f32.mrf.mxu0
        %v6707 = vadd.f32 0.0, %v6706
        %6708 = vmatmul.bf16.gmra.mxu0 %v6647
        %v6709 = vpop.f32.mrf.mxu0
        %v6710 = vadd.f32 0.0, %v6709
        %v6711 = vpop.f32.mrf.mxu0
        %v6712 = vadd.f32 0.0, %v6711
        %6713 = vmatmul.bf16.gmra.mxu0 %v6650
        %v6714 = vpop.f32.mrf.mxu0
        %v6715 = vadd.f32 0.0, %v6714
        %v6716 = vpop.f32.mrf.mxu0
        %v6717 = vadd.f32 0.0, %v6716
        %6718 = vmatmul.bf16.gmra.mxu0 %v6653
        %v6719 = vpop.f32.mrf.mxu0
        %v6720 = vadd.f32 0.0, %v6719
        %v6721 = vpop.f32.mrf.mxu0
        %v6722 = vadd.f32 0.0, %v6721
        %6723 = vmatmul.bf16.gmra.mxu0 %v6656
        %v6724 = vpop.f32.mrf.mxu0
        %v6725 = vadd.f32 0.0, %v6724
        %v6726 = vpop.f32.mrf.mxu0
        %v6727 = vadd.f32 0.0, %v6726
        %6728 = vmatmul.bf16.gmra.mxu0 %v6659
        %v6729 = vpop.f32.mrf.mxu0
        %v6730 = vadd.f32 0.0, %v6729
        %v6731 = vpop.f32.mrf.mxu0
        %v6732 = vadd.f32 0.0, %v6731
        %6733 = vmatmul.bf16.gmra.mxu0 %v6662
        %v6734 = vpop.f32.mrf.mxu0
        %v6735 = vadd.f32 0.0, %v6734
        %v6736 = vpop.f32.mrf.mxu0
        %v6737 = vadd.f32 0.0, %v6736
        %6738 = vmatmul.bf16.gmra.mxu0 %v6665
        %v6739 = vpop.f32.mrf.mxu0
        %v6740 = vadd.f32 0.0, %v6739
        %v6741 = vpop.f32.mrf.mxu0
        %v6742 = vadd.f32 0.0, %v6741
        %6743 = vmatmul.bf16.gmra.mxu0 %v6668
        %v6744 = vpop.f32.mrf.mxu0
        %v6745 = vadd.f32 0.0, %v6744
        %v6746 = vpop.f32.mrf.mxu0
        %v6747 = vadd.f32 0.0, %v6746
        %6748 = vmatmul.bf16.gmra.mxu0 %v6671
        %v6749 = vpop.f32.mrf.mxu0
        %v6750 = vadd.f32 0.0, %v6749
        %v6751 = vpop.f32.mrf.mxu0
        %v6752 = vadd.f32 0.0, %v6751
        %6753 = vmatmul.bf16.gmra.mxu0 %v6674
        %v6754 = vpop.f32.mrf.mxu0
        %v6755 = vadd.f32 0.0, %v6754
        %v6756 = vpop.f32.mrf.mxu0
        %v6757 = vadd.f32 0.0, %v6756
        %6758 = vmatmul.bf16.gmra.mxu0 %v6677
        %v6759 = vpop.f32.mrf.mxu0
        %v6760 = vadd.f32 0.0, %v6759
        %v6761 = vpop.f32.mrf.mxu0
        %v6762 = vadd.f32 0.0, %v6761
        %6763 = vmatmul.bf16.gmra.mxu0 %v6680
        %v6764 = vpop.f32.mrf.mxu0
        %v6765 = vadd.f32 0.0, %v6764
        %v6766 = vpop.f32.mrf.mxu0
        %v6767 = vadd.f32 0.0, %v6766
        %6768 = vmatmul.bf16.gmra.mxu0 %v6683
        %v6769 = vpop.f32.mrf.mxu0
        %v6770 = vadd.f32 0.0, %v6769
        %v6771 = vpop.f32.mrf.mxu0
        %v6772 = vadd.f32 0.0, %v6771
        %6773 = vdwg.mxu0
        %v6774 = vld [vmem:[%s14] sm:$0x1]
        %v6776 = vperm.slane %v6774, 0
        %v6778 = vmul.f32 %v6695, %v6776
        %v6779 = vmul.f32 %v6697, %v6776
        %v6780 = vmul.f32 %v6700, %v6776
        %v6781 = vmul.f32 %v6702, %v6776
        %v6782 = vmul.f32 %v6705, %v6776
        %v6783 = vmul.f32 %v6707, %v6776
        %v6784 = vmul.f32 %v6710, %v6776
        %v6785 = vmul.f32 %v6712, %v6776
        %v6786 = vmul.f32 %v6715, %v6776
        %v6787 = vmul.f32 %v6717, %v6776
        %v6788 = vmul.f32 %v6720, %v6776
        %v6789 = vmul.f32 %v6722, %v6776
        %v6790 = vmul.f32 %v6725, %v6776
        %v6791 = vmul.f32 %v6727, %v6776
        %v6792 = vmul.f32 %v6730, %v6776
        %v6793 = vmul.f32 %v6732, %v6776
        %v6794 = vmul.f32 %v6735, %v6776
        %v6795 = vmul.f32 %v6737, %v6776
        %v6796 = vmul.f32 %v6740, %v6776
        %v6797 = vmul.f32 %v6742, %v6776
        %v6798 = vmul.f32 %v6745, %v6776
        %v6799 = vmul.f32 %v6747, %v6776
        %v6800 = vmul.f32 %v6750, %v6776
        %v6801 = vmul.f32 %v6752, %v6776
        %v6802 = vmul.f32 %v6755, %v6776
        %v6803 = vmul.f32 %v6757, %v6776
        %v6804 = vmul.f32 %v6760, %v6776
        %v6805 = vmul.f32 %v6762, %v6776
        %v6806 = vmul.f32 %v6765, %v6776
        %v6807 = vmul.f32 %v6767, %v6776
        %v6808 = vmul.f32 %v6770, %v6776
        %v6809 = vmul.f32 %v6772, %v6776
        %v6810 = vld [vmem:[%s15] sm:$0x1]
        %v6812 = vperm.slane %v6810, 0
        %v6814 = vadd.f32 %v6778, %v6812
        %v6815 = vadd.f32 %v6779, %v6812
        %v6816 = vadd.f32 %v6780, %v6812
        %v6817 = vadd.f32 %v6781, %v6812
        %v6818 = vadd.f32 %v6782, %v6812
        %v6819 = vadd.f32 %v6783, %v6812
        %v6820 = vadd.f32 %v6784, %v6812
        %v6821 = vadd.f32 %v6785, %v6812
        %v6822 = vadd.f32 %v6786, %v6812
        %v6823 = vadd.f32 %v6787, %v6812
        %v6824 = vadd.f32 %v6788, %v6812
        %v6825 = vadd.f32 %v6789, %v6812
        %v6826 = vadd.f32 %v6790, %v6812
        %v6827 = vadd.f32 %v6791, %v6812
        %v6828 = vadd.f32 %v6792, %v6812
        %v6829 = vadd.f32 %v6793, %v6812
        %v6830 = vadd.f32 %v6794, %v6812
        %v6831 = vadd.f32 %v6795, %v6812
        %v6832 = vadd.f32 %v6796, %v6812
        %v6833 = vadd.f32 %v6797, %v6812
        %v6834 = vadd.f32 %v6798, %v6812
        %v6835 = vadd.f32 %v6799, %v6812
        %v6836 = vadd.f32 %v6800, %v6812
        %v6837 = vadd.f32 %v6801, %v6812
        %v6838 = vadd.f32 %v6802, %v6812
        %v6839 = vadd.f32 %v6803, %v6812
        %v6840 = vadd.f32 %v6804, %v6812
        %v6841 = vadd.f32 %v6805, %v6812
        %v6842 = vadd.f32 %v6806, %v6812
        %v6843 = vadd.f32 %v6807, %v6812
        %v6844 = vadd.f32 %v6808, %v6812
        %v6845 = vadd.f32 %v6809, %v6812
        %v6846 = vmax.f32 %v6814, 0.0
        %v6847 = vmax.f32 %v6815, 0.0
        %v6848 = vmax.f32 %v6816, 0.0
        %v6849 = vmax.f32 %v6817, 0.0
        %v6850 = vmax.f32 %v6818, 0.0
        %v6851 = vmax.f32 %v6819, 0.0
        %v6852 = vmax.f32 %v6820, 0.0
        %v6853 = vmax.f32 %v6821, 0.0
        %v6854 = vmax.f32 %v6822, 0.0
        %v6855 = vmax.f32 %v6823, 0.0
        %v6856 = vmax.f32 %v6824, 0.0
        %v6857 = vmax.f32 %v6825, 0.0
        %v6858 = vmax.f32 %v6826, 0.0
        %v6859 = vmax.f32 %v6827, 0.0
        %v6860 = vmax.f32 %v6828, 0.0
        %v6861 = vmax.f32 %v6829, 0.0
        %v6862 = vmax.f32 %v6830, 0.0
        %v6863 = vmax.f32 %v6831, 0.0
        %v6864 = vmax.f32 %v6832, 0.0
        %v6865 = vmax.f32 %v6833, 0.0
        %v6866 = vmax.f32 %v6834, 0.0
        %v6867 = vmax.f32 %v6835, 0.0
        %v6868 = vmax.f32 %v6836, 0.0
        %v6869 = vmax.f32 %v6837, 0.0
        %v6870 = vmax.f32 %v6838, 0.0
        %v6871 = vmax.f32 %v6839, 0.0
        %v6872 = vmax.f32 %v6840, 0.0
        %v6873 = vmax.f32 %v6841, 0.0
        %v6874 = vmax.f32 %v6842, 0.0
        %v6875 = vmax.f32 %v6843, 0.0
        %v6876 = vmax.f32 %v6844, 0.0
        %v6877 = vmax.f32 %v6845, 0.0
        %v6878 = vpack.c.bf16 %v6847, %v6846
        %v6879 = vpack.c.bf16 %v6849, %v6848
        %v6880 = vpack.c.bf16 %v6851, %v6850
        %v6881 = vpack.c.bf16 %v6853, %v6852
        %v6882 = vpack.c.bf16 %v6855, %v6854
        %v6883 = vpack.c.bf16 %v6857, %v6856
        %v6884 = vpack.c.bf16 %v6859, %v6858
        %v6885 = vpack.c.bf16 %v6861, %v6860
        %v6886 = vpack.c.bf16 %v6863, %v6862
        %v6887 = vpack.c.bf16 %v6865, %v6864
        %v6888 = vpack.c.bf16 %v6867, %v6866
        %v6889 = vpack.c.bf16 %v6869, %v6868
        %v6890 = vpack.c.bf16 %v6871, %v6870
        %v6891 = vpack.c.bf16 %v6873, %v6872
        %v6892 = vpack.c.bf16 %v6875, %v6874
        %v6893 = vpack.c.bf16 %v6877, %v6876
        %v6894 = vld [vmem:[%s16] sm:$0xf]
        %v6895 = vld [vmem:[%s16 + $0x4] sm:$0xf]
        %v6898 = vunpack.c.l.b16 %v6894
        %v6899 = vunpack.c.l.b16 %v6895
        %v6900 = vpack.c.b16 %v6899, %v6898
        %vm6902 = vcmask 130048
        %v6904 = vsel %vm6902, %v6878, 0
        %v6907 = vsel %vm6902, %v6879, 0
        %v6910 = vsel %vm6902, %v6880, 0
        %v6913 = vsel %vm6902, %v6881, 0
        %v6916 = vsel %vm6902, %v6882, 0
        %v6919 = vsel %vm6902, %v6883, 0
        %v6922 = vsel %vm6902, %v6884, 0
        %v6925 = vsel %vm6902, %v6885, 0
        %v6928 = vsel %vm6902, %v6886, 0
        %v6931 = vsel %vm6902, %v6887, 0
        %v6934 = vsel %vm6902, %v6888, 0
        %v6937 = vsel %vm6902, %v6889, 0
        %v6940 = vsel %vm6902, %v6890, 0
        %v6943 = vsel %vm6902, %v6891, 0
        %v6946 = vsel %vm6902, %v6892, 0
        %v6949 = vsel %vm6902, %v6893, 0
        %6951 = vmatpush.bf16.msra.mxu0 0
        %6952 = vmatpush.bf16.msra.mxu0 0
        %6953 = vmatpush.bf16.msra.mxu0 0
        %6954 = vmatpush.bf16.msra.mxu0 0
        %6955 = vmatpush.bf16.msra.mxu0 0
        %6956 = vmatpush.bf16.msra.mxu0 0
        %6957 = vmatpush.bf16.msra.mxu0 0
        %6958 = vmatpush.bf16.msra.mxu0 %v6900
        %6959 = vmatmul.bf16.gmra.mxu0 %v6904
        %v6960 = vpop.f32.mrf.mxu0
        %v6961 = vadd.f32 0.0, %v6960
        %v6962 = vpop.f32.mrf.mxu0
        %v6963 = vadd.f32 0.0, %v6962
        %6964 = vmatmul.bf16.gmra.mxu0 %v6907
        %v6965 = vpop.f32.mrf.mxu0
        %v6966 = vadd.f32 0.0, %v6965
        %v6967 = vpop.f32.mrf.mxu0
        %v6968 = vadd.f32 0.0, %v6967
        %6969 = vmatmul.bf16.gmra.mxu0 %v6910
        %v6970 = vpop.f32.mrf.mxu0
        %v6971 = vadd.f32 0.0, %v6970
        %v6972 = vpop.f32.mrf.mxu0
        %v6973 = vadd.f32 0.0, %v6972
        %6974 = vmatmul.bf16.gmra.mxu0 %v6913
        %v6975 = vpop.f32.mrf.mxu0
        %v6976 = vadd.f32 0.0, %v6975
        %v6977 = vpop.f32.mrf.mxu0
        %v6978 = vadd.f32 0.0, %v6977
        %6979 = vmatmul.bf16.gmra.mxu0 %v6916
        %v6980 = vpop.f32.mrf.mxu0
        %v6981 = vadd.f32 0.0, %v6980
        %v6982 = vpop.f32.mrf.mxu0
        %v6983 = vadd.f32 0.0, %v6982
        %6984 = vmatmul.bf16.gmra.mxu0 %v6919
        %v6985 = vpop.f32.mrf.mxu0
        %v6986 = vadd.f32 0.0, %v6985
        %v6987 = vpop.f32.mrf.mxu0
        %v6988 = vadd.f32 0.0, %v6987
        %6989 = vmatmul.bf16.gmra.mxu0 %v6922
        %v6990 = vpop.f32.mrf.mxu0
        %v6991 = vadd.f32 0.0, %v6990
        %v6992 = vpop.f32.mrf.mxu0
        %v6993 = vadd.f32 0.0, %v6992
        %6994 = vmatmul.bf16.gmra.mxu0 %v6925
        %v6995 = vpop.f32.mrf.mxu0
        %v6996 = vadd.f32 0.0, %v6995
        %v6997 = vpop.f32.mrf.mxu0
        %v6998 = vadd.f32 0.0, %v6997
        %6999 = vmatmul.bf16.gmra.mxu0 %v6928
        %v7000 = vpop.f32.mrf.mxu0
        %v7001 = vadd.f32 0.0, %v7000
        %v7002 = vpop.f32.mrf.mxu0
        %v7003 = vadd.f32 0.0, %v7002
        %7004 = vmatmul.bf16.gmra.mxu0 %v6931
        %v7005 = vpop.f32.mrf.mxu0
        %v7006 = vadd.f32 0.0, %v7005
        %v7007 = vpop.f32.mrf.mxu0
        %v7008 = vadd.f32 0.0, %v7007
        %7009 = vmatmul.bf16.gmra.mxu0 %v6934
        %v7010 = vpop.f32.mrf.mxu0
        %v7011 = vadd.f32 0.0, %v7010
        %v7012 = vpop.f32.mrf.mxu0
        %v7013 = vadd.f32 0.0, %v7012
        %7014 = vmatmul.bf16.gmra.mxu0 %v6937
        %v7015 = vpop.f32.mrf.mxu0
        %v7016 = vadd.f32 0.0, %v7015
        %v7017 = vpop.f32.mrf.mxu0
        %v7018 = vadd.f32 0.0, %v7017
        %7019 = vmatmul.bf16.gmra.mxu0 %v6940
        %v7020 = vpop.f32.mrf.mxu0
        %v7021 = vadd.f32 0.0, %v7020
        %v7022 = vpop.f32.mrf.mxu0
        %v7023 = vadd.f32 0.0, %v7022
        %7024 = vmatmul.bf16.gmra.mxu0 %v6943
        %v7025 = vpop.f32.mrf.mxu0
        %v7026 = vadd.f32 0.0, %v7025
        %v7027 = vpop.f32.mrf.mxu0
        %v7028 = vadd.f32 0.0, %v7027
        %7029 = vmatmul.bf16.gmra.mxu0 %v6946
        %v7030 = vpop.f32.mrf.mxu0
        %v7031 = vadd.f32 0.0, %v7030
        %v7032 = vpop.f32.mrf.mxu0
        %v7033 = vadd.f32 0.0, %v7032
        %7034 = vmatmul.bf16.gmra.mxu0 %v6949
        %v7035 = vpop.f32.mrf.mxu0
        %v7036 = vadd.f32 0.0, %v7035
        %v7037 = vpop.f32.mrf.mxu0
        %v7038 = vadd.f32 0.0, %v7037
        %7039 = vdwg.mxu0
        %v7040 = vld [vmem:[%s17] sm:$0x1]
        %v7042 = vperm.slane %v7040, 0
        %v7044 = vmul.f32 %v6961, %v7042
        %v7045 = vmul.f32 %v6963, %v7042
        %v7046 = vmul.f32 %v6966, %v7042
        %v7047 = vmul.f32 %v6968, %v7042
        %v7048 = vmul.f32 %v6971, %v7042
        %v7049 = vmul.f32 %v6973, %v7042
        %v7050 = vmul.f32 %v6976, %v7042
        %v7051 = vmul.f32 %v6978, %v7042
        %v7052 = vmul.f32 %v6981, %v7042
        %v7053 = vmul.f32 %v6983, %v7042
        %v7054 = vmul.f32 %v6986, %v7042
        %v7055 = vmul.f32 %v6988, %v7042
        %v7056 = vmul.f32 %v6991, %v7042
        %v7057 = vmul.f32 %v6993, %v7042
        %v7058 = vmul.f32 %v6996, %v7042
        %v7059 = vmul.f32 %v6998, %v7042
        %v7060 = vmul.f32 %v7001, %v7042
        %v7061 = vmul.f32 %v7003, %v7042
        %v7062 = vmul.f32 %v7006, %v7042
        %v7063 = vmul.f32 %v7008, %v7042
        %v7064 = vmul.f32 %v7011, %v7042
        %v7065 = vmul.f32 %v7013, %v7042
        %v7066 = vmul.f32 %v7016, %v7042
        %v7067 = vmul.f32 %v7018, %v7042
        %v7068 = vmul.f32 %v7021, %v7042
        %v7069 = vmul.f32 %v7023, %v7042
        %v7070 = vmul.f32 %v7026, %v7042
        %v7071 = vmul.f32 %v7028, %v7042
        %v7072 = vmul.f32 %v7031, %v7042
        %v7073 = vmul.f32 %v7033, %v7042
        %v7074 = vmul.f32 %v7036, %v7042
        %v7075 = vmul.f32 %v7038, %v7042
        %v7076 = vld [vmem:[%s18] sm:$0x1]
        %v7078 = vperm.slane %v7076, 0
        %v7080 = vadd.f32 %v7044, %v7078
        %v7081 = vadd.f32 %v7045, %v7078
        %v7082 = vadd.f32 %v7046, %v7078
        %v7083 = vadd.f32 %v7047, %v7078
        %v7084 = vadd.f32 %v7048, %v7078
        %v7085 = vadd.f32 %v7049, %v7078
        %v7086 = vadd.f32 %v7050, %v7078
        %v7087 = vadd.f32 %v7051, %v7078
        %v7088 = vadd.f32 %v7052, %v7078
        %v7089 = vadd.f32 %v7053, %v7078
        %v7090 = vadd.f32 %v7054, %v7078
        %v7091 = vadd.f32 %v7055, %v7078
        %v7092 = vadd.f32 %v7056, %v7078
        %v7093 = vadd.f32 %v7057, %v7078
        %v7094 = vadd.f32 %v7058, %v7078
        %v7095 = vadd.f32 %v7059, %v7078
        %v7096 = vadd.f32 %v7060, %v7078
        %v7097 = vadd.f32 %v7061, %v7078
        %v7098 = vadd.f32 %v7062, %v7078
        %v7099 = vadd.f32 %v7063, %v7078
        %v7100 = vadd.f32 %v7064, %v7078
        %v7101 = vadd.f32 %v7065, %v7078
        %v7102 = vadd.f32 %v7066, %v7078
        %v7103 = vadd.f32 %v7067, %v7078
        %v7104 = vadd.f32 %v7068, %v7078
        %v7105 = vadd.f32 %v7069, %v7078
        %v7106 = vadd.f32 %v7070, %v7078
        %v7107 = vadd.f32 %v7071, %v7078
        %v7108 = vadd.f32 %v7072, %v7078
        %v7109 = vadd.f32 %v7073, %v7078
        %v7110 = vadd.f32 %v7074, %v7078
        %v7111 = vadd.f32 %v7075, %v7078
        %v7112 = vmax.f32 %v7080, 0.0
        %v7113 = vmax.f32 %v7081, 0.0
        %v7114 = vmax.f32 %v7082, 0.0
        %v7115 = vmax.f32 %v7083, 0.0
        %v7116 = vmax.f32 %v7084, 0.0
        %v7117 = vmax.f32 %v7085, 0.0
        %v7118 = vmax.f32 %v7086, 0.0
        %v7119 = vmax.f32 %v7087, 0.0
        %v7120 = vmax.f32 %v7088, 0.0
        %v7121 = vmax.f32 %v7089, 0.0
        %v7122 = vmax.f32 %v7090, 0.0
        %v7123 = vmax.f32 %v7091, 0.0
        %v7124 = vmax.f32 %v7092, 0.0
        %v7125 = vmax.f32 %v7093, 0.0
        %v7126 = vmax.f32 %v7094, 0.0
        %v7127 = vmax.f32 %v7095, 0.0
        %v7128 = vmax.f32 %v7096, 0.0
        %v7129 = vmax.f32 %v7097, 0.0
        %v7130 = vmax.f32 %v7098, 0.0
        %v7131 = vmax.f32 %v7099, 0.0
        %v7132 = vmax.f32 %v7100, 0.0
        %v7133 = vmax.f32 %v7101, 0.0
        %v7134 = vmax.f32 %v7102, 0.0
        %v7135 = vmax.f32 %v7103, 0.0
        %v7136 = vmax.f32 %v7104, 0.0
        %v7137 = vmax.f32 %v7105, 0.0
        %v7138 = vmax.f32 %v7106, 0.0
        %v7139 = vmax.f32 %v7107, 0.0
        %v7140 = vmax.f32 %v7108, 0.0
        %v7141 = vmax.f32 %v7109, 0.0
        %v7142 = vmax.f32 %v7110, 0.0
        %v7143 = vmax.f32 %v7111, 0.0
        %7176 = vrot.lane.b32.xlu0 %v6019, 32
        %v7177 = vpop.permute.xlu0 %7176
        %7178 = vrot.lane.b32.xlu0 %v6020, 32
        %v7179 = vpop.permute.xlu0 %7178
        %7180 = vrot.lane.b32.xlu0 %v6021, 32
        %v7181 = vpop.permute.xlu0 %7180
        %7182 = vrot.lane.b32.xlu0 %v6022, 32
        %v7183 = vpop.permute.xlu0 %7182
        %7184 = vrot.lane.b32.xlu0 %v6023, 32
        %v7185 = vpop.permute.xlu0 %7184
        %7186 = vrot.lane.b32.xlu0 %v6024, 32
        %v7187 = vpop.permute.xlu0 %7186
        %7188 = vrot.lane.b32.xlu0 %v6025, 32
        %v7189 = vpop.permute.xlu0 %7188
        %7190 = vrot.lane.b32.xlu0 %v6026, 32
        %v7191 = vpop.permute.xlu0 %7190
        %7192 = vrot.lane.b32.xlu0 %v6027, 32
        %v7193 = vpop.permute.xlu0 %7192
        %7194 = vrot.lane.b32.xlu0 %v6028, 32
        %v7195 = vpop.permute.xlu0 %7194
        %7196 = vrot.lane.b32.xlu0 %v6029, 32
        %v7197 = vpop.permute.xlu0 %7196
        %7198 = vrot.lane.b32.xlu0 %v6030, 32
        %v7199 = vpop.permute.xlu0 %7198
        %7200 = vrot.lane.b32.xlu0 %v6031, 32
        %v7201 = vpop.permute.xlu0 %7200
        %7202 = vrot.lane.b32.xlu0 %v6032, 32
        %v7203 = vpop.permute.xlu0 %7202
        %7204 = vrot.lane.b32.xlu0 %v6033, 32
        %v7205 = vpop.permute.xlu0 %7204
        %7206 = vrot.lane.b32.xlu0 %v6034, 32
        %v7207 = vpop.permute.xlu0 %7206
        %7208 = vrot.lane.b32.xlu0 %v6035, 32
        %v7209 = vpop.permute.xlu0 %7208
        %7210 = vrot.lane.b32.xlu0 %v6036, 32
        %v7211 = vpop.permute.xlu0 %7210
        %7212 = vrot.lane.b32.xlu0 %v6037, 32
        %v7213 = vpop.permute.xlu0 %7212
        %7214 = vrot.lane.b32.xlu0 %v6038, 32
        %v7215 = vpop.permute.xlu0 %7214
        %7216 = vrot.lane.b32.xlu0 %v6039, 32
        %v7217 = vpop.permute.xlu0 %7216
        %7218 = vrot.lane.b32.xlu0 %v6040, 32
        %v7219 = vpop.permute.xlu0 %7218
        %7220 = vrot.lane.b32.xlu0 %v6041, 32
        %v7221 = vpop.permute.xlu0 %7220
        %7222 = vrot.lane.b32.xlu0 %v6042, 32
        %v7223 = vpop.permute.xlu0 %7222
        %7224 = vrot.lane.b32.xlu0 %v6043, 32
        %v7225 = vpop.permute.xlu0 %7224
        %7226 = vrot.lane.b32.xlu0 %v6044, 32
        %v7227 = vpop.permute.xlu0 %7226
        %7228 = vrot.lane.b32.xlu0 %v6045, 32
        %v7229 = vpop.permute.xlu0 %7228
        %7230 = vrot.lane.b32.xlu0 %v6046, 32
        %v7231 = vpop.permute.xlu0 %7230
        %7232 = vrot.lane.b32.xlu0 %v6047, 32
        %v7233 = vpop.permute.xlu0 %7232
        %7234 = vrot.lane.b32.xlu0 %v6048, 32
        %v7235 = vpop.permute.xlu0 %7234
        %7236 = vrot.lane.b32.xlu0 %v6049, 32
        %v7237 = vpop.permute.xlu0 %7236
        %7238 = vrot.lane.b32.xlu0 %v6050, 32
        %v7239 = vpop.permute.xlu0 %7238
        %7272 = vrot.lane.b32.xlu0 %v6397, 64
        %v7273 = vpop.permute.xlu0 %7272
        %7274 = vrot.lane.b32.xlu0 %v6398, 64
        %v7275 = vpop.permute.xlu0 %7274
        %7276 = vrot.lane.b32.xlu0 %v6399, 64
        %v7277 = vpop.permute.xlu0 %7276
        %7278 = vrot.lane.b32.xlu0 %v6400, 64
        %v7279 = vpop.permute.xlu0 %7278
        %7280 = vrot.lane.b32.xlu0 %v6401, 64
        %v7281 = vpop.permute.xlu0 %7280
        %7282 = vrot.lane.b32.xlu0 %v6402, 64
        %v7283 = vpop.permute.xlu0 %7282
        %7284 = vrot.lane.b32.xlu0 %v6403, 64
        %v7285 = vpop.permute.xlu0 %7284
        %7286 = vrot.lane.b32.xlu0 %v6404, 64
        %v7287 = vpop.permute.xlu0 %7286
        %7288 = vrot.lane.b32.xlu0 %v6405, 64
        %v7289 = vpop.permute.xlu0 %7288
        %7290 = vrot.lane.b32.xlu0 %v6406, 64
        %v7291 = vpop.permute.xlu0 %7290
        %7292 = vrot.lane.b32.xlu0 %v6407, 64
        %v7293 = vpop.permute.xlu0 %7292
        %7294 = vrot.lane.b32.xlu0 %v6408, 64
        %v7295 = vpop.permute.xlu0 %7294
        %7296 = vrot.lane.b32.xlu0 %v6409, 64
        %v7297 = vpop.permute.xlu0 %7296
        %7298 = vrot.lane.b32.xlu0 %v6410, 64
        %v7299 = vpop.permute.xlu0 %7298
        %7300 = vrot.lane.b32.xlu0 %v6411, 64
        %v7301 = vpop.permute.xlu0 %7300
        %7302 = vrot.lane.b32.xlu0 %v6412, 64
        %v7303 = vpop.permute.xlu0 %7302
        %7304 = vrot.lane.b32.xlu0 %v6413, 64
        %v7305 = vpop.permute.xlu0 %7304
        %7306 = vrot.lane.b32.xlu0 %v6414, 64
        %v7307 = vpop.permute.xlu0 %7306
        %7308 = vrot.lane.b32.xlu0 %v6415, 64
        %v7309 = vpop.permute.xlu0 %7308
        %7310 = vrot.lane.b32.xlu0 %v6416, 64
        %v7311 = vpop.permute.xlu0 %7310
        %7312 = vrot.lane.b32.xlu0 %v6417, 64
        %v7313 = vpop.permute.xlu0 %7312
        %7314 = vrot.lane.b32.xlu0 %v6418, 64
        %v7315 = vpop.permute.xlu0 %7314
        %7316 = vrot.lane.b32.xlu0 %v6419, 64
        %v7317 = vpop.permute.xlu0 %7316
        %7318 = vrot.lane.b32.xlu0 %v6420, 64
        %v7319 = vpop.permute.xlu0 %7318
        %7320 = vrot.lane.b32.xlu0 %v6421, 64
        %v7321 = vpop.permute.xlu0 %7320
        %7322 = vrot.lane.b32.xlu0 %v6422, 64
        %v7323 = vpop.permute.xlu0 %7322
        %7324 = vrot.lane.b32.xlu0 %v6423, 64
        %v7325 = vpop.permute.xlu0 %7324
        %7326 = vrot.lane.b32.xlu0 %v6424, 64
        %v7327 = vpop.permute.xlu0 %7326
        %7328 = vrot.lane.b32.xlu0 %v6425, 64
        %v7329 = vpop.permute.xlu0 %7328
        %7330 = vrot.lane.b32.xlu0 %v6426, 64
        %v7331 = vpop.permute.xlu0 %7330
        %7332 = vrot.lane.b32.xlu0 %v6427, 64
        %v7333 = vpop.permute.xlu0 %7332
        %7334 = vrot.lane.b32.xlu0 %v6428, 64
        %v7335 = vpop.permute.xlu0 %7334
        %7400 = vrot.lane.b32.xlu0 %v7112, 96
        %v7401 = vpop.permute.xlu0 %7400
        %7402 = vrot.lane.b32.xlu0 %v7113, 96
        %v7403 = vpop.permute.xlu0 %7402
        %7404 = vrot.lane.b32.xlu0 %v7114, 96
        %v7405 = vpop.permute.xlu0 %7404
        %7406 = vrot.lane.b32.xlu0 %v7115, 96
        %v7407 = vpop.permute.xlu0 %7406
        %7408 = vrot.lane.b32.xlu0 %v7116, 96
        %v7409 = vpop.permute.xlu0 %7408
        %7410 = vrot.lane.b32.xlu0 %v7117, 96
        %v7411 = vpop.permute.xlu0 %7410
        %7412 = vrot.lane.b32.xlu0 %v7118, 96
        %v7413 = vpop.permute.xlu0 %7412
        %7414 = vrot.lane.b32.xlu0 %v7119, 96
        %v7415 = vpop.permute.xlu0 %7414
        %7416 = vrot.lane.b32.xlu0 %v7120, 96
        %v7417 = vpop.permute.xlu0 %7416
        %7418 = vrot.lane.b32.xlu0 %v7121, 96
        %v7419 = vpop.permute.xlu0 %7418
        %7420 = vrot.lane.b32.xlu0 %v7122, 96
        %v7421 = vpop.permute.xlu0 %7420
        %7422 = vrot.lane.b32.xlu0 %v7123, 96
        %v7423 = vpop.permute.xlu0 %7422
        %7424 = vrot.lane.b32.xlu0 %v7124, 96
        %v7425 = vpop.permute.xlu0 %7424
        %7426 = vrot.lane.b32.xlu0 %v7125, 96
        %v7427 = vpop.permute.xlu0 %7426
        %7428 = vrot.lane.b32.xlu0 %v7126, 96
        %v7429 = vpop.permute.xlu0 %7428
        %7430 = vrot.lane.b32.xlu0 %v7127, 96
        %v7431 = vpop.permute.xlu0 %7430
        %7432 = vrot.lane.b32.xlu0 %v7128, 96
        %v7433 = vpop.permute.xlu0 %7432
        %7434 = vrot.lane.b32.xlu0 %v7129, 96
        %v7435 = vpop.permute.xlu0 %7434
        %7436 = vrot.lane.b32.xlu0 %v7130, 96
        %v7437 = vpop.permute.xlu0 %7436
        %7438 = vrot.lane.b32.xlu0 %v7131, 96
        %v7439 = vpop.permute.xlu0 %7438
        %7440 = vrot.lane.b32.xlu0 %v7132, 96
        %v7441 = vpop.permute.xlu0 %7440
        %7442 = vrot.lane.b32.xlu0 %v7133, 96
        %v7443 = vpop.permute.xlu0 %7442
        %7444 = vrot.lane.b32.xlu0 %v7134, 96
        %v7445 = vpop.permute.xlu0 %7444
        %7446 = vrot.lane.b32.xlu0 %v7135, 96
        %v7447 = vpop.permute.xlu0 %7446
        %7448 = vrot.lane.b32.xlu0 %v7136, 96
        %v7449 = vpop.permute.xlu0 %7448
        %7450 = vrot.lane.b32.xlu0 %v7137, 96
        %v7451 = vpop.permute.xlu0 %7450
        %7452 = vrot.lane.b32.xlu0 %v7138, 96
        %v7453 = vpop.permute.xlu0 %7452
        %7454 = vrot.lane.b32.xlu0 %v7139, 96
        %v7455 = vpop.permute.xlu0 %7454
        %7456 = vrot.lane.b32.xlu0 %v7140, 96
        %v7457 = vpop.permute.xlu0 %7456
        %7458 = vrot.lane.b32.xlu0 %v7141, 96
        %v7459 = vpop.permute.xlu0 %7458
        %7460 = vrot.lane.b32.xlu0 %v7142, 96
        %v7461 = vpop.permute.xlu0 %7460
        %7462 = vrot.lane.b32.xlu0 %v7143, 96
        %v7463 = vpop.permute.xlu0 %7462
        %v7496 = vsel %vm6187, %v2543, %v7177
        %v7497 = vsel %vm6187, %v2544, %v7179
        %v7498 = vsel %vm6187, %v2545, %v7181
        %v7499 = vsel %vm6187, %v2546, %v7183
        %v7500 = vsel %vm6187, %v2547, %v7185
        %v7501 = vsel %vm6187, %v2548, %v7187
        %v7502 = vsel %vm6187, %v2549, %v7189
        %v7503 = vsel %vm6187, %v2550, %v7191
        %v7504 = vsel %vm6187, %v2551, %v7193
        %v7505 = vsel %vm6187, %v2552, %v7195
        %v7506 = vsel %vm6187, %v2553, %v7197
        %v7507 = vsel %vm6187, %v2554, %v7199
        %v7508 = vsel %vm6187, %v2555, %v7201
        %v7509 = vsel %vm6187, %v2556, %v7203
        %v7510 = vsel %vm6187, %v2557, %v7205
        %v7511 = vsel %vm6187, %v2558, %v7207
        %v7512 = vsel %vm6187, %v2559, %v7209
        %v7513 = vsel %vm6187, %v2560, %v7211
        %v7514 = vsel %vm6187, %v2561, %v7213
        %v7515 = vsel %vm6187, %v2562, %v7215
        %v7516 = vsel %vm6187, %v2563, %v7217
        %v7517 = vsel %vm6187, %v2564, %v7219
        %v7518 = vsel %vm6187, %v2565, %v7221
        %v7519 = vsel %vm6187, %v2566, %v7223
        %v7520 = vsel %vm6187, %v2567, %v7225
        %v7521 = vsel %vm6187, %v2568, %v7227
        %v7522 = vsel %vm6187, %v2569, %v7229
        %v7523 = vsel %vm6187, %v2570, %v7231
        %v7524 = vsel %vm6187, %v2571, %v7233
        %v7525 = vsel %vm6187, %v2572, %v7235
        %v7526 = vsel %vm6187, %v2573, %v7237
        %v7527 = vsel %vm6187, %v2574, %v7239
        %v7528 = vsel %vm1303, %v7496, %v7273
        %v7529 = vsel %vm1303, %v7497, %v7275
        %v7530 = vsel %vm1303, %v7498, %v7277
        %v7531 = vsel %vm1303, %v7499, %v7279
        %v7532 = vsel %vm1303, %v7500, %v7281
        %v7533 = vsel %vm1303, %v7501, %v7283
        %v7534 = vsel %vm1303, %v7502, %v7285
        %v7535 = vsel %vm1303, %v7503, %v7287
        %v7536 = vsel %vm1303, %v7504, %v7289
        %v7537 = vsel %vm1303, %v7505, %v7291
        %v7538 = vsel %vm1303, %v7506, %v7293
        %v7539 = vsel %vm1303, %v7507, %v7295
        %v7540 = vsel %vm1303, %v7508, %v7297
        %v7541 = vsel %vm1303, %v7509, %v7299
        %v7542 = vsel %vm1303, %v7510, %v7301
        %v7543 = vsel %vm1303, %v7511, %v7303
        %v7544 = vsel %vm1303, %v7512, %v7305
        %v7545 = vsel %vm1303, %v7513, %v7307
        %v7546 = vsel %vm1303, %v7514, %v7309
        %v7547 = vsel %vm1303, %v7515, %v7311
        %v7548 = vsel %vm1303, %v7516, %v7313
        %v7549 = vsel %vm1303, %v7517, %v7315
        %v7550 = vsel %vm1303, %v7518, %v7317
        %v7551 = vsel %vm1303, %v7519, %v7319
        %v7552 = vsel %vm1303, %v7520, %v7321
        %v7553 = vsel %vm1303, %v7521, %v7323
        %v7554 = vsel %vm1303, %v7522, %v7325
        %v7555 = vsel %vm1303, %v7523, %v7327
        %v7556 = vsel %vm1303, %v7524, %v7329
        %v7557 = vsel %vm1303, %v7525, %v7331
        %v7558 = vsel %vm1303, %v7526, %v7333
        %v7559 = vsel %vm1303, %v7527, %v7335
        %vm7560 = vcmask 785408
        %v7561 = vsel %vm7560, %v7528, %v7401
        %v7562 = vsel %vm7560, %v7529, %v7403
        %v7563 = vsel %vm7560, %v7530, %v7405
        %v7564 = vsel %vm7560, %v7531, %v7407
        %v7565 = vsel %vm7560, %v7532, %v7409
        %v7566 = vsel %vm7560, %v7533, %v7411
        %v7567 = vsel %vm7560, %v7534, %v7413
        %v7568 = vsel %vm7560, %v7535, %v7415
        %v7569 = vsel %vm7560, %v7536, %v7417
        %v7570 = vsel %vm7560, %v7537, %v7419
        %v7571 = vsel %vm7560, %v7538, %v7421
        %v7572 = vsel %vm7560, %v7539, %v7423
        %v7573 = vsel %vm7560, %v7540, %v7425
        %v7574 = vsel %vm7560, %v7541, %v7427
        %v7575 = vsel %vm7560, %v7542, %v7429
        %v7576 = vsel %vm7560, %v7543, %v7431
        %v7577 = vsel %vm7560, %v7544, %v7433
        %v7578 = vsel %vm7560, %v7545, %v7435
        %v7579 = vsel %vm7560, %v7546, %v7437
        %v7580 = vsel %vm7560, %v7547, %v7439
        %v7581 = vsel %vm7560, %v7548, %v7441
        %v7582 = vsel %vm7560, %v7549, %v7443
        %v7583 = vsel %vm7560, %v7550, %v7445
        %v7584 = vsel %vm7560, %v7551, %v7447
        %v7585 = vsel %vm7560, %v7552, %v7449
        %v7586 = vsel %vm7560, %v7553, %v7451
        %v7587 = vsel %vm7560, %v7554, %v7453
        %v7588 = vsel %vm7560, %v7555, %v7455
        %v7589 = vsel %vm7560, %v7556, %v7457
        %v7590 = vsel %vm7560, %v7557, %v7459
        %v7591 = vsel %vm7560, %v7558, %v7461
        %v7592 = vsel %vm7560, %v7559, %v7463
        %7593 = vst [vmem:[%s777] sm:$0xff] %v7561
        %7594 = vst [vmem:[%s777 + $0x8] sm:$0xff] %v7562
        %7595 = vst [vmem:[%s777 + $0x10] sm:$0xff] %v7563
        %7596 = vst [vmem:[%s777 + $0x18] sm:$0xff] %v7564
        %7597 = vst [vmem:[%s777 + $0x20] sm:$0xff] %v7565
        %7598 = vst [vmem:[%s777 + $0x28] sm:$0xff] %v7566
        %7599 = vst [vmem:[%s777 + $0x30] sm:$0xff] %v7567
        %7600 = vst [vmem:[%s777 + $0x38] sm:$0xff] %v7568
        %7601 = vst [vmem:[%s777 + $0x40] sm:$0xff] %v7569
        %7602 = vst [vmem:[%s777 + $0x48] sm:$0xff] %v7570
        %7603 = vst [vmem:[%s777 + $0x50] sm:$0xff] %v7571
        %7604 = vst [vmem:[%s777 + $0x58] sm:$0xff] %v7572
        %7605 = vst [vmem:[%s777 + $0x60] sm:$0xff] %v7573
        %7606 = vst [vmem:[%s777 + $0x68] sm:$0xff] %v7574
        %7607 = vst [vmem:[%s777 + $0x70] sm:$0xff] %v7575
        %7608 = vst [vmem:[%s777 + $0x78] sm:$0xff] %v7576
        %7609 = vst [vmem:[%s777 + $0x80] sm:$0xff] %v7577
        %7610 = vst [vmem:[%s777 + $0x88] sm:$0xff] %v7578
        %7611 = vst [vmem:[%s777 + $0x90] sm:$0xff] %v7579
        %7612 = vst [vmem:[%s777 + $0x98] sm:$0xff] %v7580
        %7613 = vst [vmem:[%s777 + $0xa0] sm:$0xff] %v7581
        %7614 = vst [vmem:[%s777 + $0xa8] sm:$0xff] %v7582
        %7615 = vst [vmem:[%s777 + $0xb0] sm:$0xff] %v7583
        %7616 = vst [vmem:[%s777 + $0xb8] sm:$0xff] %v7584
        %7617 = vst [vmem:[%s777 + $0xc0] sm:$0xff] %v7585
        %7618 = vst [vmem:[%s777 + $0xc8] sm:$0xff] %v7586
        %7619 = vst [vmem:[%s777 + $0xd0] sm:$0xff] %v7587
        %7620 = vst [vmem:[%s777 + $0xd8] sm:$0xff] %v7588
        %7621 = vst [vmem:[%s777 + $0xe0] sm:$0xff] %v7589
        %7622 = vst [vmem:[%s777 + $0xe8] sm:$0xff] %v7590
        %7623 = vst [vmem:[%s777 + $0xf0] sm:$0xff] %v7591
        %7624 = vst [vmem:[%s777 + $0xf8] sm:$0xff] %v7592
        %s7625 = sand.u32 %s453, 1
        %s7626 = scalar_lea.sflag [#allocation4], %s7625
        %s7627 = sand.u32 %s453, 1
        %s7628 = smul.addr %s7627, 256
        %s7629 = scalar_lea.vmem [#allocation20], %s7628
        // Predicated region
        $region141: #{_lambda_.1} parent=95 // pred_check
          %p7630 = pneg %p463
        $region142: #{_lambda_.1} parent=95 // pred_check_branch
          %7632 = sbr.rel (%p7630) target = $region144
        $region143: #{_lambda_.1} parent=95 // pred_region
          %7634 = vsyncadd %s7626, 0
          %s7635 = smul.addr %s41, 32
          %s7636 = smul.addr %s7635, 8
          %s7637 = scalar_lea.hbm %s19, %s7636
          %s7638 = sshll.u32 %s7629, 4
          %s7639 = int_to_ptr.vmem [resolvable:$true] %s7638
          %s7640 = sshll.u32 %s7637, 4
          %s7641 = int_to_ptr.hbm [resolvable:$true] %s7640
          %7646 = dma.vmem_to_hbm [thread:$0]  %s7639, 4096, %s7641, %s7626, 128, 128, 8
        $region144: #{_lambda_.1} parent=95 // pred_fallthru
          _
      $region96: #{_lambda_.1} parent=5 // pred_fallthru
        _
      %p7647 = scmp.le.s32.totalorder 2, %s36
      // Predicated region
      $region145: #{_lambda_.1} parent=5 // pred_check
        %p7648 = pneg %p7647
      $region146: #{_lambda_.1} parent=5 // pred_check_branch
        %7650 = sbr.rel (%p7648) target = $region148
      $region147: #{_lambda_.1} parent=5 // pred_region
        %s7651 = ssub.s32 %s36, 2
        // Predicated region
        $region149: #{_lambda_.1} parent=147 // pred_check
          %p7652 = pneg %p469
        $region150: #{_lambda_.1} parent=147 // pred_check_branch
          %7654 = sbr.rel (%p7652) target = $region152
        $region151: #{_lambda_.1} parent=147 // pred_region
          %s7655 = sand.u32 %s454, 1
          %s7656 = scalar_lea.sflag [#allocation4], %s7655
          %s7657 = sand.u32 %s454, 1
          %s7658 = smul.addr %s7657, 256
          %s7659 = scalar_lea.vmem [#allocation20], %s7658
          %7661 = dma.done %s7656, 4096
        $region152: #{_lambda_.1} parent=147 // pred_fallthru
          _
      $region148: #{_lambda_.1} parent=5 // pred_fallthru
        _
    $region6: #{_lambda_.1} parent=1 // loop_footer
      %s40 = sadd.s32 1, %s36
    $region7: #{_lambda_.1} parent=1 // loop_footer_branch
      %35 = sbr.rel target = $region3
    $region8: #{_lambda_.1} parent=1 // loop_exit
      _
    %7662 = vsyncpa [#allocation3], 1
    %s7663 = scalar_lea.sflag [#allocation3], 1
    %7664 = vsyncpa %s7663, 1
    %7665 = vsyncpa [#allocation6], 1
    %7666 = vsyncpa [#allocation9], 1
    %7667 = vsyncpa [#allocation12], 1
    %7668 = vsyncpa [#allocation15], 1
    %7669 = vsyncpa [#allocation18], 1
    %7670 = vsyncpa [#allocation4], 1
    %s7671 = scalar_lea.sflag [#allocation4], 1
    %7672 = vsyncpa %s7671, 1

</llo_original>
